<compile_context>
chip_gen: v7x
topology: tpu7x:2x2x1
jax: 0.10.0
libtpu: 0.0.40
codegen_flags: <defaults>
</compile_context>

<pallas_src>
import jax
import jax.numpy as jnp
from jax.experimental import pallas as pl
from jax.experimental.pallas import tpu as pltpu


IMAGE_EMB = 128
TEXT_EMB = 128

VMEM_LIMIT = 48 * 1024 * 1024   # actual usage ~20 MiB/step; safe on v5e/v6e/v7x
CONV_TM_CAP = 2048              # pooled output rows per conv tile
FC_TM_CAP = 1024                # rows per tile for the fused heads kernel
ROW_ALIGN = 16                  # bf16 sublane tile -> layout-preserving reshapes


def _round_up(x, m):
    return (x + m - 1) // m * m


def _tile_rows(m, cap):
    """Row-tile size: multiple of ROW_ALIGN, <= cap, and chosen so grid >= 2
    whenever the row count allows it (both TensorCores used on v7x)."""
    tm = _round_up(max(1, -(-m // 2)), ROW_ALIGN)
    return min(cap, tm)


# ----------------------------------------------------------------------------
# Pallas kernels
# ----------------------------------------------------------------------------
def conv_pool_kernel(x_ref, w_ref, b_ref, o_ref):
    """Fused 3x3-conv(matmul) + 2x2 maxpool + bias + ReLU.

    x_ref: (4, TM, K) bf16 -- im2col patches; leading axis enumerates the four
           positions of each 2x2 pooling window for TM pooled output pixels.
    w_ref: (K, Cout) bf16, b_ref: (1, Cout) f32, o_ref: (TM, Cout) bf16.
    """
    four, tm, k = x_ref.shape
    # One continuous MXU stream for all four taps (RHS stays resident).
    x = x_ref[...].reshape(four * tm, k)                       # layout no-op
    acc = jnp.dot(x, w_ref[...], preferred_element_type=jnp.float32)
    # Max over the raw accumulators, then a single bias+ReLU epilogue
    # (relu is monotone and the bias is shared, so this equals max(relu(a+b))).
    r = jnp.maximum(jnp.maximum(acc[0 * tm:1 * tm], acc[1 * tm:2 * tm]),
                    jnp.maximum(acc[2 * tm:3 * tm], acc[3 * tm:4 * tm]))
    o_ref[...] = jnp.maximum(r + b_ref[...], 0.0).astype(o_ref.dtype)


def heads_kernel(xi_ref, wf_ref, bf_ref, xt_ref, w1_ref, b1_ref, w2_ref, b2_ref,
                 img_ref, txt_ref):
    """Fused image-FC + text-MLP heads sharing the batch grid.

    img = relu(xi @ Wf + bf)
    txt = relu(relu(xt @ W1 + b1) @ W2 + b2)   (intermediate stays on-chip)
    """
    img = jnp.dot(xi_ref[...], wf_ref[...], preferred_element_type=jnp.float32)
    img_ref[...] = jnp.maximum(img + bf_ref[...], 0.0).astype(img_ref.dtype)

    h = jnp.dot(xt_ref[...], w1_ref[...], preferred_element_type=jnp.float32)
    h = jnp.maximum(h + b1_ref[...], 0.0)
    t = jnp.dot(h.astype(w2_ref.dtype), w2_ref[...],
                preferred_element_type=jnp.float32)
    txt_ref[...] = jnp.maximum(t + b2_ref[...], 0.0).astype(txt_ref.dtype)


# ----------------------------------------------------------------------------
# Pallas wrappers
# ----------------------------------------------------------------------------
def conv3x3_relu_pool(x_nhwc, w_bf16, b_f32):
    """3x3, stride-1, pad-1 conv + ReLU + 2x2/2 maxpool, NHWC, bf16 in/out."""
    B, H, W, Cin = x_nhwc.shape
    assert H % 2 == 0 and W % 2 == 0, "conv3x3_relu_pool assumes even H and W"
    Cout = w_bf16.shape[1]
    Ho, Wo = H // 2, W // 2
    K = 9 * Cin
    Mp = B * Ho * Wo

    xp = jnp.pad(x_nhwc.astype(jnp.bfloat16), ((0, 0), (1, 1), (1, 1), (0, 0)))

    # Build the 4 pooling-tap im2col tensors directly with strided slices of the
    # padded input (replaces the old 6-D transpose of the 9x-expanded tensor).
    taps = []
    for dy in range(2):
        for dx in range(2):
            cols = [xp[:, dy + kh: dy + kh + H: 2, dx + kw: dx + kw + W: 2, :]
                    for kh in range(3) for kw in range(3)]
            taps.append(jnp.concatenate(cols, axis=-1).reshape(Mp, K))
    p = jnp.stack(taps, axis=0)                           # (4, Mp, K), bf16

    TM = _tile_rows(Mp, CONV_TM_CAP)
    grid = pl.cdiv(Mp, TM)
    Mpad = grid * TM
    if Mpad != Mp:
        p = jnp.pad(p, ((0, 0), (0, Mpad - Mp), (0, 0)))

    out = pl.pallas_call(
        conv_pool_kernel,
        out_shape=jax.ShapeDtypeStruct((Mpad, Cout), jnp.bfloat16),
        grid=(grid,),
        in_specs=[
            pl.BlockSpec((4, TM, K), lambda i: (0, i, 0)),
            pl.BlockSpec((K, Cout), lambda i: (0, 0)),
            pl.BlockSpec((1, Cout), lambda i: (0, 0)),
        ],
        out_specs=pl.BlockSpec((TM, Cout), lambda i: (i, 0)),
        compiler_params=pltpu.CompilerParams(
            dimension_semantics=("parallel",),
            vmem_limit_bytes=VMEM_LIMIT),
    )(p, w_bf16, b_f32.reshape(1, Cout))

    # Padded rows carry relu(bias) garbage -> slice them off before reshaping.
    return out[:Mp].reshape(B, Ho, Wo, Cout)


def heads(img_flat_bf16, text_bf16, wf, bf, w1, b1, w2, b2):
    """Single pallas_call computing both the image FC head and the text MLP."""
    M, Kf = img_flat_bf16.shape
    Kt = text_bf16.shape[1]
    H1 = w1.shape[1]

    TM = _tile_rows(M, FC_TM_CAP)
    grid = pl.cdiv(M, TM)
    Mpad = grid * TM
    xi, xt = img_flat_bf16, text_bf16
    if Mpad != M:
        xi = jnp.pad(xi, ((0, Mpad - M), (0, 0)))
        xt = jnp.pad(xt, ((0, Mpad - M), (0, 0)))

    img_emb, txt_emb = pl.pallas_call(
        heads_kernel,
        out_shape=(jax.ShapeDtypeStruct((Mpad, IMAGE_EMB), jnp.float32),
                   jax.ShapeDtypeStruct((Mpad, TEXT_EMB), jnp.float32)),
        grid=(grid,),
        in_specs=[
            pl.BlockSpec((TM, Kf), lambda i: (i, 0)),
            pl.BlockSpec((Kf, IMAGE_EMB), lambda i: (0, 0)),
            pl.BlockSpec((1, IMAGE_EMB), lambda i: (0, 0)),
            pl.BlockSpec((TM, Kt), lambda i: (i, 0)),
            pl.BlockSpec((Kt, H1), lambda i: (0, 0)),
            pl.BlockSpec((1, H1), lambda i: (0, 0)),
            pl.BlockSpec((H1, TEXT_EMB), lambda i: (0, 0)),
            pl.BlockSpec((1, TEXT_EMB), lambda i: (0, 0)),
        ],
        out_specs=[
            pl.BlockSpec((TM, IMAGE_EMB), lambda i: (i, 0)),
            pl.BlockSpec((TM, TEXT_EMB), lambda i: (i, 0)),
        ],
        compiler_params=pltpu.CompilerParams(
            dimension_semantics=("parallel",),
            vmem_limit_bytes=VMEM_LIMIT),
    )(xi, wf, bf.reshape(1, IMAGE_EMB), xt, w1, b1.reshape(1, H1),
      w2, b2.reshape(1, TEXT_EMB))
    return img_emb[:M], txt_emb[:M]


# ----------------------------------------------------------------------------
# Deterministic parameter initialization (shapes from the nn.Module __init__).
# NOTE: weights are randomly initialized here (not ported from PyTorch). If
# porting real weights: conv weights must be laid out in (kh, kw, c_in) row
# order, and W_FC_IMG rows follow the NHWC (h, w, c) flatten order, not
# PyTorch's NCHW (c, h, w) order.
# ----------------------------------------------------------------------------
_pk = jax.random.PRNGKey(42)
_ks = jax.random.split(_pk, 10)


def _init(key, shape, scale=0.02):
    return (scale * jax.random.normal(key, shape)).astype(jnp.float32)


W_CONV1 = _init(_ks[0], (3 * 3 * 1, 32))
B_CONV1 = _init(_ks[1], (32,))
W_CONV2 = _init(_ks[2], (3 * 3 * 32, 64))
B_CONV2 = _init(_ks[3], (64,))
W_FC_IMG = _init(_ks[4], (7 * 7 * 64, IMAGE_EMB))
B_FC_IMG = _init(_ks[5], (IMAGE_EMB,))
W_TXT1 = _init(_ks[6], (768, 256))
B_TXT1 = _init(_ks[7], (256,))
W_TXT2 = _init(_ks[8], (256, TEXT_EMB))
B_TXT2 = _init(_ks[9], (TEXT_EMB,))

# bf16 copies for the MXU (biases / accumulation / final embeddings stay f32).
W_CONV1_BF = W_CONV1.astype(jnp.bfloat16)
W_CONV2_BF = W_CONV2.astype(jnp.bfloat16)
W_FC_IMG_BF = W_FC_IMG.astype(jnp.bfloat16)
W_TXT1_BF = W_TXT1.astype(jnp.bfloat16)
W_TXT2_BF = W_TXT2.astype(jnp.bfloat16)


# ----------------------------------------------------------------------------
# Forward pass (mirrors MultiModalModel.forward)
# ----------------------------------------------------------------------------
@jax.jit
def multimodal_forward(images_nchw, text_embeddings):
    # images: (B, 1, 28, 28) NCHW -> NHWC, bf16 activations throughout the tower
    x = jnp.transpose(images_nchw, (0, 2, 3, 1)).astype(jnp.bfloat16)  # (B,28,28,1)
    B = x.shape[0]

    # Conv(1->32,3x3,p1) + ReLU + MaxPool(2,2)   -- fused Pallas kernel, bf16 out
    y1 = conv3x3_relu_pool(x, W_CONV1_BF, B_CONV1)           # (B,14,14,32)
    # Conv(32->64,3x3,p1) + ReLU + MaxPool(2,2)  -- fused Pallas kernel, bf16 out
    y2 = conv3x3_relu_pool(y1, W_CONV2_BF, B_CONV2)          # (B,7,7,64)

    # Flatten (NHWC order) -> fused heads kernel: image FC + text MLP.
    flat = y2.reshape(B, 7 * 7 * 64)                         # (B,3136) bf16
    image_embedding, text_embedding = heads(
        flat, text_embeddings.astype(jnp.bfloat16),
        W_FC_IMG_BF, B_FC_IMG, W_TXT1_BF, B_TXT1, W_TXT2_BF, B_TXT2)

    return image_embedding, text_embedding


if __name__ == "__main__":
    key = jax.random.PRNGKey(0)
    k_img, k_txt = jax.random.split(key)
    # 64*7*7 flatten implies 28x28, 1-channel inputs (MNIST-like).
    images = jax.random.normal(k_img, (2, 1, 28, 28), dtype=jnp.float32)
    text = jax.random.normal(k_txt, (2, 768), dtype=jnp.float32)

    img_emb, txt_emb = multimodal_forward(images, text)
    jax.block_until_ready((img_emb, txt_emb))

    assert img_emb.shape == (2, IMAGE_EMB) and img_emb.dtype == jnp.float32
    assert txt_emb.shape == (2, TEXT_EMB) and txt_emb.dtype == jnp.float32
    assert bool(jnp.all(img_emb >= 0)) and bool(jnp.all(txt_emb >= 0))
    print("KERNEL_OK")
</pallas_src>

<mosaic_0001>
module attributes {stable_mosaic.version = 11 : i64} {
  func.func @conv_pool_kernel(%arg0: i32, %arg1: memref<4x208x9xbf16, #tpu.memory_space<vmem>>, %arg2: memref<9x32xbf16, #tpu.memory_space<vmem>>, %arg3: memref<1x32xf32, #tpu.memory_space<vmem>>, %arg4: memref<208x32xbf16, #tpu.memory_space<vmem>>) attributes {dimension_semantics = [#tpu.dimension_semantics<parallel>], iteration_bounds = array<i64: 2>, scalar_prefetch = 0 : i64, scratch_operands = 0 : i64, tpu.core_type = #tpu.core_type<tc>, window_params = [{transform_indices = @transform_0, window_bounds = array<i64: 4, 208, 9>}, {pipeline_mode = #tpu.pipeline_mode<synchronous>, transform_indices = @transform_1, window_bounds = array<i64: 9, 32>}, {pipeline_mode = #tpu.pipeline_mode<synchronous>, transform_indices = @transform_2, window_bounds = array<i64: 1, 32>}, {transform_indices = @transform_3, window_bounds = array<i64: 208, 32>}]} {
    %c0 = arith.constant 0 : index
    %c0_0 = arith.constant 0 : index
    %c0_1 = arith.constant 0 : index
    %0 = vector.load %arg1[%c0, %c0_0, %c0_1] : memref<4x208x9xbf16, #tpu.memory_space<vmem>>, vector<4x208x9xbf16>
    %1 = vector.shape_cast %0 : vector<4x208x9xbf16> to vector<832x9xbf16>
    %c0_2 = arith.constant 0 : index
    %c0_3 = arith.constant 0 : index
    %2 = vector.load %arg2[%c0_2, %c0_3] : memref<9x32xbf16, #tpu.memory_space<vmem>>, vector<9x32xbf16>
    %cst = arith.constant dense<0.000000e+00> : vector<832x32xf32>
    %3 = tpu.matmul %1, %2, %cst {dimension_numbers = #tpu.dot_dimension_numbers<[1], [0], [0], [1], [0, 0, 1, 1], [], []>} : vector<832x9xbf16>, vector<9x32xbf16>, vector<832x32xf32> -> vector<832x32xf32>
    %4 = vector.extract_strided_slice %3 {offsets = [0, 0], sizes = [208, 32], strides = [1, 1]} : vector<832x32xf32> to vector<208x32xf32>
    %5 = vector.extract_strided_slice %3 {offsets = [208, 0], sizes = [208, 32], strides = [1, 1]} : vector<832x32xf32> to vector<208x32xf32>
    %6 = arith.maximumf %4, %5 : vector<208x32xf32>
    %7 = vector.extract_strided_slice %3 {offsets = [416, 0], sizes = [208, 32], strides = [1, 1]} : vector<832x32xf32> to vector<208x32xf32>
    %8 = vector.extract_strided_slice %3 {offsets = [624, 0], sizes = [208, 32], strides = [1, 1]} : vector<832x32xf32> to vector<208x32xf32>
    %9 = arith.maximumf %7, %8 : vector<208x32xf32>
    %10 = arith.maximumf %6, %9 : vector<208x32xf32>
    %c0_4 = arith.constant 0 : index
    %c0_5 = arith.constant 0 : index
    %11 = vector.load %arg3[%c0_4, %c0_5] : memref<1x32xf32, #tpu.memory_space<vmem>>, vector<1x32xf32>
    %12 = vector.broadcast %11 : vector<1x32xf32> to vector<208x32xf32>
    %13 = arith.addf %10, %12 : vector<208x32xf32>
    %cst_6 = arith.constant 0.000000e+00 : f32
    %14 = vector.broadcast %cst_6 : f32 to vector<208x32xf32>
    %15 = arith.maximumf %13, %14 : vector<208x32xf32>
    %16 = arith.truncf %15 : vector<208x32xf32> to vector<208x32xbf16>
    %c0_7 = arith.constant 0 : index
    %c0_8 = arith.constant 0 : index
    %17 = vector.load %arg4[%c0_7, %c0_8] : memref<208x32xbf16, #tpu.memory_space<vmem>>, vector<208x32xbf16>
    tpu.vector_store %arg4[%c0_7, %c0_8], %16 {strides = array<i32>} : memref<208x32xbf16, #tpu.memory_space<vmem>>, vector<208x32xbf16>,
    return
  }
  func.func @transform_0(%arg0: i32) -> (i32, i32, i32) {
    %c0_i32 = arith.constant 0 : i32
    %c0_i32_0 = arith.constant 0 : i32
    %c0_i32_1 = arith.constant 0 : i32
    return %c0_i32, %arg0, %c0_i32_0 : i32, i32, i32
  }
  func.func @transform_1(%arg0: i32) -> (i32, i32) {
    %c0_i32 = arith.constant 0 : i32
    %c0_i32_0 = arith.constant 0 : i32
    %c0_i32_1 = arith.constant 0 : i32
    return %c0_i32, %c0_i32_0 : i32, i32
  }
  func.func @transform_2(%arg0: i32) -> (i32, i32) {
    %c0_i32 = arith.constant 0 : i32
    %c0_i32_0 = arith.constant 0 : i32
    %c0_i32_1 = arith.constant 0 : i32
    return %c0_i32, %c0_i32_0 : i32, i32
  }
  func.func @transform_3(%arg0: i32) -> (i32, i32) {
    %c0_i32 = arith.constant 0 : i32
    %c0_i32_0 = arith.constant 0 : i32
    return %arg0, %c0_i32 : i32, i32
  }
}

module attributes {stable_mosaic.version = 11 : i64} {
  func.func @conv_pool_kernel(%arg0: i32, %arg1: memref<4x64x288xbf16, #tpu.memory_space<vmem>>, %arg2: memref<288x64xbf16, #tpu.memory_space<vmem>>, %arg3: memref<1x64xf32, #tpu.memory_space<vmem>>, %arg4: memref<64x64xbf16, #tpu.memory_space<vmem>>) attributes {dimension_semantics = [#tpu.dimension_semantics<parallel>], iteration_bounds = array<i64: 2>, scalar_prefetch = 0 : i64, scratch_operands = 0 : i64, tpu.core_type = #tpu.core_type<tc>, window_params = [{transform_indices = @transform_0, window_bounds = array<i64: 4, 64, 288>}, {pipeline_mode = #tpu.pipeline_mode<synchronous>, transform_indices = @transform_1, window_bounds = array<i64: 288, 64>}, {pipeline_mode = #tpu.pipeline_mode<synchronous>, transform_indices = @transform_2, window_bounds = array<i64: 1, 64>}, {transform_indices = @transform_3, window_bounds = array<i64: 64, 64>}]} {
    %c0 = arith.constant 0 : index
    %c0_0 = arith.constant 0 : index
    %c0_1 = arith.constant 0 : index
    %0 = vector.load %arg1[%c0, %c0_0, %c0_1] : memref<4x64x288xbf16, #tpu.memory_space<vmem>>, vector<4x64x288xbf16>
    %1 = vector.shape_cast %0 : vector<4x64x288xbf16> to vector<256x288xbf16>
    %c0_2 = arith.constant 0 : index
    %c0_3 = arith.constant 0 : index
    %2 = vector.load %arg2[%c0_2, %c0_3] : memref<288x64xbf16, #tpu.memory_space<vmem>>, vector<288x64xbf16>
    %cst = arith.constant dense<0.000000e+00> : vector<256x64xf32>
    %3 = tpu.matmul %1, %2, %cst {dimension_numbers = #tpu.dot_dimension_numbers<[1], [0], [0], [1], [0, 0, 1, 1], [], []>} : vector<256x288xbf16>, vector<288x64xbf16>, vector<256x64xf32> -> vector<256x64xf32>
    %4 = vector.extract_strided_slice %3 {offsets = [0, 0], sizes = [64, 64], strides = [1, 1]} : vector<256x64xf32> to vector<64x64xf32>
    %5 = vector.extract_strided_slice %3 {offsets = [64, 0], sizes = [64, 64], strides = [1, 1]} : vector<256x64xf32> to vector<64x64xf32>
    %6 = arith.maximumf %4, %5 : vector<64x64xf32>
    %7 = vector.extract_strided_slice %3 {offsets = [128, 0], sizes = [64, 64], strides = [1, 1]} : vector<256x64xf32> to vector<64x64xf32>
    %8 = vector.extract_strided_slice %3 {offsets = [192, 0], sizes = [64, 64], strides = [1, 1]} : vector<256x64xf32> to vector<64x64xf32>
    %9 = arith.maximumf %7, %8 : vector<64x64xf32>
    %10 = arith.maximumf %6, %9 : vector<64x64xf32>
    %c0_4 = arith.constant 0 : index
    %c0_5 = arith.constant 0 : index
    %11 = vector.load %arg3[%c0_4, %c0_5] : memref<1x64xf32, #tpu.memory_space<vmem>>, vector<1x64xf32>
    %12 = vector.broadcast %11 : vector<1x64xf32> to vector<64x64xf32>
    %13 = arith.addf %10, %12 : vector<64x64xf32>
    %cst_6 = arith.constant 0.000000e+00 : f32
    %14 = vector.broadcast %cst_6 : f32 to vector<64x64xf32>
    %15 = arith.maximumf %13, %14 : vector<64x64xf32>
    %16 = arith.truncf %15 : vector<64x64xf32> to vector<64x64xbf16>
    %c0_7 = arith.constant 0 : index
    %c0_8 = arith.constant 0 : index
    %17 = vector.load %arg4[%c0_7, %c0_8] : memref<64x64xbf16, #tpu.memory_space<vmem>>, vector<64x64xbf16>
    tpu.vector_store %arg4[%c0_7, %c0_8], %16 {strides = array<i32>} : memref<64x64xbf16, #tpu.memory_space<vmem>>, vector<64x64xbf16>,
    return
  }
  func.func @transform_0(%arg0: i32) -> (i32, i32, i32) {
    %c0_i32 = arith.constant 0 : i32
    %c0_i32_0 = arith.constant 0 : i32
    %c0_i32_1 = arith.constant 0 : i32
    return %c0_i32, %arg0, %c0_i32_0 : i32, i32, i32
  }
  func.func @transform_1(%arg0: i32) -> (i32, i32) {
    %c0_i32 = arith.constant 0 : i32
    %c0_i32_0 = arith.constant 0 : i32
    %c0_i32_1 = arith.constant 0 : i32
    return %c0_i32, %c0_i32_0 : i32, i32
  }
  func.func @transform_2(%arg0: i32) -> (i32, i32) {
    %c0_i32 = arith.constant 0 : i32
    %c0_i32_0 = arith.constant 0 : i32
    %c0_i32_1 = arith.constant 0 : i32
    return %c0_i32, %c0_i32_0 : i32, i32
  }
  func.func @transform_3(%arg0: i32) -> (i32, i32) {
    %c0_i32 = arith.constant 0 : i32
    %c0_i32_0 = arith.constant 0 : i32
    return %arg0, %c0_i32 : i32, i32
  }
}

module attributes {stable_mosaic.version = 11 : i64} {
  func.func @heads_kernel(%arg0: i32, %arg1: memref<16x3136xbf16, #tpu.memory_space<vmem>>, %arg2: memref<3136x128xbf16, #tpu.memory_space<vmem>>, %arg3: memref<1x128xf32, #tpu.memory_space<vmem>>, %arg4: memref<16x768xbf16, #tpu.memory_space<vmem>>, %arg5: memref<768x256xbf16, #tpu.memory_space<vmem>>, %arg6: memref<1x256xf32, #tpu.memory_space<vmem>>, %arg7: memref<256x128xbf16, #tpu.memory_space<vmem>>, %arg8: memref<1x128xf32, #tpu.memory_space<vmem>>, %arg9: memref<16x128xf32, #tpu.memory_space<vmem>>, %arg10: memref<16x128xf32, #tpu.memory_space<vmem>>) attributes {dimension_semantics = [#tpu.dimension_semantics<parallel>], iteration_bounds = array<i64: 1>, scalar_prefetch = 0 : i64, scratch_operands = 0 : i64, tpu.core_type = #tpu.core_type<tc>, window_params = [{transform_indices = @transform_0, window_bounds = array<i64: 16, 3136>}, {pipeline_mode = #tpu.pipeline_mode<synchronous>, transform_indices = @transform_1, window_bounds = array<i64: 3136, 128>}, {pipeline_mode = #tpu.pipeline_mode<synchronous>, transform_indices = @transform_2, window_bounds = array<i64: 1, 128>}, {transform_indices = @transform_3, window_bounds = array<i64: 16, 768>}, {pipeline_mode = #tpu.pipeline_mode<synchronous>, transform_indices = @transform_4, window_bounds = array<i64: 768, 256>}, {pipeline_mode = #tpu.pipeline_mode<synchronous>, transform_indices = @transform_5, window_bounds = array<i64: 1, 256>}, {pipeline_mode = #tpu.pipeline_mode<synchronous>, transform_indices = @transform_6, window_bounds = array<i64: 256, 128>}, {pipeline_mode = #tpu.pipeline_mode<synchronous>, transform_indices = @transform_7, window_bounds = array<i64: 1, 128>}, {transform_indices = @transform_8, window_bounds = array<i64: 16, 128>}, {transform_indices = @transform_9, window_bounds = array<i64: 16, 128>}]} {
    %c0 = arith.constant 0 : index
    %c0_0 = arith.constant 0 : index
    %0 = vector.load %arg1[%c0, %c0_0] : memref<16x3136xbf16, #tpu.memory_space<vmem>>, vector<16x3136xbf16>
    %c0_1 = arith.constant 0 : index
    %c0_2 = arith.constant 0 : index
    %1 = vector.load %arg2[%c0_1, %c0_2] : memref<3136x128xbf16, #tpu.memory_space<vmem>>, vector<3136x128xbf16>
    %cst = arith.constant dense<0.000000e+00> : vector<16x128xf32>
    %2 = tpu.matmul %0, %1, %cst {dimension_numbers = #tpu.dot_dimension_numbers<[1], [0], [0], [1], [0, 0, 1, 1], [], []>} : vector<16x3136xbf16>, vector<3136x128xbf16>, vector<16x128xf32> -> vector<16x128xf32>
    %c0_3 = arith.constant 0 : index
    %c0_4 = arith.constant 0 : index
    %3 = vector.load %arg3[%c0_3, %c0_4] : memref<1x128xf32, #tpu.memory_space<vmem>>, vector<1x128xf32>
    %4 = vector.broadcast %3 : vector<1x128xf32> to vector<16x128xf32>
    %5 = arith.addf %2, %4 : vector<16x128xf32>
    %cst_5 = arith.constant 0.000000e+00 : f32
    %6 = vector.broadcast %cst_5 : f32 to vector<16x128xf32>
    %7 = arith.maximumf %5, %6 : vector<16x128xf32>
    %c0_6 = arith.constant 0 : index
    %c0_7 = arith.constant 0 : index
    %8 = vector.load %arg9[%c0_6, %c0_7] : memref<16x128xf32, #tpu.memory_space<vmem>>, vector<16x128xf32>
    tpu.vector_store %arg9[%c0_6, %c0_7], %7 {strides = array<i32>} : memref<16x128xf32, #tpu.memory_space<vmem>>, vector<16x128xf32>,
    %c0_8 = arith.constant 0 : index
    %c0_9 = arith.constant 0 : index
    %9 = vector.load %arg4[%c0_8, %c0_9] : memref<16x768xbf16, #tpu.memory_space<vmem>>, vector<16x768xbf16>
    %c0_10 = arith.constant 0 : index
    %c0_11 = arith.constant 0 : index
    %10 = vector.load %arg5[%c0_10, %c0_11] : memref<768x256xbf16, #tpu.memory_space<vmem>>, vector<768x256xbf16>
    %cst_12 = arith.constant dense<0.000000e+00> : vector<16x256xf32>
    %11 = tpu.matmul %9, %10, %cst_12 {dimension_numbers = #tpu.dot_dimension_numbers<[1], [0], [0], [1], [0, 0, 1, 1], [], []>} : vector<16x768xbf16>, vector<768x256xbf16>, vector<16x256xf32> -> vector<16x256xf32>
    %c0_13 = arith.constant 0 : index
    %c0_14 = arith.constant 0 : index
    %12 = vector.load %arg6[%c0_13, %c0_14] : memref<1x256xf32, #tpu.memory_space<vmem>>, vector<1x256xf32>
    %13 = vector.broadcast %12 : vector<1x256xf32> to vector<16x256xf32>
    %14 = arith.addf %11, %13 : vector<16x256xf32>
    %cst_15 = arith.constant 0.000000e+00 : f32
    %15 = vector.broadcast %cst_15 : f32 to vector<16x256xf32>
    %16 = arith.maximumf %14, %15 : vector<16x256xf32>
    %17 = arith.truncf %16 : vector<16x256xf32> to vector<16x256xbf16>
    %c0_16 = arith.constant 0 : index
    %c0_17 = arith.constant 0 : index
    %18 = vector.load %arg7[%c0_16, %c0_17] : memref<256x128xbf16, #tpu.memory_space<vmem>>, vector<256x128xbf16>
    %cst_18 = arith.constant dense<0.000000e+00> : vector<16x128xf32>
    %19 = tpu.matmul %17, %18, %cst_18 {dimension_numbers = #tpu.dot_dimension_numbers<[1], [0], [0], [1], [0, 0, 1, 1], [], []>} : vector<16x256xbf16>, vector<256x128xbf16>, vector<16x128xf32> -> vector<16x128xf32>
    %c0_19 = arith.constant 0 : index
    %c0_20 = arith.constant 0 : index
    %20 = vector.load %arg8[%c0_19, %c0_20] : memref<1x128xf32, #tpu.memory_space<vmem>>, vector<1x128xf32>
    %21 = vector.broadcast %20 : vector<1x128xf32> to vector<16x128xf32>
    %22 = arith.addf %19, %21 : vector<16x128xf32>
    %cst_21 = arith.constant 0.000000e+00 : f32
    %23 = vector.broadcast %cst_21 : f32 to vector<16x128xf32>
    %24 = arith.maximumf %22, %23 : vector<16x128xf32>
    %c0_22 = arith.constant 0 : index
    %c0_23 = arith.constant 0 : index
    %25 = vector.load %arg10[%c0_22, %c0_23] : memref<16x128xf32, #tpu.memory_space<vmem>>, vector<16x128xf32>
    tpu.vector_store %arg10[%c0_22, %c0_23], %24 {strides = array<i32>} : memref<16x128xf32, #tpu.memory_space<vmem>>, vector<16x128xf32>,
    return
  }
  func.func @transform_0(%arg0: i32) -> (i32, i32) {
    %c0_i32 = arith.constant 0 : i32
    %c0_i32_0 = arith.constant 0 : i32
    return %arg0, %c0_i32 : i32, i32
  }
  func.func @transform_1(%arg0: i32) -> (i32, i32) {
    %c0_i32 = arith.constant 0 : i32
    %c0_i32_0 = arith.constant 0 : i32
    %c0_i32_1 = arith.constant 0 : i32
    return %c0_i32, %c0_i32_0 : i32, i32
  }
  func.func @transform_2(%arg0: i32) -> (i32, i32) {
    %c0_i32 = arith.constant 0 : i32
    %c0_i32_0 = arith.constant 0 : i32
    %c0_i32_1 = arith.constant 0 : i32
    return %c0_i32, %c0_i32_0 : i32, i32
  }
  func.func @transform_3(%arg0: i32) -> (i32, i32) {
    %c0_i32 = arith.constant 0 : i32
    %c0_i32_0 = arith.constant 0 : i32
    return %arg0, %c0_i32 : i32, i32
  }
  func.func @transform_4(%arg0: i32) -> (i32, i32) {
    %c0_i32 = arith.constant 0 : i32
    %c0_i32_0 = arith.constant 0 : i32
    %c0_i32_1 = arith.constant 0 : i32
    return %c0_i32, %c0_i32_0 : i32, i32
  }
  func.func @transform_5(%arg0: i32) -> (i32, i32) {
    %c0_i32 = arith.constant 0 : i32
    %c0_i32_0 = arith.constant 0 : i32
    %c0_i32_1 = arith.constant 0 : i32
    return %c0_i32, %c0_i32_0 : i32, i32
  }
  func.func @transform_6(%arg0: i32) -> (i32, i32) {
    %c0_i32 = arith.constant 0 : i32
    %c0_i32_0 = arith.constant 0 : i32
    %c0_i32_1 = arith.constant 0 : i32
    return %c0_i32, %c0_i32_0 : i32, i32
  }
  func.func @transform_7(%arg0: i32) -> (i32, i32) {
    %c0_i32 = arith.constant 0 : i32
    %c0_i32_0 = arith.constant 0 : i32
    %c0_i32_1 = arith.constant 0 : i32
    return %c0_i32, %c0_i32_0 : i32, i32
  }
  func.func @transform_8(%arg0: i32) -> (i32, i32) {
    %c0_i32 = arith.constant 0 : i32
    %c0_i32_0 = arith.constant 0 : i32
    return %arg0, %c0_i32 : i32, i32
  }
  func.func @transform_9(%arg0: i32) -> (i32, i32) {
    %c0_i32 = arith.constant 0 : i32
    %c0_i32_0 = arith.constant 0 : i32
    return %arg0, %c0_i32 : i32, i32
  }
}

</mosaic_0001>

<llo_original>
// kernel: multimodal_forward.3
$region0: #{multimodal_forward.3}
  #allocation0 [shape = 'u32[]', space=smem, size = 0x4, offset = 0x4, fixed_abs, tag = 'smem constant byte address 0x4 - core index']
  #allocation1 [shape = 'u32[144,128]{1,0:T(1,128)}', space=vmem, size = 0x12000, scoped, tag = 'internal scratch']
  %s0 = inlined_call_operand.vmem [shape: bf16[4,416,9], index: 0, kind: input, shape index: {}]
  %s1 = inlined_call_operand.vmem [shape: bf16[9,32], index: 1, kind: input, shape index: {}]
  %s2 = inlined_call_operand.vmem [shape: f32[1,32], index: 2, kind: input, shape index: {}]
  %s3 = inlined_call_operand.vmem [shape: bf16[416,32], index: 3, kind: output, shape index: {}]
  %s4 = sld [smem:[#allocation0]]
  $region86: #{multimodal_forward.3} parent=0
    _
  %s6 = ssub.s32 1, %s4
  %s7 = scalar_select 0, %s6, %s4
  $region1: #{multimodal_forward.3} parent=0
    #allocation2 [shape = 'u8[425984]{0}', space=vmem, size = 0x68000, scoped, tag = 'input window, operand 0']
    loop: start=0, step=1, limit=4
    $region2: #{multimodal_forward.3} parent=1 // loop_pre_header
      _
    $region3: #{multimodal_forward.3} parent=1 // loop_header
      %s9 = sphi 0, %s13
      %p10 = scmp.ge.s32.totalorder %s9, 4
      %s19 = sphi 0, %s21
      %s22 = sphi 0, %s19
      %s23 = sphi 0, %s22
      %s39 = sphi 0, %s23
      %s43 = sphi 0, %s43
      %s45 = sphi 0, %s43
      %s46 = sphi 0, %s45
      %s60 = sphi 0, %s46
      %s64 = sphi 0, %s64
      %s66 = sphi 0, %s64
      %s67 = sphi 0, %s66
      %s81 = sphi 0, %s67
      %s87 = sphi 0, %s89
      %s90 = sphi 0, %s87
      %s91 = sphi 0, %s90
      %s107 = sphi 0, %s91
    $region4: #{multimodal_forward.3} parent=1 // loop_header_branch
      %12 = sbr.rel (%p10) target = $region8
    $region5: #{multimodal_forward.3} parent=1 // loop_body
      %s14 = ssub.s32 %s9, 1
      %s15 = ssub.s32 %s9, 2
      %s16 = sadd.s32 %s9, 1
      %s17 = ssub.s32 %s9, %s16
      %p18 = scmp.eq.s32.totalorder %s17, 0
      %s20 = sadd.s32 %s19, 1
      %s21 = scalar_select %p18, %s19, %s20
      %p24 = pneg %p18
      %p25 = scmp.eq.s32.totalorder %s9, 1
      %p26 = por %p24, %p25
      %p27 = scmp.ne.s32.totalorder %s19, %s22
      %p28 = scmp.eq.s32.totalorder %s9, 0
      %p29 = por %p27, %p28
      %p30 = scmp.ne.s32.totalorder %s19, %s22
      %p31 = scmp.eq.s32.totalorder %s14, 1
      %p32 = por %p30, %p31
      %p33 = scmp.ne.s32.totalorder %s22, %s23
      %p34 = scmp.eq.s32.totalorder %s14, 0
      %p35 = por %p33, %p34
      %p36 = scmp.ne.s32.totalorder %s22, %s23
      %p37 = scmp.eq.s32.totalorder %s15, 1
      %p38 = por %p36, %p37
      %p40 = scmp.ne.s32.totalorder %s23, %s39
      %p41 = scmp.eq.s32.totalorder %s15, 0
      %p42 = por %p40, %p41
      %s44 = sadd.s32 %s43, 1
      %p47 = scmp.eq.s32.totalorder %s9, 1
      %p48 = scmp.ne.s32.totalorder %s43, %s45
      %p49 = scmp.eq.s32.totalorder %s9, 0
      %p50 = por %p48, %p49
      %p51 = scmp.ne.s32.totalorder %s43, %s45
      %p52 = scmp.eq.s32.totalorder %s14, 1
      %p53 = por %p51, %p52
      %p54 = scmp.ne.s32.totalorder %s45, %s46
      %p55 = scmp.eq.s32.totalorder %s14, 0
      %p56 = por %p54, %p55
      %p57 = scmp.ne.s32.totalorder %s45, %s46
      %p58 = scmp.eq.s32.totalorder %s15, 1
      %p59 = por %p57, %p58
      %p61 = scmp.ne.s32.totalorder %s46, %s60
      %p62 = scmp.eq.s32.totalorder %s15, 0
      %p63 = por %p61, %p62
      %s65 = sadd.s32 %s64, 1
      %p68 = scmp.eq.s32.totalorder %s9, 1
      %p69 = scmp.ne.s32.totalorder %s64, %s66
      %p70 = scmp.eq.s32.totalorder %s9, 0
      %p71 = por %p69, %p70
      %p72 = scmp.ne.s32.totalorder %s64, %s66
      %p73 = scmp.eq.s32.totalorder %s14, 1
      %p74 = por %p72, %p73
      %p75 = scmp.ne.s32.totalorder %s66, %s67
      %p76 = scmp.eq.s32.totalorder %s14, 0
      %p77 = por %p75, %p76
      %p78 = scmp.ne.s32.totalorder %s66, %s67
      %p79 = scmp.eq.s32.totalorder %s15, 1
      %p80 = por %p78, %p79
      %p82 = scmp.ne.s32.totalorder %s67, %s81
      %p83 = scmp.eq.s32.totalorder %s15, 0
      %p84 = por %p82, %p83
      %s85 = ssub.s32 %s9, %s16
      %p86 = scmp.eq.s32.totalorder %s85, 0
      %s88 = sadd.s32 %s87, 1
      %s89 = scalar_select %p86, %s87, %s88
      %p92 = pneg %p86
      %p93 = scmp.eq.s32.totalorder %s9, 1
      %p94 = por %p92, %p93
      %p95 = scmp.ne.s32.totalorder %s87, %s90
      %p96 = scmp.eq.s32.totalorder %s9, 0
      %p97 = por %p95, %p96
      %p98 = scmp.ne.s32.totalorder %s87, %s90
      %p99 = scmp.eq.s32.totalorder %s14, 1
      %p100 = por %p98, %p99
      %p101 = scmp.ne.s32.totalorder %s90, %s91
      %p102 = scmp.eq.s32.totalorder %s14, 0
      %p103 = por %p101, %p102
      %p104 = scmp.ne.s32.totalorder %s90, %s91
      %p105 = scmp.eq.s32.totalorder %s15, 1
      %p106 = por %p104, %p105
      %p108 = scmp.ne.s32.totalorder %s91, %s107
      %p109 = scmp.eq.s32.totalorder %s15, 0
      %p110 = por %p108, %p109
      %p111 = scmp.le.s32.totalorder 1, %s9
      %p112 = scmp.lt.s32.totalorder %s9, 3
      %p113 = pnand %p111, %p112
      %p114 = pneg %p113
      // Predicated region
      $region9: #{multimodal_forward.3} parent=5 // pred_check
        _
      $region10: #{multimodal_forward.3} parent=5 // pred_check_branch
        %116 = sbr.rel (%p113) target = $region12
      $region11: #{multimodal_forward.3} parent=5 // pred_region
        %s117 = ssub.s32 %s9, 1
        // Predicated region
        $region13: #{multimodal_forward.3} parent=11 // pred_check
          %p118 = pneg %p56
        $region14: #{multimodal_forward.3} parent=11 // pred_check_branch
          %120 = sbr.rel (%p118) target = $region16
        $region15: #{multimodal_forward.3} parent=11 // pred_region
          _
        $region16: #{multimodal_forward.3} parent=11 // pred_fallthru
          _
        // Predicated region
        $region17: #{multimodal_forward.3} parent=11 // pred_check
          %p121 = pneg %p77
        $region18: #{multimodal_forward.3} parent=11 // pred_check_branch
          %123 = sbr.rel (%p121) target = $region20
        $region19: #{multimodal_forward.3} parent=11 // pred_region
          _
        $region20: #{multimodal_forward.3} parent=11 // pred_fallthru
          _
      $region12: #{multimodal_forward.3} parent=5 // pred_fallthru
        _
      %p124 = scmp.lt.s32.totalorder %s9, 2
      // Predicated region
      $region21: #{multimodal_forward.3} parent=5 // pred_check
        %p125 = pneg %p124
      $region22: #{multimodal_forward.3} parent=5 // pred_check_branch
        %127 = sbr.rel (%p125) target = $region24
      $region23: #{multimodal_forward.3} parent=5 // pred_region
        // Predicated region
        $region25: #{multimodal_forward.3} parent=23 // pred_check
          %p128 = pneg %p29
        $region26: #{multimodal_forward.3} parent=23 // pred_check_branch
          %130 = sbr.rel (%p128) target = $region28
        $region27: #{multimodal_forward.3} parent=23 // pred_region
          %s131 = sand.u32 %s19, 1
          %s132 = sand.u32 %s19, 1
          %s133 = smul.addr %s132, 416
          %s134 = scalar_lea.vmem [#allocation2], %s133
          %s135 = smul.u32 26, %s9
          %s136 = smul.addr %s135, 4
          %s137 = scalar_lea.vmem %s0, %s136
          // Predicated region
          $region29: #{multimodal_forward.3} parent=27 // pred_check
            _
          $region30: #{multimodal_forward.3} parent=27 // pred_check_branch
            %139 = sbr.rel (0) target = $region32
          $region31: #{multimodal_forward.3} parent=27 // pred_region
            // Predicated region
            $region33: #{multimodal_forward.3} parent=31 // pred_check
              _
            $region34: #{multimodal_forward.3} parent=31 // pred_check_branch
              %141 = sbr.rel target = $region36
            $region35: #{multimodal_forward.3} parent=31 // pred_region
              // Predicated region
              $region48: #{multimodal_forward.3} parent=35 // pred_check
                _
              $region49: #{multimodal_forward.3} parent=35 // pred_check_branch
                %362 = sbr.rel (0) target = $region51
              $region50: #{multimodal_forward.3} parent=35 // pred_region
                loop: start=0, step=1, limit=1
                $region52: #{multimodal_forward.3} parent=50 // loop_pre_header
                  _
                $region53: #{multimodal_forward.3} parent=50 // loop_header
                  %s364 = sphi 0, %s368
                  %p365 = scmp.ge.s32.totalorder %s364, 1
                  %s369 = sphi %s137, %s137
                  %s370 = sphi %s134, %s134
                $region54: #{multimodal_forward.3} parent=50 // loop_header_branch
                  %367 = sbr.rel (%p365) target = $region58
                $region55: #{multimodal_forward.3} parent=50 // loop_body
                  _
                $region56: #{multimodal_forward.3} parent=50 // loop_footer
                  %s368 = sadd.s32 1, %s364
                $region57: #{multimodal_forward.3} parent=50 // loop_footer_branch
                  %363 = sbr.rel target = $region53
                $region58: #{multimodal_forward.3} parent=50 // loop_exit
                  _
                loop: start=0, step=1, limit=1
                $region59: #{multimodal_forward.3} parent=50 // loop_pre_header
                  _
                $region60: #{multimodal_forward.3} parent=50 // loop_header
                  %s373 = sphi 0, %s377
                  %p374 = scmp.ge.s32.totalorder %s373, 1
                  %s378 = sphi %s137, %s137
                  %s379 = sphi %s134, %s134
                $region61: #{multimodal_forward.3} parent=50 // loop_header_branch
                  %376 = sbr.rel (%p374) target = $region65
                $region62: #{multimodal_forward.3} parent=50 // loop_body
                  %v380 = vld [vmem:[%s378] sm:$0xf]
                  %381 = vst [vmem:[%s379] sm:$0xf] %v380
                  %v382 = vld [vmem:[%s378 + $0x4] sm:$0xf]
                  %383 = vst [vmem:[%s379 + $0x4] sm:$0xf] %v382
                  %v384 = vld [vmem:[%s378 + $0x8] sm:$0xf]
                  %385 = vst [vmem:[%s379 + $0x8] sm:$0xf] %v384
                  %v386 = vld [vmem:[%s378 + $0xc] sm:$0xf]
                  %387 = vst [vmem:[%s379 + $0xc] sm:$0xf] %v386
                  %v388 = vld [vmem:[%s378 + $0x10] sm:$0xf]
                  %389 = vst [vmem:[%s379 + $0x10] sm:$0xf] %v388
                  %v390 = vld [vmem:[%s378 + $0x14] sm:$0xf]
                  %391 = vst [vmem:[%s379 + $0x14] sm:$0xf] %v390
                  %v392 = vld [vmem:[%s378 + $0x18] sm:$0xf]
                  %393 = vst [vmem:[%s379 + $0x18] sm:$0xf] %v392
                  %v394 = vld [vmem:[%s378 + $0x1c] sm:$0xf]
                  %395 = vst [vmem:[%s379 + $0x1c] sm:$0xf] %v394
                  %v396 = vld [vmem:[%s378 + $0x20] sm:$0xf]
                  %397 = vst [vmem:[%s379 + $0x20] sm:$0xf] %v396
                  %v398 = vld [vmem:[%s378 + $0x24] sm:$0xf]
                  %399 = vst [vmem:[%s379 + $0x24] sm:$0xf] %v398
                  %v400 = vld [vmem:[%s378 + $0x28] sm:$0xf]
                  %401 = vst [vmem:[%s379 + $0x28] sm:$0xf] %v400
                  %v402 = vld [vmem:[%s378 + $0x2c] sm:$0xf]
                  %403 = vst [vmem:[%s379 + $0x2c] sm:$0xf] %v402
                  %v404 = vld [vmem:[%s378 + $0x30] sm:$0xf]
                  %405 = vst [vmem:[%s379 + $0x30] sm:$0xf] %v404
                  %v406 = vld [vmem:[%s378 + $0x34] sm:$0xf]
                  %407 = vst [vmem:[%s379 + $0x34] sm:$0xf] %v406
                  %v408 = vld [vmem:[%s378 + $0x38] sm:$0xf]
                  %409 = vst [vmem:[%s379 + $0x38] sm:$0xf] %v408
                  %v410 = vld [vmem:[%s378 + $0x3c] sm:$0xf]
                  %411 = vst [vmem:[%s379 + $0x3c] sm:$0xf] %v410
                  %v412 = vld [vmem:[%s378 + $0x40] sm:$0xf]
                  %413 = vst [vmem:[%s379 + $0x40] sm:$0xf] %v412
                  %v414 = vld [vmem:[%s378 + $0x44] sm:$0xf]
                  %415 = vst [vmem:[%s379 + $0x44] sm:$0xf] %v414
                  %v416 = vld [vmem:[%s378 + $0x48] sm:$0xf]
                  %417 = vst [vmem:[%s379 + $0x48] sm:$0xf] %v416
                  %v418 = vld [vmem:[%s378 + $0x4c] sm:$0xf]
                  %419 = vst [vmem:[%s379 + $0x4c] sm:$0xf] %v418
                  %v420 = vld [vmem:[%s378 + $0x50] sm:$0xf]
                  %421 = vst [vmem:[%s379 + $0x50] sm:$0xf] %v420
                  %v422 = vld [vmem:[%s378 + $0x54] sm:$0xf]
                  %423 = vst [vmem:[%s379 + $0x54] sm:$0xf] %v422
                  %v424 = vld [vmem:[%s378 + $0x58] sm:$0xf]
                  %425 = vst [vmem:[%s379 + $0x58] sm:$0xf] %v424
                  %v426 = vld [vmem:[%s378 + $0x5c] sm:$0xf]
                  %427 = vst [vmem:[%s379 + $0x5c] sm:$0xf] %v426
                  %v428 = vld [vmem:[%s378 + $0x60] sm:$0xf]
                  %429 = vst [vmem:[%s379 + $0x60] sm:$0xf] %v428
                  %v430 = vld [vmem:[%s378 + $0x64] sm:$0xf]
                  %431 = vst [vmem:[%s379 + $0x64] sm:$0xf] %v430
                  %v432 = vld [vmem:[%s378 + $0xd0] sm:$0xf]
                  %433 = vst [vmem:[%s379 + $0x68] sm:$0xf] %v432
                  %v434 = vld [vmem:[%s378 + $0xd4] sm:$0xf]
                  %435 = vst [vmem:[%s379 + $0x6c] sm:$0xf] %v434
                  %v436 = vld [vmem:[%s378 + $0xd8] sm:$0xf]
                  %437 = vst [vmem:[%s379 + $0x70] sm:$0xf] %v436
                  %v438 = vld [vmem:[%s378 + $0xdc] sm:$0xf]
                  %439 = vst [vmem:[%s379 + $0x74] sm:$0xf] %v438
                  %v440 = vld [vmem:[%s378 + $0xe0] sm:$0xf]
                  %441 = vst [vmem:[%s379 + $0x78] sm:$0xf] %v440
                  %v442 = vld [vmem:[%s378 + $0xe4] sm:$0xf]
                  %443 = vst [vmem:[%s379 + $0x7c] sm:$0xf] %v442
                  %v444 = vld [vmem:[%s378 + $0xe8] sm:$0xf]
                  %445 = vst [vmem:[%s379 + $0x80] sm:$0xf] %v444
                  %v446 = vld [vmem:[%s378 + $0xec] sm:$0xf]
                  %447 = vst [vmem:[%s379 + $0x84] sm:$0xf] %v446
                  %v448 = vld [vmem:[%s378 + $0xf0] sm:$0xf]
                  %449 = vst [vmem:[%s379 + $0x88] sm:$0xf] %v448
                  %v450 = vld [vmem:[%s378 + $0xf4] sm:$0xf]
                  %451 = vst [vmem:[%s379 + $0x8c] sm:$0xf] %v450
                  %v452 = vld [vmem:[%s378 + $0xf8] sm:$0xf]
                  %453 = vst [vmem:[%s379 + $0x90] sm:$0xf] %v452
                  %v454 = vld [vmem:[%s378 + $0xfc] sm:$0xf]
                  %455 = vst [vmem:[%s379 + $0x94] sm:$0xf] %v454
                  %v456 = vld [vmem:[%s378 + $0x100] sm:$0xf]
                  %457 = vst [vmem:[%s379 + $0x98] sm:$0xf] %v456
                  %v458 = vld [vmem:[%s378 + $0x104] sm:$0xf]
                  %459 = vst [vmem:[%s379 + $0x9c] sm:$0xf] %v458
                  %v460 = vld [vmem:[%s378 + $0x108] sm:$0xf]
                  %461 = vst [vmem:[%s379 + $0xa0] sm:$0xf] %v460
                  %v462 = vld [vmem:[%s378 + $0x10c] sm:$0xf]
                  %463 = vst [vmem:[%s379 + $0xa4] sm:$0xf] %v462
                  %v464 = vld [vmem:[%s378 + $0x110] sm:$0xf]
                  %465 = vst [vmem:[%s379 + $0xa8] sm:$0xf] %v464
                  %v466 = vld [vmem:[%s378 + $0x114] sm:$0xf]
                  %467 = vst [vmem:[%s379 + $0xac] sm:$0xf] %v466
                  %v468 = vld [vmem:[%s378 + $0x118] sm:$0xf]
                  %469 = vst [vmem:[%s379 + $0xb0] sm:$0xf] %v468
                  %v470 = vld [vmem:[%s378 + $0x11c] sm:$0xf]
                  %471 = vst [vmem:[%s379 + $0xb4] sm:$0xf] %v470
                  %v472 = vld [vmem:[%s378 + $0x120] sm:$0xf]
                  %473 = vst [vmem:[%s379 + $0xb8] sm:$0xf] %v472
                  %v474 = vld [vmem:[%s378 + $0x124] sm:$0xf]
                  %475 = vst [vmem:[%s379 + $0xbc] sm:$0xf] %v474
                  %v476 = vld [vmem:[%s378 + $0x128] sm:$0xf]
                  %477 = vst [vmem:[%s379 + $0xc0] sm:$0xf] %v476
                  %v478 = vld [vmem:[%s378 + $0x12c] sm:$0xf]
                  %479 = vst [vmem:[%s379 + $0xc4] sm:$0xf] %v478
                  %v480 = vld [vmem:[%s378 + $0x130] sm:$0xf]
                  %481 = vst [vmem:[%s379 + $0xc8] sm:$0xf] %v480
                  %v482 = vld [vmem:[%s378 + $0x134] sm:$0xf]
                  %483 = vst [vmem:[%s379 + $0xcc] sm:$0xf] %v482
                  %v484 = vld [vmem:[%s378 + $0x1a0] sm:$0xf]
                  %485 = vst [vmem:[%s379 + $0xd0] sm:$0xf] %v484
                  %v486 = vld [vmem:[%s378 + $0x1a4] sm:$0xf]
                  %487 = vst [vmem:[%s379 + $0xd4] sm:$0xf] %v486
                  %v488 = vld [vmem:[%s378 + $0x1a8] sm:$0xf]
                  %489 = vst [vmem:[%s379 + $0xd8] sm:$0xf] %v488
                  %v490 = vld [vmem:[%s378 + $0x1ac] sm:$0xf]
                  %491 = vst [vmem:[%s379 + $0xdc] sm:$0xf] %v490
                  %v492 = vld [vmem:[%s378 + $0x1b0] sm:$0xf]
                  %493 = vst [vmem:[%s379 + $0xe0] sm:$0xf] %v492
                  %v494 = vld [vmem:[%s378 + $0x1b4] sm:$0xf]
                  %495 = vst [vmem:[%s379 + $0xe4] sm:$0xf] %v494
                  %v496 = vld [vmem:[%s378 + $0x1b8] sm:$0xf]
                  %497 = vst [vmem:[%s379 + $0xe8] sm:$0xf] %v496
                  %v498 = vld [vmem:[%s378 + $0x1bc] sm:$0xf]
                  %499 = vst [vmem:[%s379 + $0xec] sm:$0xf] %v498
                  %v500 = vld [vmem:[%s378 + $0x1c0] sm:$0xf]
                  %501 = vst [vmem:[%s379 + $0xf0] sm:$0xf] %v500
                  %v502 = vld [vmem:[%s378 + $0x1c4] sm:$0xf]
                  %503 = vst [vmem:[%s379 + $0xf4] sm:$0xf] %v502
                  %v504 = vld [vmem:[%s378 + $0x1c8] sm:$0xf]
                  %505 = vst [vmem:[%s379 + $0xf8] sm:$0xf] %v504
                  %v506 = vld [vmem:[%s378 + $0x1cc] sm:$0xf]
                  %507 = vst [vmem:[%s379 + $0xfc] sm:$0xf] %v506
                  %v508 = vld [vmem:[%s378 + $0x1d0] sm:$0xf]
                  %509 = vst [vmem:[%s379 + $0x100] sm:$0xf] %v508
                  %v510 = vld [vmem:[%s378 + $0x1d4] sm:$0xf]
                  %511 = vst [vmem:[%s379 + $0x104] sm:$0xf] %v510
                  %v512 = vld [vmem:[%s378 + $0x1d8] sm:$0xf]
                  %513 = vst [vmem:[%s379 + $0x108] sm:$0xf] %v512
                  %v514 = vld [vmem:[%s378 + $0x1dc] sm:$0xf]
                  %515 = vst [vmem:[%s379 + $0x10c] sm:$0xf] %v514
                  %v516 = vld [vmem:[%s378 + $0x1e0] sm:$0xf]
                  %517 = vst [vmem:[%s379 + $0x110] sm:$0xf] %v516
                  %v518 = vld [vmem:[%s378 + $0x1e4] sm:$0xf]
                  %519 = vst [vmem:[%s379 + $0x114] sm:$0xf] %v518
                  %v520 = vld [vmem:[%s378 + $0x1e8] sm:$0xf]
                  %521 = vst [vmem:[%s379 + $0x118] sm:$0xf] %v520
                  %v522 = vld [vmem:[%s378 + $0x1ec] sm:$0xf]
                  %523 = vst [vmem:[%s379 + $0x11c] sm:$0xf] %v522
                  %v524 = vld [vmem:[%s378 + $0x1f0] sm:$0xf]
                  %525 = vst [vmem:[%s379 + $0x120] sm:$0xf] %v524
                  %v526 = vld [vmem:[%s378 + $0x1f4] sm:$0xf]
                  %527 = vst [vmem:[%s379 + $0x124] sm:$0xf] %v526
                  %v528 = vld [vmem:[%s378 + $0x1f8] sm:$0xf]
                  %529 = vst [vmem:[%s379 + $0x128] sm:$0xf] %v528
                  %v530 = vld [vmem:[%s378 + $0x1fc] sm:$0xf]
                  %531 = vst [vmem:[%s379 + $0x12c] sm:$0xf] %v530
                  %v532 = vld [vmem:[%s378 + $0x200] sm:$0xf]
                  %533 = vst [vmem:[%s379 + $0x130] sm:$0xf] %v532
                  %v534 = vld [vmem:[%s378 + $0x204] sm:$0xf]
                  %535 = vst [vmem:[%s379 + $0x134] sm:$0xf] %v534
                  %v536 = vld [vmem:[%s378 + $0x270] sm:$0xf]
                  %537 = vst [vmem:[%s379 + $0x138] sm:$0xf] %v536
                  %v538 = vld [vmem:[%s378 + $0x274] sm:$0xf]
                  %539 = vst [vmem:[%s379 + $0x13c] sm:$0xf] %v538
                  %v540 = vld [vmem:[%s378 + $0x278] sm:$0xf]
                  %541 = vst [vmem:[%s379 + $0x140] sm:$0xf] %v540
                  %v542 = vld [vmem:[%s378 + $0x27c] sm:$0xf]
                  %543 = vst [vmem:[%s379 + $0x144] sm:$0xf] %v542
                  %v544 = vld [vmem:[%s378 + $0x280] sm:$0xf]
                  %545 = vst [vmem:[%s379 + $0x148] sm:$0xf] %v544
                  %v546 = vld [vmem:[%s378 + $0x284] sm:$0xf]
                  %547 = vst [vmem:[%s379 + $0x14c] sm:$0xf] %v546
                  %v548 = vld [vmem:[%s378 + $0x288] sm:$0xf]
                  %549 = vst [vmem:[%s379 + $0x150] sm:$0xf] %v548
                  %v550 = vld [vmem:[%s378 + $0x28c] sm:$0xf]
                  %551 = vst [vmem:[%s379 + $0x154] sm:$0xf] %v550
                  %v552 = vld [vmem:[%s378 + $0x290] sm:$0xf]
                  %553 = vst [vmem:[%s379 + $0x158] sm:$0xf] %v552
                  %v554 = vld [vmem:[%s378 + $0x294] sm:$0xf]
                  %555 = vst [vmem:[%s379 + $0x15c] sm:$0xf] %v554
                  %v556 = vld [vmem:[%s378 + $0x298] sm:$0xf]
                  %557 = vst [vmem:[%s379 + $0x160] sm:$0xf] %v556
                  %v558 = vld [vmem:[%s378 + $0x29c] sm:$0xf]
                  %559 = vst [vmem:[%s379 + $0x164] sm:$0xf] %v558
                  %v560 = vld [vmem:[%s378 + $0x2a0] sm:$0xf]
                  %561 = vst [vmem:[%s379 + $0x168] sm:$0xf] %v560
                  %v562 = vld [vmem:[%s378 + $0x2a4] sm:$0xf]
                  %563 = vst [vmem:[%s379 + $0x16c] sm:$0xf] %v562
                  %v564 = vld [vmem:[%s378 + $0x2a8] sm:$0xf]
                  %565 = vst [vmem:[%s379 + $0x170] sm:$0xf] %v564
                  %v566 = vld [vmem:[%s378 + $0x2ac] sm:$0xf]
                  %567 = vst [vmem:[%s379 + $0x174] sm:$0xf] %v566
                  %v568 = vld [vmem:[%s378 + $0x2b0] sm:$0xf]
                  %569 = vst [vmem:[%s379 + $0x178] sm:$0xf] %v568
                  %v570 = vld [vmem:[%s378 + $0x2b4] sm:$0xf]
                  %571 = vst [vmem:[%s379 + $0x17c] sm:$0xf] %v570
                  %v572 = vld [vmem:[%s378 + $0x2b8] sm:$0xf]
                  %573 = vst [vmem:[%s379 + $0x180] sm:$0xf] %v572
                  %v574 = vld [vmem:[%s378 + $0x2bc] sm:$0xf]
                  %575 = vst [vmem:[%s379 + $0x184] sm:$0xf] %v574
                  %v576 = vld [vmem:[%s378 + $0x2c0] sm:$0xf]
                  %577 = vst [vmem:[%s379 + $0x188] sm:$0xf] %v576
                  %v578 = vld [vmem:[%s378 + $0x2c4] sm:$0xf]
                  %579 = vst [vmem:[%s379 + $0x18c] sm:$0xf] %v578
                  %v580 = vld [vmem:[%s378 + $0x2c8] sm:$0xf]
                  %581 = vst [vmem:[%s379 + $0x190] sm:$0xf] %v580
                  %v582 = vld [vmem:[%s378 + $0x2cc] sm:$0xf]
                  %583 = vst [vmem:[%s379 + $0x194] sm:$0xf] %v582
                  %v584 = vld [vmem:[%s378 + $0x2d0] sm:$0xf]
                  %585 = vst [vmem:[%s379 + $0x198] sm:$0xf] %v584
                  %v586 = vld [vmem:[%s378 + $0x2d4] sm:$0xf]
                  %587 = vst [vmem:[%s379 + $0x19c] sm:$0xf] %v586
                $region63: #{multimodal_forward.3} parent=50 // loop_footer
                  %s377 = sadd.s32 1, %s373
                $region64: #{multimodal_forward.3} parent=50 // loop_footer_branch
                  %372 = sbr.rel target = $region60
                $region65: #{multimodal_forward.3} parent=50 // loop_exit
                  _
              $region51: #{multimodal_forward.3} parent=35 // pred_fallthru
                _
            $region36: #{multimodal_forward.3} parent=31 // pred_fallthru
              _
            // Predicated region
            $region37: #{multimodal_forward.3} parent=31 // pred_check
              _
            $region38: #{multimodal_forward.3} parent=31 // pred_check_branch
              %143 = sbr.rel (0) target = $region40
            $region39: #{multimodal_forward.3} parent=31 // pred_region
              loop: start=0, step=1, limit=1
              $region41: #{multimodal_forward.3} parent=39 // loop_pre_header
                _
              $region42: #{multimodal_forward.3} parent=39 // loop_header
                %s146 = sphi 0, %s150
                %p147 = scmp.ge.s32.totalorder %s146, 1
                %s151 = sphi %s137, %s137
                %s152 = sphi %s134, %s134
              $region43: #{multimodal_forward.3} parent=39 // loop_header_branch
                %149 = sbr.rel (%p147) target = $region47
              $region44: #{multimodal_forward.3} parent=39 // loop_body
                %v153 = vld [vmem:[%s151] sm:$0xf]
                %154 = vst [vmem:[%s152] sm:$0xf] %v153
                %v155 = vld [vmem:[%s151 + $0x4] sm:$0xf]
                %156 = vst [vmem:[%s152 + $0x4] sm:$0xf] %v155
                %v157 = vld [vmem:[%s151 + $0x8] sm:$0xf]
                %158 = vst [vmem:[%s152 + $0x8] sm:$0xf] %v157
                %v159 = vld [vmem:[%s151 + $0xc] sm:$0xf]
                %160 = vst [vmem:[%s152 + $0xc] sm:$0xf] %v159
                %v161 = vld [vmem:[%s151 + $0x10] sm:$0xf]
                %162 = vst [vmem:[%s152 + $0x10] sm:$0xf] %v161
                %v163 = vld [vmem:[%s151 + $0x14] sm:$0xf]
                %164 = vst [vmem:[%s152 + $0x14] sm:$0xf] %v163
                %v165 = vld [vmem:[%s151 + $0x18] sm:$0xf]
                %166 = vst [vmem:[%s152 + $0x18] sm:$0xf] %v165
                %v167 = vld [vmem:[%s151 + $0x1c] sm:$0xf]
                %168 = vst [vmem:[%s152 + $0x1c] sm:$0xf] %v167
                %v169 = vld [vmem:[%s151 + $0x20] sm:$0xf]
                %170 = vst [vmem:[%s152 + $0x20] sm:$0xf] %v169
                %v171 = vld [vmem:[%s151 + $0x24] sm:$0xf]
                %172 = vst [vmem:[%s152 + $0x24] sm:$0xf] %v171
                %v173 = vld [vmem:[%s151 + $0x28] sm:$0xf]
                %174 = vst [vmem:[%s152 + $0x28] sm:$0xf] %v173
                %v175 = vld [vmem:[%s151 + $0x2c] sm:$0xf]
                %176 = vst [vmem:[%s152 + $0x2c] sm:$0xf] %v175
                %v177 = vld [vmem:[%s151 + $0x30] sm:$0xf]
                %178 = vst [vmem:[%s152 + $0x30] sm:$0xf] %v177
                %v179 = vld [vmem:[%s151 + $0x34] sm:$0xf]
                %180 = vst [vmem:[%s152 + $0x34] sm:$0xf] %v179
                %v181 = vld [vmem:[%s151 + $0x38] sm:$0xf]
                %182 = vst [vmem:[%s152 + $0x38] sm:$0xf] %v181
                %v183 = vld [vmem:[%s151 + $0x3c] sm:$0xf]
                %184 = vst [vmem:[%s152 + $0x3c] sm:$0xf] %v183
                %v185 = vld [vmem:[%s151 + $0x40] sm:$0xf]
                %186 = vst [vmem:[%s152 + $0x40] sm:$0xf] %v185
                %v187 = vld [vmem:[%s151 + $0x44] sm:$0xf]
                %188 = vst [vmem:[%s152 + $0x44] sm:$0xf] %v187
                %v189 = vld [vmem:[%s151 + $0x48] sm:$0xf]
                %190 = vst [vmem:[%s152 + $0x48] sm:$0xf] %v189
                %v191 = vld [vmem:[%s151 + $0x4c] sm:$0xf]
                %192 = vst [vmem:[%s152 + $0x4c] sm:$0xf] %v191
                %v193 = vld [vmem:[%s151 + $0x50] sm:$0xf]
                %194 = vst [vmem:[%s152 + $0x50] sm:$0xf] %v193
                %v195 = vld [vmem:[%s151 + $0x54] sm:$0xf]
                %196 = vst [vmem:[%s152 + $0x54] sm:$0xf] %v195
                %v197 = vld [vmem:[%s151 + $0x58] sm:$0xf]
                %198 = vst [vmem:[%s152 + $0x58] sm:$0xf] %v197
                %v199 = vld [vmem:[%s151 + $0x5c] sm:$0xf]
                %200 = vst [vmem:[%s152 + $0x5c] sm:$0xf] %v199
                %v201 = vld [vmem:[%s151 + $0x60] sm:$0xf]
                %202 = vst [vmem:[%s152 + $0x60] sm:$0xf] %v201
                %v203 = vld [vmem:[%s151 + $0x64] sm:$0xf]
                %204 = vst [vmem:[%s152 + $0x64] sm:$0xf] %v203
                %v205 = vld [vmem:[%s151 + $0xd0] sm:$0xf]
                %206 = vst [vmem:[%s152 + $0x68] sm:$0xf] %v205
                %v207 = vld [vmem:[%s151 + $0xd4] sm:$0xf]
                %208 = vst [vmem:[%s152 + $0x6c] sm:$0xf] %v207
                %v209 = vld [vmem:[%s151 + $0xd8] sm:$0xf]
                %210 = vst [vmem:[%s152 + $0x70] sm:$0xf] %v209
                %v211 = vld [vmem:[%s151 + $0xdc] sm:$0xf]
                %212 = vst [vmem:[%s152 + $0x74] sm:$0xf] %v211
                %v213 = vld [vmem:[%s151 + $0xe0] sm:$0xf]
                %214 = vst [vmem:[%s152 + $0x78] sm:$0xf] %v213
                %v215 = vld [vmem:[%s151 + $0xe4] sm:$0xf]
                %216 = vst [vmem:[%s152 + $0x7c] sm:$0xf] %v215
                %v217 = vld [vmem:[%s151 + $0xe8] sm:$0xf]
                %218 = vst [vmem:[%s152 + $0x80] sm:$0xf] %v217
                %v219 = vld [vmem:[%s151 + $0xec] sm:$0xf]
                %220 = vst [vmem:[%s152 + $0x84] sm:$0xf] %v219
                %v221 = vld [vmem:[%s151 + $0xf0] sm:$0xf]
                %222 = vst [vmem:[%s152 + $0x88] sm:$0xf] %v221
                %v223 = vld [vmem:[%s151 + $0xf4] sm:$0xf]
                %224 = vst [vmem:[%s152 + $0x8c] sm:$0xf] %v223
                %v225 = vld [vmem:[%s151 + $0xf8] sm:$0xf]
                %226 = vst [vmem:[%s152 + $0x90] sm:$0xf] %v225
                %v227 = vld [vmem:[%s151 + $0xfc] sm:$0xf]
                %228 = vst [vmem:[%s152 + $0x94] sm:$0xf] %v227
                %v229 = vld [vmem:[%s151 + $0x100] sm:$0xf]
                %230 = vst [vmem:[%s152 + $0x98] sm:$0xf] %v229
                %v231 = vld [vmem:[%s151 + $0x104] sm:$0xf]
                %232 = vst [vmem:[%s152 + $0x9c] sm:$0xf] %v231
                %v233 = vld [vmem:[%s151 + $0x108] sm:$0xf]
                %234 = vst [vmem:[%s152 + $0xa0] sm:$0xf] %v233
                %v235 = vld [vmem:[%s151 + $0x10c] sm:$0xf]
                %236 = vst [vmem:[%s152 + $0xa4] sm:$0xf] %v235
                %v237 = vld [vmem:[%s151 + $0x110] sm:$0xf]
                %238 = vst [vmem:[%s152 + $0xa8] sm:$0xf] %v237
                %v239 = vld [vmem:[%s151 + $0x114] sm:$0xf]
                %240 = vst [vmem:[%s152 + $0xac] sm:$0xf] %v239
                %v241 = vld [vmem:[%s151 + $0x118] sm:$0xf]
                %242 = vst [vmem:[%s152 + $0xb0] sm:$0xf] %v241
                %v243 = vld [vmem:[%s151 + $0x11c] sm:$0xf]
                %244 = vst [vmem:[%s152 + $0xb4] sm:$0xf] %v243
                %v245 = vld [vmem:[%s151 + $0x120] sm:$0xf]
                %246 = vst [vmem:[%s152 + $0xb8] sm:$0xf] %v245
                %v247 = vld [vmem:[%s151 + $0x124] sm:$0xf]
                %248 = vst [vmem:[%s152 + $0xbc] sm:$0xf] %v247
                %v249 = vld [vmem:[%s151 + $0x128] sm:$0xf]
                %250 = vst [vmem:[%s152 + $0xc0] sm:$0xf] %v249
                %v251 = vld [vmem:[%s151 + $0x12c] sm:$0xf]
                %252 = vst [vmem:[%s152 + $0xc4] sm:$0xf] %v251
                %v253 = vld [vmem:[%s151 + $0x130] sm:$0xf]
                %254 = vst [vmem:[%s152 + $0xc8] sm:$0xf] %v253
                %v255 = vld [vmem:[%s151 + $0x134] sm:$0xf]
                %256 = vst [vmem:[%s152 + $0xcc] sm:$0xf] %v255
                %v257 = vld [vmem:[%s151 + $0x1a0] sm:$0xf]
                %258 = vst [vmem:[%s152 + $0xd0] sm:$0xf] %v257
                %v259 = vld [vmem:[%s151 + $0x1a4] sm:$0xf]
                %260 = vst [vmem:[%s152 + $0xd4] sm:$0xf] %v259
                %v261 = vld [vmem:[%s151 + $0x1a8] sm:$0xf]
                %262 = vst [vmem:[%s152 + $0xd8] sm:$0xf] %v261
                %v263 = vld [vmem:[%s151 + $0x1ac] sm:$0xf]
                %264 = vst [vmem:[%s152 + $0xdc] sm:$0xf] %v263
                %v265 = vld [vmem:[%s151 + $0x1b0] sm:$0xf]
                %266 = vst [vmem:[%s152 + $0xe0] sm:$0xf] %v265
                %v267 = vld [vmem:[%s151 + $0x1b4] sm:$0xf]
                %268 = vst [vmem:[%s152 + $0xe4] sm:$0xf] %v267
                %v269 = vld [vmem:[%s151 + $0x1b8] sm:$0xf]
                %270 = vst [vmem:[%s152 + $0xe8] sm:$0xf] %v269
                %v271 = vld [vmem:[%s151 + $0x1bc] sm:$0xf]
                %272 = vst [vmem:[%s152 + $0xec] sm:$0xf] %v271
                %v273 = vld [vmem:[%s151 + $0x1c0] sm:$0xf]
                %274 = vst [vmem:[%s152 + $0xf0] sm:$0xf] %v273
                %v275 = vld [vmem:[%s151 + $0x1c4] sm:$0xf]
                %276 = vst [vmem:[%s152 + $0xf4] sm:$0xf] %v275
                %v277 = vld [vmem:[%s151 + $0x1c8] sm:$0xf]
                %278 = vst [vmem:[%s152 + $0xf8] sm:$0xf] %v277
                %v279 = vld [vmem:[%s151 + $0x1cc] sm:$0xf]
                %280 = vst [vmem:[%s152 + $0xfc] sm:$0xf] %v279
                %v281 = vld [vmem:[%s151 + $0x1d0] sm:$0xf]
                %282 = vst [vmem:[%s152 + $0x100] sm:$0xf] %v281
                %v283 = vld [vmem:[%s151 + $0x1d4] sm:$0xf]
                %284 = vst [vmem:[%s152 + $0x104] sm:$0xf] %v283
                %v285 = vld [vmem:[%s151 + $0x1d8] sm:$0xf]
                %286 = vst [vmem:[%s152 + $0x108] sm:$0xf] %v285
                %v287 = vld [vmem:[%s151 + $0x1dc] sm:$0xf]
                %288 = vst [vmem:[%s152 + $0x10c] sm:$0xf] %v287
                %v289 = vld [vmem:[%s151 + $0x1e0] sm:$0xf]
                %290 = vst [vmem:[%s152 + $0x110] sm:$0xf] %v289
                %v291 = vld [vmem:[%s151 + $0x1e4] sm:$0xf]
                %292 = vst [vmem:[%s152 + $0x114] sm:$0xf] %v291
                %v293 = vld [vmem:[%s151 + $0x1e8] sm:$0xf]
                %294 = vst [vmem:[%s152 + $0x118] sm:$0xf] %v293
                %v295 = vld [vmem:[%s151 + $0x1ec] sm:$0xf]
                %296 = vst [vmem:[%s152 + $0x11c] sm:$0xf] %v295
                %v297 = vld [vmem:[%s151 + $0x1f0] sm:$0xf]
                %298 = vst [vmem:[%s152 + $0x120] sm:$0xf] %v297
                %v299 = vld [vmem:[%s151 + $0x1f4] sm:$0xf]
                %300 = vst [vmem:[%s152 + $0x124] sm:$0xf] %v299
                %v301 = vld [vmem:[%s151 + $0x1f8] sm:$0xf]
                %302 = vst [vmem:[%s152 + $0x128] sm:$0xf] %v301
                %v303 = vld [vmem:[%s151 + $0x1fc] sm:$0xf]
                %304 = vst [vmem:[%s152 + $0x12c] sm:$0xf] %v303
                %v305 = vld [vmem:[%s151 + $0x200] sm:$0xf]
                %306 = vst [vmem:[%s152 + $0x130] sm:$0xf] %v305
                %v307 = vld [vmem:[%s151 + $0x204] sm:$0xf]
                %308 = vst [vmem:[%s152 + $0x134] sm:$0xf] %v307
                %v309 = vld [vmem:[%s151 + $0x270] sm:$0xf]
                %310 = vst [vmem:[%s152 + $0x138] sm:$0xf] %v309
                %v311 = vld [vmem:[%s151 + $0x274] sm:$0xf]
                %312 = vst [vmem:[%s152 + $0x13c] sm:$0xf] %v311
                %v313 = vld [vmem:[%s151 + $0x278] sm:$0xf]
                %314 = vst [vmem:[%s152 + $0x140] sm:$0xf] %v313
                %v315 = vld [vmem:[%s151 + $0x27c] sm:$0xf]
                %316 = vst [vmem:[%s152 + $0x144] sm:$0xf] %v315
                %v317 = vld [vmem:[%s151 + $0x280] sm:$0xf]
                %318 = vst [vmem:[%s152 + $0x148] sm:$0xf] %v317
                %v319 = vld [vmem:[%s151 + $0x284] sm:$0xf]
                %320 = vst [vmem:[%s152 + $0x14c] sm:$0xf] %v319
                %v321 = vld [vmem:[%s151 + $0x288] sm:$0xf]
                %322 = vst [vmem:[%s152 + $0x150] sm:$0xf] %v321
                %v323 = vld [vmem:[%s151 + $0x28c] sm:$0xf]
                %324 = vst [vmem:[%s152 + $0x154] sm:$0xf] %v323
                %v325 = vld [vmem:[%s151 + $0x290] sm:$0xf]
                %326 = vst [vmem:[%s152 + $0x158] sm:$0xf] %v325
                %v327 = vld [vmem:[%s151 + $0x294] sm:$0xf]
                %328 = vst [vmem:[%s152 + $0x15c] sm:$0xf] %v327
                %v329 = vld [vmem:[%s151 + $0x298] sm:$0xf]
                %330 = vst [vmem:[%s152 + $0x160] sm:$0xf] %v329
                %v331 = vld [vmem:[%s151 + $0x29c] sm:$0xf]
                %332 = vst [vmem:[%s152 + $0x164] sm:$0xf] %v331
                %v333 = vld [vmem:[%s151 + $0x2a0] sm:$0xf]
                %334 = vst [vmem:[%s152 + $0x168] sm:$0xf] %v333
                %v335 = vld [vmem:[%s151 + $0x2a4] sm:$0xf]
                %336 = vst [vmem:[%s152 + $0x16c] sm:$0xf] %v335
                %v337 = vld [vmem:[%s151 + $0x2a8] sm:$0xf]
                %338 = vst [vmem:[%s152 + $0x170] sm:$0xf] %v337
                %v339 = vld [vmem:[%s151 + $0x2ac] sm:$0xf]
                %340 = vst [vmem:[%s152 + $0x174] sm:$0xf] %v339
                %v341 = vld [vmem:[%s151 + $0x2b0] sm:$0xf]
                %342 = vst [vmem:[%s152 + $0x178] sm:$0xf] %v341
                %v343 = vld [vmem:[%s151 + $0x2b4] sm:$0xf]
                %344 = vst [vmem:[%s152 + $0x17c] sm:$0xf] %v343
                %v345 = vld [vmem:[%s151 + $0x2b8] sm:$0xf]
                %346 = vst [vmem:[%s152 + $0x180] sm:$0xf] %v345
                %v347 = vld [vmem:[%s151 + $0x2bc] sm:$0xf]
                %348 = vst [vmem:[%s152 + $0x184] sm:$0xf] %v347
                %v349 = vld [vmem:[%s151 + $0x2c0] sm:$0xf]
                %350 = vst [vmem:[%s152 + $0x188] sm:$0xf] %v349
                %v351 = vld [vmem:[%s151 + $0x2c4] sm:$0xf]
                %352 = vst [vmem:[%s152 + $0x18c] sm:$0xf] %v351
                %v353 = vld [vmem:[%s151 + $0x2c8] sm:$0xf]
                %354 = vst [vmem:[%s152 + $0x190] sm:$0xf] %v353
                %v355 = vld [vmem:[%s151 + $0x2cc] sm:$0xf]
                %356 = vst [vmem:[%s152 + $0x194] sm:$0xf] %v355
                %v357 = vld [vmem:[%s151 + $0x2d0] sm:$0xf]
                %358 = vst [vmem:[%s152 + $0x198] sm:$0xf] %v357
                %v359 = vld [vmem:[%s151 + $0x2d4] sm:$0xf]
                %360 = vst [vmem:[%s152 + $0x19c] sm:$0xf] %v359
              $region45: #{multimodal_forward.3} parent=39 // loop_footer
                %s150 = sadd.s32 1, %s146
              $region46: #{multimodal_forward.3} parent=39 // loop_footer_branch
                %145 = sbr.rel target = $region42
              $region47: #{multimodal_forward.3} parent=39 // loop_exit
                _
            $region40: #{multimodal_forward.3} parent=31 // pred_fallthru
              _
          $region32: #{multimodal_forward.3} parent=27 // pred_fallthru
            _
          %588 = vnop
        $region28: #{multimodal_forward.3} parent=23 // pred_fallthru
          _
      $region24: #{multimodal_forward.3} parent=5 // pred_fallthru
        _
      %p589 = scmp.le.s32.totalorder 1, %s9
      %p590 = scmp.lt.s32.totalorder %s9, 3
      %p591 = pnand %p589, %p590
      %p592 = pneg %p591
      // Predicated region
      $region66: #{multimodal_forward.3} parent=5 // pred_check
        _
      $region67: #{multimodal_forward.3} parent=5 // pred_check_branch
        %594 = sbr.rel (%p591) target = $region69
      $region68: #{multimodal_forward.3} parent=5 // pred_region
        %s595 = ssub.s32 %s9, 1
        %s596 = sand.u32 %s22, 1
        %s597 = sand.u32 %s22, 1
        %s598 = smul.addr %s597, 416
        %s599 = scalar_lea.vmem [#allocation2], %s598
        // Predicated region
        $region70: #{multimodal_forward.3} parent=68 // pred_check
          %p600 = pneg %p35
        $region71: #{multimodal_forward.3} parent=68 // pred_check_branch
          %602 = sbr.rel (%p600) target = $region73
        $region72: #{multimodal_forward.3} parent=68 // pred_region
          _
        $region73: #{multimodal_forward.3} parent=68 // pred_fallthru
          _
        %s603 = sand.u32 %s22, 1
        %s604 = sand.u32 %s22, 1
        %s605 = smul.addr %s604, 416
        %s606 = scalar_lea.vmem [#allocation2], %s605
        %p607 = pneg %p35
        %p608 = pneg %p32
        %p609 = pneg %p56
        %p610 = pneg %p53
        %p611 = pneg %p77
        %p612 = pneg %p74
        %p613 = pneg %p103
        %p614 = pneg %p100
        %s615 = smul.u32 26, %s14
        %p616 = scmp.lt.s32.totalorder %s615, 51
        %s617 = scalar_select %p616, %s615, 51
        %s618 = smul.addr %s617, 4
        %s619 = scalar_lea.vmem %s3, %s618
        %s620 = smul.u32 26, %s14
        %s621 = smul.u32 26, %s14
        %p622 = scmp.lt.s32.totalorder %s621, 51
        %s623 = scalar_select %p622, %s621, 51
        %s624 = smul.addr %s623, 4
        %s625 = scalar_lea.vmem %s3, %s624
        %s626 = smul.u32 26, %s14
        %v628 = vld [vmem:[%s599] sm:$0xf]
        %v629 = vld [vmem:[%s599 + $0x4] sm:$0xf]
        %v630 = vld [vmem:[%s599 + $0x8] sm:$0xf]
        %v631 = vld [vmem:[%s599 + $0xc] sm:$0xf]
        %v632 = vld [vmem:[%s599 + $0x10] sm:$0xf]
        %v633 = vld [vmem:[%s599 + $0x14] sm:$0xf]
        %v634 = vld [vmem:[%s599 + $0x18] sm:$0xf]
        %v635 = vld [vmem:[%s599 + $0x1c] sm:$0xf]
        %v636 = vld [vmem:[%s599 + $0x20] sm:$0xf]
        %v637 = vld [vmem:[%s599 + $0x24] sm:$0xf]
        %v638 = vld [vmem:[%s599 + $0x28] sm:$0xf]
        %v639 = vld [vmem:[%s599 + $0x2c] sm:$0xf]
        %v640 = vld [vmem:[%s599 + $0x30] sm:$0xf]
        %v641 = vld [vmem:[%s599 + $0x34] sm:$0xf]
        %v642 = vld [vmem:[%s599 + $0x38] sm:$0xf]
        %v643 = vld [vmem:[%s599 + $0x3c] sm:$0xf]
        %v644 = vld [vmem:[%s599 + $0x40] sm:$0xf]
        %v645 = vld [vmem:[%s599 + $0x44] sm:$0xf]
        %v646 = vld [vmem:[%s599 + $0x48] sm:$0xf]
        %v647 = vld [vmem:[%s599 + $0x4c] sm:$0xf]
        %v648 = vld [vmem:[%s599 + $0x50] sm:$0xf]
        %v649 = vld [vmem:[%s599 + $0x54] sm:$0xf]
        %v650 = vld [vmem:[%s599 + $0x58] sm:$0xf]
        %v651 = vld [vmem:[%s599 + $0x5c] sm:$0xf]
        %v652 = vld [vmem:[%s599 + $0x60] sm:$0xf]
        %v653 = vld [vmem:[%s599 + $0x64] sm:$0xf]
        %v654 = vld [vmem:[%s599 + $0x68] sm:$0xf]
        %v655 = vld [vmem:[%s599 + $0x6c] sm:$0xf]
        %v656 = vld [vmem:[%s599 + $0x70] sm:$0xf]
        %v657 = vld [vmem:[%s599 + $0x74] sm:$0xf]
        %v658 = vld [vmem:[%s599 + $0x78] sm:$0xf]
        %v659 = vld [vmem:[%s599 + $0x7c] sm:$0xf]
        %v660 = vld [vmem:[%s599 + $0x80] sm:$0xf]
        %v661 = vld [vmem:[%s599 + $0x84] sm:$0xf]
        %v662 = vld [vmem:[%s599 + $0x88] sm:$0xf]
        %v663 = vld [vmem:[%s599 + $0x8c] sm:$0xf]
        %v664 = vld [vmem:[%s599 + $0x90] sm:$0xf]
        %v665 = vld [vmem:[%s599 + $0x94] sm:$0xf]
        %v666 = vld [vmem:[%s599 + $0x98] sm:$0xf]
        %v667 = vld [vmem:[%s599 + $0x9c] sm:$0xf]
        %v668 = vld [vmem:[%s599 + $0xa0] sm:$0xf]
        %v669 = vld [vmem:[%s599 + $0xa4] sm:$0xf]
        %v670 = vld [vmem:[%s599 + $0xa8] sm:$0xf]
        %v671 = vld [vmem:[%s599 + $0xac] sm:$0xf]
        %v672 = vld [vmem:[%s599 + $0xb0] sm:$0xf]
        %v673 = vld [vmem:[%s599 + $0xb4] sm:$0xf]
        %v674 = vld [vmem:[%s599 + $0xb8] sm:$0xf]
        %v675 = vld [vmem:[%s599 + $0xbc] sm:$0xf]
        %v676 = vld [vmem:[%s599 + $0xc0] sm:$0xf]
        %v677 = vld [vmem:[%s599 + $0xc4] sm:$0xf]
        %v678 = vld [vmem:[%s599 + $0xc8] sm:$0xf]
        %v679 = vld [vmem:[%s599 + $0xcc] sm:$0xf]
        %v680 = vld [vmem:[%s599 + $0xd0] sm:$0xf]
        %v681 = vld [vmem:[%s599 + $0xd4] sm:$0xf]
        %v682 = vld [vmem:[%s599 + $0xd8] sm:$0xf]
        %v683 = vld [vmem:[%s599 + $0xdc] sm:$0xf]
        %v684 = vld [vmem:[%s599 + $0xe0] sm:$0xf]
        %v685 = vld [vmem:[%s599 + $0xe4] sm:$0xf]
        %v686 = vld [vmem:[%s599 + $0xe8] sm:$0xf]
        %v687 = vld [vmem:[%s599 + $0xec] sm:$0xf]
        %v688 = vld [vmem:[%s599 + $0xf0] sm:$0xf]
        %v689 = vld [vmem:[%s599 + $0xf4] sm:$0xf]
        %v690 = vld [vmem:[%s599 + $0xf8] sm:$0xf]
        %v691 = vld [vmem:[%s599 + $0xfc] sm:$0xf]
        %v692 = vld [vmem:[%s599 + $0x100] sm:$0xf]
        %v693 = vld [vmem:[%s599 + $0x104] sm:$0xf]
        %v694 = vld [vmem:[%s599 + $0x108] sm:$0xf]
        %v695 = vld [vmem:[%s599 + $0x10c] sm:$0xf]
        %v696 = vld [vmem:[%s599 + $0x110] sm:$0xf]
        %v697 = vld [vmem:[%s599 + $0x114] sm:$0xf]
        %v698 = vld [vmem:[%s599 + $0x118] sm:$0xf]
        %v699 = vld [vmem:[%s599 + $0x11c] sm:$0xf]
        %v700 = vld [vmem:[%s599 + $0x120] sm:$0xf]
        %v701 = vld [vmem:[%s599 + $0x124] sm:$0xf]
        %v702 = vld [vmem:[%s599 + $0x128] sm:$0xf]
        %v703 = vld [vmem:[%s599 + $0x12c] sm:$0xf]
        %v704 = vld [vmem:[%s599 + $0x130] sm:$0xf]
        %v705 = vld [vmem:[%s599 + $0x134] sm:$0xf]
        %v706 = vld [vmem:[%s599 + $0x138] sm:$0xf]
        %v707 = vld [vmem:[%s599 + $0x13c] sm:$0xf]
        %v708 = vld [vmem:[%s599 + $0x140] sm:$0xf]
        %v709 = vld [vmem:[%s599 + $0x144] sm:$0xf]
        %v710 = vld [vmem:[%s599 + $0x148] sm:$0xf]
        %v711 = vld [vmem:[%s599 + $0x14c] sm:$0xf]
        %v712 = vld [vmem:[%s599 + $0x150] sm:$0xf]
        %v713 = vld [vmem:[%s599 + $0x154] sm:$0xf]
        %v714 = vld [vmem:[%s599 + $0x158] sm:$0xf]
        %v715 = vld [vmem:[%s599 + $0x15c] sm:$0xf]
        %v716 = vld [vmem:[%s599 + $0x160] sm:$0xf]
        %v717 = vld [vmem:[%s599 + $0x164] sm:$0xf]
        %v718 = vld [vmem:[%s599 + $0x168] sm:$0xf]
        %v719 = vld [vmem:[%s599 + $0x16c] sm:$0xf]
        %v720 = vld [vmem:[%s599 + $0x170] sm:$0xf]
        %v721 = vld [vmem:[%s599 + $0x174] sm:$0xf]
        %v722 = vld [vmem:[%s599 + $0x178] sm:$0xf]
        %v723 = vld [vmem:[%s599 + $0x17c] sm:$0xf]
        %v724 = vld [vmem:[%s599 + $0x180] sm:$0xf]
        %v725 = vld [vmem:[%s599 + $0x184] sm:$0xf]
        %v726 = vld [vmem:[%s599 + $0x188] sm:$0xf]
        %v727 = vld [vmem:[%s599 + $0x18c] sm:$0xf]
        %v728 = vld [vmem:[%s599 + $0x190] sm:$0xf]
        %v729 = vld [vmem:[%s599 + $0x194] sm:$0xf]
        %v730 = vld [vmem:[%s599 + $0x198] sm:$0xf]
        %v731 = vld [vmem:[%s599 + $0x19c] sm:$0xf]
        %v732 = vld [vmem:[%s1] sm:$0xf]
        %v733 = vld [vmem:[%s1 + $0x4] sm:$0x1]
        %v838 = vunpack.c.l.b16 %v628
        %v839 = vunpack.c.l.b16 %v629
        %v840 = vunpack.c.l.b16 %v630
        %v841 = vunpack.c.l.b16 %v631
        %v842 = vunpack.c.l.b16 %v632
        %v843 = vunpack.c.l.b16 %v633
        %v844 = vunpack.c.l.b16 %v634
        %v845 = vunpack.c.l.b16 %v635
        %v846 = vunpack.c.l.b16 %v636
        %v847 = vunpack.c.l.b16 %v637
        %v848 = vunpack.c.l.b16 %v638
        %v849 = vunpack.c.l.b16 %v639
        %v850 = vunpack.c.l.b16 %v640
        %v851 = vunpack.c.l.b16 %v641
        %v852 = vunpack.c.l.b16 %v642
        %v853 = vunpack.c.l.b16 %v643
        %v854 = vunpack.c.l.b16 %v644
        %v855 = vunpack.c.l.b16 %v645
        %v856 = vunpack.c.l.b16 %v646
        %v857 = vunpack.c.l.b16 %v647
        %v858 = vunpack.c.l.b16 %v648
        %v859 = vunpack.c.l.b16 %v649
        %v860 = vunpack.c.l.b16 %v650
        %v861 = vunpack.c.l.b16 %v651
        %v862 = vunpack.c.l.b16 %v652
        %v863 = vunpack.c.l.b16 %v653
        %v864 = vunpack.c.l.b16 %v654
        %v865 = vunpack.c.l.b16 %v655
        %v866 = vunpack.c.l.b16 %v656
        %v867 = vunpack.c.l.b16 %v657
        %v868 = vunpack.c.l.b16 %v658
        %v869 = vunpack.c.l.b16 %v659
        %v870 = vunpack.c.l.b16 %v660
        %v871 = vunpack.c.l.b16 %v661
        %v872 = vunpack.c.l.b16 %v662
        %v873 = vunpack.c.l.b16 %v663
        %v874 = vunpack.c.l.b16 %v664
        %v875 = vunpack.c.l.b16 %v665
        %v876 = vunpack.c.l.b16 %v666
        %v877 = vunpack.c.l.b16 %v667
        %v878 = vunpack.c.l.b16 %v668
        %v879 = vunpack.c.l.b16 %v669
        %v880 = vunpack.c.l.b16 %v670
        %v881 = vunpack.c.l.b16 %v671
        %v882 = vunpack.c.l.b16 %v672
        %v883 = vunpack.c.l.b16 %v673
        %v884 = vunpack.c.l.b16 %v674
        %v885 = vunpack.c.l.b16 %v675
        %v886 = vunpack.c.l.b16 %v676
        %v887 = vunpack.c.l.b16 %v677
        %v888 = vunpack.c.l.b16 %v678
        %v889 = vunpack.c.l.b16 %v679
        %v890 = vunpack.c.l.b16 %v680
        %v891 = vunpack.c.l.b16 %v681
        %v892 = vunpack.c.l.b16 %v682
        %v893 = vunpack.c.l.b16 %v683
        %v894 = vunpack.c.l.b16 %v684
        %v895 = vunpack.c.l.b16 %v685
        %v896 = vunpack.c.l.b16 %v686
        %v897 = vunpack.c.l.b16 %v687
        %v898 = vunpack.c.l.b16 %v688
        %v899 = vunpack.c.l.b16 %v689
        %v900 = vunpack.c.l.b16 %v690
        %v901 = vunpack.c.l.b16 %v691
        %v902 = vunpack.c.l.b16 %v692
        %v903 = vunpack.c.l.b16 %v693
        %v904 = vunpack.c.l.b16 %v694
        %v905 = vunpack.c.l.b16 %v695
        %v906 = vunpack.c.l.b16 %v696
        %v907 = vunpack.c.l.b16 %v697
        %v908 = vunpack.c.l.b16 %v698
        %v909 = vunpack.c.l.b16 %v699
        %v910 = vunpack.c.l.b16 %v700
        %v911 = vunpack.c.l.b16 %v701
        %v912 = vunpack.c.l.b16 %v702
        %v913 = vunpack.c.l.b16 %v703
        %v914 = vunpack.c.l.b16 %v704
        %v915 = vunpack.c.l.b16 %v705
        %v916 = vunpack.c.l.b16 %v706
        %v917 = vunpack.c.l.b16 %v707
        %v918 = vunpack.c.l.b16 %v708
        %v919 = vunpack.c.l.b16 %v709
        %v920 = vunpack.c.l.b16 %v710
        %v921 = vunpack.c.l.b16 %v711
        %v922 = vunpack.c.l.b16 %v712
        %v923 = vunpack.c.l.b16 %v713
        %v924 = vunpack.c.l.b16 %v714
        %v925 = vunpack.c.l.b16 %v715
        %v926 = vunpack.c.l.b16 %v716
        %v927 = vunpack.c.l.b16 %v717
        %v928 = vunpack.c.l.b16 %v718
        %v929 = vunpack.c.l.b16 %v719
        %v930 = vunpack.c.l.b16 %v720
        %v931 = vunpack.c.l.b16 %v721
        %v932 = vunpack.c.l.b16 %v722
        %v933 = vunpack.c.l.b16 %v723
        %v934 = vunpack.c.l.b16 %v724
        %v935 = vunpack.c.l.b16 %v725
        %v936 = vunpack.c.l.b16 %v726
        %v937 = vunpack.c.l.b16 %v727
        %v938 = vunpack.c.l.b16 %v728
        %v939 = vunpack.c.l.b16 %v729
        %v940 = vunpack.c.l.b16 %v730
        %v941 = vunpack.c.l.b16 %v731
        %v942 = vpack.c.b16 %v839, %v838
        %v943 = vpack.c.b16 %v841, %v840
        %v944 = vpack.c.b16 %v843, %v842
        %v945 = vpack.c.b16 %v845, %v844
        %v946 = vpack.c.b16 %v847, %v846
        %v947 = vpack.c.b16 %v849, %v848
        %v948 = vpack.c.b16 %v851, %v850
        %v949 = vpack.c.b16 %v853, %v852
        %v950 = vpack.c.b16 %v855, %v854
        %v951 = vpack.c.b16 %v857, %v856
        %v952 = vpack.c.b16 %v859, %v858
        %v953 = vpack.c.b16 %v861, %v860
        %v954 = vpack.c.b16 %v863, %v862
        %v955 = vpack.c.b16 %v865, %v864
        %v956 = vpack.c.b16 %v867, %v866
        %v957 = vpack.c.b16 %v869, %v868
        %v958 = vpack.c.b16 %v871, %v870
        %v959 = vpack.c.b16 %v873, %v872
        %v960 = vpack.c.b16 %v875, %v874
        %v961 = vpack.c.b16 %v877, %v876
        %v962 = vpack.c.b16 %v879, %v878
        %v963 = vpack.c.b16 %v881, %v880
        %v964 = vpack.c.b16 %v883, %v882
        %v965 = vpack.c.b16 %v885, %v884
        %v966 = vpack.c.b16 %v887, %v886
        %v967 = vpack.c.b16 %v889, %v888
        %v968 = vpack.c.b16 %v891, %v890
        %v969 = vpack.c.b16 %v893, %v892
        %v970 = vpack.c.b16 %v895, %v894
        %v971 = vpack.c.b16 %v897, %v896
        %v972 = vpack.c.b16 %v899, %v898
        %v973 = vpack.c.b16 %v901, %v900
        %v974 = vpack.c.b16 %v903, %v902
        %v975 = vpack.c.b16 %v905, %v904
        %v976 = vpack.c.b16 %v907, %v906
        %v977 = vpack.c.b16 %v909, %v908
        %v978 = vpack.c.b16 %v911, %v910
        %v979 = vpack.c.b16 %v913, %v912
        %v980 = vpack.c.b16 %v915, %v914
        %v981 = vpack.c.b16 %v917, %v916
        %v982 = vpack.c.b16 %v919, %v918
        %v983 = vpack.c.b16 %v921, %v920
        %v984 = vpack.c.b16 %v923, %v922
        %v985 = vpack.c.b16 %v925, %v924
        %v986 = vpack.c.b16 %v927, %v926
        %v987 = vpack.c.b16 %v929, %v928
        %v988 = vpack.c.b16 %v931, %v930
        %v989 = vpack.c.b16 %v933, %v932
        %v990 = vpack.c.b16 %v935, %v934
        %v991 = vpack.c.b16 %v937, %v936
        %v992 = vpack.c.b16 %v939, %v938
        %v993 = vpack.c.b16 %v941, %v940
        %v996 = vunpack.c.l.b16 %v732
        %v997 = vunpack.c.l.b16 %v733
        %v998 = vpack.c.b16 %v997, %v996
        %vm999 = vcmask 72704
        %v1001 = vsel %vm999, %v942, 0
        %v1004 = vsel %vm999, %v943, 0
        %v1007 = vsel %vm999, %v944, 0
        %v1010 = vsel %vm999, %v945, 0
        %v1013 = vsel %vm999, %v946, 0
        %v1016 = vsel %vm999, %v947, 0
        %v1019 = vsel %vm999, %v948, 0
        %v1022 = vsel %vm999, %v949, 0
        %v1025 = vsel %vm999, %v950, 0
        %v1028 = vsel %vm999, %v951, 0
        %v1031 = vsel %vm999, %v952, 0
        %v1034 = vsel %vm999, %v953, 0
        %v1037 = vsel %vm999, %v954, 0
        %v1040 = vsel %vm999, %v955, 0
        %v1043 = vsel %vm999, %v956, 0
        %v1046 = vsel %vm999, %v957, 0
        %v1049 = vsel %vm999, %v958, 0
        %v1052 = vsel %vm999, %v959, 0
        %v1055 = vsel %vm999, %v960, 0
        %v1058 = vsel %vm999, %v961, 0
        %v1061 = vsel %vm999, %v962, 0
        %v1064 = vsel %vm999, %v963, 0
        %v1067 = vsel %vm999, %v964, 0
        %v1070 = vsel %vm999, %v965, 0
        %v1073 = vsel %vm999, %v966, 0
        %v1076 = vsel %vm999, %v967, 0
        %v1079 = vsel %vm999, %v968, 0
        %v1082 = vsel %vm999, %v969, 0
        %v1085 = vsel %vm999, %v970, 0
        %v1088 = vsel %vm999, %v971, 0
        %v1091 = vsel %vm999, %v972, 0
        %v1094 = vsel %vm999, %v973, 0
        %v1097 = vsel %vm999, %v974, 0
        %v1100 = vsel %vm999, %v975, 0
        %v1103 = vsel %vm999, %v976, 0
        %v1106 = vsel %vm999, %v977, 0
        %v1109 = vsel %vm999, %v978, 0
        %v1112 = vsel %vm999, %v979, 0
        %v1115 = vsel %vm999, %v980, 0
        %v1118 = vsel %vm999, %v981, 0
        %v1121 = vsel %vm999, %v982, 0
        %v1124 = vsel %vm999, %v983, 0
        %v1127 = vsel %vm999, %v984, 0
        %v1130 = vsel %vm999, %v985, 0
        %v1133 = vsel %vm999, %v986, 0
        %v1136 = vsel %vm999, %v987, 0
        %v1139 = vsel %vm999, %v988, 0
        %v1142 = vsel %vm999, %v989, 0
        %v1145 = vsel %vm999, %v990, 0
        %v1148 = vsel %vm999, %v991, 0
        %v1151 = vsel %vm999, %v992, 0
        %v1154 = vsel %vm999, %v993, 0
        %vm1156 = vcmask 1043456
        %vm1157 = vcmask 1044480
        %v1158 = vsel %vm1156, 4294967295, 65535
        %v1159 = vsel %vm1157, %v1158, 0
        %v1161 = vand.u32 %v998, %v1159
        %1163 = vmatprep.subr.bf16.mxu0 0
        %1164 = vmatpush1.bf16.msra.mxu0 %v1161
        %1165 = vmatprep.subr.bf16.mxu0 0
        %1166 = vmatpush1.bf16.msra.mxu0 0
        %1167 = vmatprep.subr.bf16.mxu0 0
        %1168 = vmatpush1.bf16.msra.mxu0 0
        %1169 = vmatprep.subr.bf16.mxu0 0
        %1170 = vmatpush1.bf16.msra.mxu0 0
        %1171 = vmatprep.subr.bf16.mxu0 0
        %1172 = vmatpush1.bf16.msra.mxu0 0
        %1173 = vmatprep.subr.bf16.mxu0 0
        %1174 = vmatpush1.bf16.msra.mxu0 0
        %1175 = vmatprep.subr.bf16.mxu0 0
        %1176 = vmatpush1.bf16.msra.mxu0 0
        %1177 = vmatprep.subr.bf16.mxu0 0
        %1178 = vmatpush1.bf16.msra.mxu0 0
        %1179 = vmatprep.subr.bf16.mxu0 0
        %1180 = vmatpush1.bf16.msra.mxu0 0
        %1181 = vmatprep.subr.bf16.mxu0 0
        %1182 = vmatpush1.bf16.msra.mxu0 0
        %1183 = vmatprep.subr.bf16.mxu0 0
        %1184 = vmatpush1.bf16.msra.mxu0 0
        %1185 = vmatprep.subr.bf16.mxu0 0
        %1186 = vmatpush1.bf16.msra.mxu0 0
        %1187 = vmatprep.subr.bf16.mxu0 0
        %1188 = vmatpush1.bf16.msra.mxu0 0
        %1189 = vmatprep.subr.bf16.mxu0 0
        %1190 = vmatpush1.bf16.msra.mxu0 0
        %1191 = vmatprep.subr.bf16.mxu0 0
        %1192 = vmatpush1.bf16.msra.mxu0 0
        %1193 = vmatprep.subr.bf16.mxu0 0
        %1194 = vmatpush1.bf16.msra.mxu0 0
        %1195 = vmatprep.mubr.bf16.mxu0 0
        %1196 = vmatmul.mubr.bf16.gmra.mrb[0].mxu0 %v1001
        %v1197 = vpop.f32.mrb[0].mxu0
        %v1198 = vadd.f32 0.0, %v1197
        %v1199 = vpop.f32.mrb[0].mxu0
        %v1200 = vpop.f32.mrb[0].mxu0
        %v1201 = vadd.f32 0.0, %v1200
        %v1202 = vpop.f32.mrb[0].mxu0
        %1203 = vmatprep.mubr.bf16.mxu0 0
        %1204 = vmatmul.mubr.bf16.gmra.mrb[0].mxu0 %v1004
        %v1205 = vpop.f32.mrb[0].mxu0
        %v1206 = vadd.f32 0.0, %v1205
        %v1207 = vpop.f32.mrb[0].mxu0
        %v1208 = vpop.f32.mrb[0].mxu0
        %v1209 = vadd.f32 0.0, %v1208
        %v1210 = vpop.f32.mrb[0].mxu0
        %1211 = vmatprep.mubr.bf16.mxu0 0
        %1212 = vmatmul.mubr.bf16.gmra.mrb[0].mxu0 %v1007
        %v1213 = vpop.f32.mrb[0].mxu0
        %v1214 = vadd.f32 0.0, %v1213
        %v1215 = vpop.f32.mrb[0].mxu0
        %v1216 = vpop.f32.mrb[0].mxu0
        %v1217 = vadd.f32 0.0, %v1216
        %v1218 = vpop.f32.mrb[0].mxu0
        %1219 = vmatprep.mubr.bf16.mxu0 0
        %1220 = vmatmul.mubr.bf16.gmra.mrb[0].mxu0 %v1010
        %v1221 = vpop.f32.mrb[0].mxu0
        %v1222 = vadd.f32 0.0, %v1221
        %v1223 = vpop.f32.mrb[0].mxu0
        %v1224 = vpop.f32.mrb[0].mxu0
        %v1225 = vadd.f32 0.0, %v1224
        %v1226 = vpop.f32.mrb[0].mxu0
        %1227 = vmatprep.mubr.bf16.mxu0 0
        %1228 = vmatmul.mubr.bf16.gmra.mrb[0].mxu0 %v1013
        %v1229 = vpop.f32.mrb[0].mxu0
        %v1230 = vadd.f32 0.0, %v1229
        %v1231 = vpop.f32.mrb[0].mxu0
        %v1232 = vpop.f32.mrb[0].mxu0
        %v1233 = vadd.f32 0.0, %v1232
        %v1234 = vpop.f32.mrb[0].mxu0
        %1235 = vmatprep.mubr.bf16.mxu0 0
        %1236 = vmatmul.mubr.bf16.gmra.mrb[0].mxu0 %v1016
        %v1237 = vpop.f32.mrb[0].mxu0
        %v1238 = vadd.f32 0.0, %v1237
        %v1239 = vpop.f32.mrb[0].mxu0
        %v1240 = vpop.f32.mrb[0].mxu0
        %v1241 = vadd.f32 0.0, %v1240
        %v1242 = vpop.f32.mrb[0].mxu0
        %1243 = vmatprep.mubr.bf16.mxu0 0
        %1244 = vmatmul.mubr.bf16.gmra.mrb[0].mxu0 %v1019
        %v1245 = vpop.f32.mrb[0].mxu0
        %v1246 = vadd.f32 0.0, %v1245
        %v1247 = vpop.f32.mrb[0].mxu0
        %v1248 = vpop.f32.mrb[0].mxu0
        %v1249 = vadd.f32 0.0, %v1248
        %v1250 = vpop.f32.mrb[0].mxu0
        %1251 = vmatprep.mubr.bf16.mxu0 0
        %1252 = vmatmul.mubr.bf16.gmra.mrb[0].mxu0 %v1022
        %v1253 = vpop.f32.mrb[0].mxu0
        %v1254 = vadd.f32 0.0, %v1253
        %v1255 = vpop.f32.mrb[0].mxu0
        %v1256 = vpop.f32.mrb[0].mxu0
        %v1257 = vadd.f32 0.0, %v1256
        %v1258 = vpop.f32.mrb[0].mxu0
        %1259 = vmatprep.mubr.bf16.mxu0 0
        %1260 = vmatmul.mubr.bf16.gmra.mrb[0].mxu0 %v1025
        %v1261 = vpop.f32.mrb[0].mxu0
        %v1262 = vadd.f32 0.0, %v1261
        %v1263 = vpop.f32.mrb[0].mxu0
        %v1264 = vpop.f32.mrb[0].mxu0
        %v1265 = vadd.f32 0.0, %v1264
        %v1266 = vpop.f32.mrb[0].mxu0
        %1267 = vmatprep.mubr.bf16.mxu0 0
        %1268 = vmatmul.mubr.bf16.gmra.mrb[0].mxu0 %v1028
        %v1269 = vpop.f32.mrb[0].mxu0
        %v1270 = vadd.f32 0.0, %v1269
        %v1271 = vpop.f32.mrb[0].mxu0
        %v1272 = vpop.f32.mrb[0].mxu0
        %v1273 = vadd.f32 0.0, %v1272
        %v1274 = vpop.f32.mrb[0].mxu0
        %1275 = vmatprep.mubr.bf16.mxu0 0
        %1276 = vmatmul.mubr.bf16.gmra.mrb[0].mxu0 %v1031
        %v1277 = vpop.f32.mrb[0].mxu0
        %v1278 = vadd.f32 0.0, %v1277
        %v1279 = vpop.f32.mrb[0].mxu0
        %v1280 = vpop.f32.mrb[0].mxu0
        %v1281 = vadd.f32 0.0, %v1280
        %v1282 = vpop.f32.mrb[0].mxu0
        %1283 = vmatprep.mubr.bf16.mxu0 0
        %1284 = vmatmul.mubr.bf16.gmra.mrb[0].mxu0 %v1034
        %v1285 = vpop.f32.mrb[0].mxu0
        %v1286 = vadd.f32 0.0, %v1285
        %v1287 = vpop.f32.mrb[0].mxu0
        %v1288 = vpop.f32.mrb[0].mxu0
        %v1289 = vadd.f32 0.0, %v1288
        %v1290 = vpop.f32.mrb[0].mxu0
        %1291 = vmatprep.mubr.bf16.mxu0 0
        %1292 = vmatmul.mubr.bf16.gmra.mrb[0].mxu0 %v1037
        %v1293 = vpop.f32.mrb[0].mxu0
        %v1294 = vadd.f32 0.0, %v1293
        %v1295 = vpop.f32.mrb[0].mxu0
        %v1296 = vpop.f32.mrb[0].mxu0
        %v1297 = vadd.f32 0.0, %v1296
        %v1298 = vpop.f32.mrb[0].mxu0
        %1299 = vmatprep.mubr.bf16.mxu0 0
        %1300 = vmatmul.mubr.bf16.gmra.mrb[0].mxu0 %v1040
        %v1301 = vpop.f32.mrb[0].mxu0
        %v1302 = vadd.f32 0.0, %v1301
        %v1303 = vpop.f32.mrb[0].mxu0
        %v1304 = vpop.f32.mrb[0].mxu0
        %v1305 = vadd.f32 0.0, %v1304
        %v1306 = vpop.f32.mrb[0].mxu0
        %1307 = vmatprep.mubr.bf16.mxu0 0
        %1308 = vmatmul.mubr.bf16.gmra.mrb[0].mxu0 %v1043
        %v1309 = vpop.f32.mrb[0].mxu0
        %v1310 = vadd.f32 0.0, %v1309
        %v1311 = vpop.f32.mrb[0].mxu0
        %v1312 = vpop.f32.mrb[0].mxu0
        %v1313 = vadd.f32 0.0, %v1312
        %v1314 = vpop.f32.mrb[0].mxu0
        %1315 = vmatprep.mubr.bf16.mxu0 0
        %1316 = vmatmul.mubr.bf16.gmra.mrb[0].mxu0 %v1046
        %v1317 = vpop.f32.mrb[0].mxu0
        %v1318 = vadd.f32 0.0, %v1317
        %v1319 = vpop.f32.mrb[0].mxu0
        %v1320 = vpop.f32.mrb[0].mxu0
        %v1321 = vadd.f32 0.0, %v1320
        %v1322 = vpop.f32.mrb[0].mxu0
        %1323 = vmatprep.mubr.bf16.mxu0 0
        %1324 = vmatmul.mubr.bf16.gmra.mrb[0].mxu0 %v1049
        %v1325 = vpop.f32.mrb[0].mxu0
        %v1326 = vadd.f32 0.0, %v1325
        %v1327 = vpop.f32.mrb[0].mxu0
        %v1328 = vpop.f32.mrb[0].mxu0
        %v1329 = vadd.f32 0.0, %v1328
        %v1330 = vpop.f32.mrb[0].mxu0
        %1331 = vmatprep.mubr.bf16.mxu0 0
        %1332 = vmatmul.mubr.bf16.gmra.mrb[0].mxu0 %v1052
        %v1333 = vpop.f32.mrb[0].mxu0
        %v1334 = vadd.f32 0.0, %v1333
        %v1335 = vpop.f32.mrb[0].mxu0
        %v1336 = vpop.f32.mrb[0].mxu0
        %v1337 = vadd.f32 0.0, %v1336
        %v1338 = vpop.f32.mrb[0].mxu0
        %1339 = vmatprep.mubr.bf16.mxu0 0
        %1340 = vmatmul.mubr.bf16.gmra.mrb[0].mxu0 %v1055
        %v1341 = vpop.f32.mrb[0].mxu0
        %v1342 = vadd.f32 0.0, %v1341
        %v1343 = vpop.f32.mrb[0].mxu0
        %v1344 = vpop.f32.mrb[0].mxu0
        %v1345 = vadd.f32 0.0, %v1344
        %v1346 = vpop.f32.mrb[0].mxu0
        %1347 = vmatprep.mubr.bf16.mxu0 0
        %1348 = vmatmul.mubr.bf16.gmra.mrb[0].mxu0 %v1058
        %v1349 = vpop.f32.mrb[0].mxu0
        %v1350 = vadd.f32 0.0, %v1349
        %v1351 = vpop.f32.mrb[0].mxu0
        %v1352 = vpop.f32.mrb[0].mxu0
        %v1353 = vadd.f32 0.0, %v1352
        %v1354 = vpop.f32.mrb[0].mxu0
        %1355 = vmatprep.mubr.bf16.mxu0 0
        %1356 = vmatmul.mubr.bf16.gmra.mrb[0].mxu0 %v1061
        %v1357 = vpop.f32.mrb[0].mxu0
        %v1358 = vadd.f32 0.0, %v1357
        %v1359 = vpop.f32.mrb[0].mxu0
        %v1360 = vpop.f32.mrb[0].mxu0
        %v1361 = vadd.f32 0.0, %v1360
        %v1362 = vpop.f32.mrb[0].mxu0
        %1363 = vmatprep.mubr.bf16.mxu0 0
        %1364 = vmatmul.mubr.bf16.gmra.mrb[0].mxu0 %v1064
        %v1365 = vpop.f32.mrb[0].mxu0
        %v1366 = vadd.f32 0.0, %v1365
        %v1367 = vpop.f32.mrb[0].mxu0
        %v1368 = vpop.f32.mrb[0].mxu0
        %v1369 = vadd.f32 0.0, %v1368
        %v1370 = vpop.f32.mrb[0].mxu0
        %1371 = vmatprep.mubr.bf16.mxu0 0
        %1372 = vmatmul.mubr.bf16.gmra.mrb[0].mxu0 %v1067
        %v1373 = vpop.f32.mrb[0].mxu0
        %v1374 = vadd.f32 0.0, %v1373
        %v1375 = vpop.f32.mrb[0].mxu0
        %v1376 = vpop.f32.mrb[0].mxu0
        %v1377 = vadd.f32 0.0, %v1376
        %v1378 = vpop.f32.mrb[0].mxu0
        %1379 = vmatprep.mubr.bf16.mxu0 0
        %1380 = vmatmul.mubr.bf16.gmra.mrb[0].mxu0 %v1070
        %v1381 = vpop.f32.mrb[0].mxu0
        %v1382 = vadd.f32 0.0, %v1381
        %v1383 = vpop.f32.mrb[0].mxu0
        %v1384 = vpop.f32.mrb[0].mxu0
        %v1385 = vadd.f32 0.0, %v1384
        %v1386 = vpop.f32.mrb[0].mxu0
        %1387 = vmatprep.mubr.bf16.mxu0 0
        %1388 = vmatmul.mubr.bf16.gmra.mrb[0].mxu0 %v1073
        %v1389 = vpop.f32.mrb[0].mxu0
        %v1390 = vadd.f32 0.0, %v1389
        %v1391 = vpop.f32.mrb[0].mxu0
        %v1392 = vpop.f32.mrb[0].mxu0
        %v1393 = vadd.f32 0.0, %v1392
        %v1394 = vpop.f32.mrb[0].mxu0
        %1395 = vmatprep.mubr.bf16.mxu0 0
        %1396 = vmatmul.mubr.bf16.gmra.mrb[0].mxu0 %v1076
        %v1397 = vpop.f32.mrb[0].mxu0
        %v1398 = vadd.f32 0.0, %v1397
        %v1399 = vpop.f32.mrb[0].mxu0
        %v1400 = vpop.f32.mrb[0].mxu0
        %v1401 = vadd.f32 0.0, %v1400
        %v1402 = vpop.f32.mrb[0].mxu0
        %1403 = vmatprep.mubr.bf16.mxu0 0
        %1404 = vmatmul.mubr.bf16.gmra.mrb[0].mxu0 %v1079
        %v1405 = vpop.f32.mrb[0].mxu0
        %v1406 = vadd.f32 0.0, %v1405
        %v1407 = vpop.f32.mrb[0].mxu0
        %v1408 = vpop.f32.mrb[0].mxu0
        %v1409 = vadd.f32 0.0, %v1408
        %v1410 = vpop.f32.mrb[0].mxu0
        %1411 = vmatprep.mubr.bf16.mxu0 0
        %1412 = vmatmul.mubr.bf16.gmra.mrb[0].mxu0 %v1082
        %v1413 = vpop.f32.mrb[0].mxu0
        %v1414 = vadd.f32 0.0, %v1413
        %v1415 = vpop.f32.mrb[0].mxu0
        %v1416 = vpop.f32.mrb[0].mxu0
        %v1417 = vadd.f32 0.0, %v1416
        %v1418 = vpop.f32.mrb[0].mxu0
        %1419 = vmatprep.mubr.bf16.mxu0 0
        %1420 = vmatmul.mubr.bf16.gmra.mrb[0].mxu0 %v1085
        %v1421 = vpop.f32.mrb[0].mxu0
        %v1422 = vadd.f32 0.0, %v1421
        %v1423 = vpop.f32.mrb[0].mxu0
        %v1424 = vpop.f32.mrb[0].mxu0
        %v1425 = vadd.f32 0.0, %v1424
        %v1426 = vpop.f32.mrb[0].mxu0
        %1427 = vmatprep.mubr.bf16.mxu0 0
        %1428 = vmatmul.mubr.bf16.gmra.mrb[0].mxu0 %v1088
        %v1429 = vpop.f32.mrb[0].mxu0
        %v1430 = vadd.f32 0.0, %v1429
        %v1431 = vpop.f32.mrb[0].mxu0
        %v1432 = vpop.f32.mrb[0].mxu0
        %v1433 = vadd.f32 0.0, %v1432
        %v1434 = vpop.f32.mrb[0].mxu0
        %1435 = vmatprep.mubr.bf16.mxu0 0
        %1436 = vmatmul.mubr.bf16.gmra.mrb[0].mxu0 %v1091
        %v1437 = vpop.f32.mrb[0].mxu0
        %v1438 = vadd.f32 0.0, %v1437
        %v1439 = vpop.f32.mrb[0].mxu0
        %v1440 = vpop.f32.mrb[0].mxu0
        %v1441 = vadd.f32 0.0, %v1440
        %v1442 = vpop.f32.mrb[0].mxu0
        %1443 = vmatprep.mubr.bf16.mxu0 0
        %1444 = vmatmul.mubr.bf16.gmra.mrb[0].mxu0 %v1094
        %v1445 = vpop.f32.mrb[0].mxu0
        %v1446 = vadd.f32 0.0, %v1445
        %v1447 = vpop.f32.mrb[0].mxu0
        %v1448 = vpop.f32.mrb[0].mxu0
        %v1449 = vadd.f32 0.0, %v1448
        %v1450 = vpop.f32.mrb[0].mxu0
        %1451 = vmatprep.mubr.bf16.mxu0 0
        %1452 = vmatmul.mubr.bf16.gmra.mrb[0].mxu0 %v1097
        %v1453 = vpop.f32.mrb[0].mxu0
        %v1454 = vadd.f32 0.0, %v1453
        %v1455 = vpop.f32.mrb[0].mxu0
        %v1456 = vpop.f32.mrb[0].mxu0
        %v1457 = vadd.f32 0.0, %v1456
        %v1458 = vpop.f32.mrb[0].mxu0
        %1459 = vmatprep.mubr.bf16.mxu0 0
        %1460 = vmatmul.mubr.bf16.gmra.mrb[0].mxu0 %v1100
        %v1461 = vpop.f32.mrb[0].mxu0
        %v1462 = vadd.f32 0.0, %v1461
        %v1463 = vpop.f32.mrb[0].mxu0
        %v1464 = vpop.f32.mrb[0].mxu0
        %v1465 = vadd.f32 0.0, %v1464
        %v1466 = vpop.f32.mrb[0].mxu0
        %1467 = vmatprep.mubr.bf16.mxu0 0
        %1468 = vmatmul.mubr.bf16.gmra.mrb[0].mxu0 %v1103
        %v1469 = vpop.f32.mrb[0].mxu0
        %v1470 = vadd.f32 0.0, %v1469
        %v1471 = vpop.f32.mrb[0].mxu0
        %v1472 = vpop.f32.mrb[0].mxu0
        %v1473 = vadd.f32 0.0, %v1472
        %v1474 = vpop.f32.mrb[0].mxu0
        %1475 = vmatprep.mubr.bf16.mxu0 0
        %1476 = vmatmul.mubr.bf16.gmra.mrb[0].mxu0 %v1106
        %v1477 = vpop.f32.mrb[0].mxu0
        %v1478 = vadd.f32 0.0, %v1477
        %v1479 = vpop.f32.mrb[0].mxu0
        %v1480 = vpop.f32.mrb[0].mxu0
        %v1481 = vadd.f32 0.0, %v1480
        %v1482 = vpop.f32.mrb[0].mxu0
        %1483 = vmatprep.mubr.bf16.mxu0 0
        %1484 = vmatmul.mubr.bf16.gmra.mrb[0].mxu0 %v1109
        %v1485 = vpop.f32.mrb[0].mxu0
        %v1486 = vadd.f32 0.0, %v1485
        %v1487 = vpop.f32.mrb[0].mxu0
        %v1488 = vpop.f32.mrb[0].mxu0
        %v1489 = vadd.f32 0.0, %v1488
        %v1490 = vpop.f32.mrb[0].mxu0
        %1491 = vmatprep.mubr.bf16.mxu0 0
        %1492 = vmatmul.mubr.bf16.gmra.mrb[0].mxu0 %v1112
        %v1493 = vpop.f32.mrb[0].mxu0
        %v1494 = vadd.f32 0.0, %v1493
        %v1495 = vpop.f32.mrb[0].mxu0
        %v1496 = vpop.f32.mrb[0].mxu0
        %v1497 = vadd.f32 0.0, %v1496
        %v1498 = vpop.f32.mrb[0].mxu0
        %1499 = vmatprep.mubr.bf16.mxu0 0
        %1500 = vmatmul.mubr.bf16.gmra.mrb[0].mxu0 %v1115
        %v1501 = vpop.f32.mrb[0].mxu0
        %v1502 = vadd.f32 0.0, %v1501
        %v1503 = vpop.f32.mrb[0].mxu0
        %v1504 = vpop.f32.mrb[0].mxu0
        %v1505 = vadd.f32 0.0, %v1504
        %v1506 = vpop.f32.mrb[0].mxu0
        %1507 = vmatprep.mubr.bf16.mxu0 0
        %1508 = vmatmul.mubr.bf16.gmra.mrb[0].mxu0 %v1118
        %v1509 = vpop.f32.mrb[0].mxu0
        %v1510 = vadd.f32 0.0, %v1509
        %v1511 = vpop.f32.mrb[0].mxu0
        %v1512 = vpop.f32.mrb[0].mxu0
        %v1513 = vadd.f32 0.0, %v1512
        %v1514 = vpop.f32.mrb[0].mxu0
        %1515 = vmatprep.mubr.bf16.mxu0 0
        %1516 = vmatmul.mubr.bf16.gmra.mrb[0].mxu0 %v1121
        %v1517 = vpop.f32.mrb[0].mxu0
        %v1518 = vadd.f32 0.0, %v1517
        %v1519 = vpop.f32.mrb[0].mxu0
        %v1520 = vpop.f32.mrb[0].mxu0
        %v1521 = vadd.f32 0.0, %v1520
        %v1522 = vpop.f32.mrb[0].mxu0
        %1523 = vmatprep.mubr.bf16.mxu0 0
        %1524 = vmatmul.mubr.bf16.gmra.mrb[0].mxu0 %v1124
        %v1525 = vpop.f32.mrb[0].mxu0
        %v1526 = vadd.f32 0.0, %v1525
        %v1527 = vpop.f32.mrb[0].mxu0
        %v1528 = vpop.f32.mrb[0].mxu0
        %v1529 = vadd.f32 0.0, %v1528
        %v1530 = vpop.f32.mrb[0].mxu0
        %1531 = vmatprep.mubr.bf16.mxu0 0
        %1532 = vmatmul.mubr.bf16.gmra.mrb[0].mxu0 %v1127
        %v1533 = vpop.f32.mrb[0].mxu0
        %v1534 = vadd.f32 0.0, %v1533
        %v1535 = vpop.f32.mrb[0].mxu0
        %v1536 = vpop.f32.mrb[0].mxu0
        %v1537 = vadd.f32 0.0, %v1536
        %v1538 = vpop.f32.mrb[0].mxu0
        %1539 = vmatprep.mubr.bf16.mxu0 0
        %1540 = vmatmul.mubr.bf16.gmra.mrb[0].mxu0 %v1130
        %v1541 = vpop.f32.mrb[0].mxu0
        %v1542 = vadd.f32 0.0, %v1541
        %v1543 = vpop.f32.mrb[0].mxu0
        %v1544 = vpop.f32.mrb[0].mxu0
        %v1545 = vadd.f32 0.0, %v1544
        %v1546 = vpop.f32.mrb[0].mxu0
        %1547 = vmatprep.mubr.bf16.mxu0 0
        %1548 = vmatmul.mubr.bf16.gmra.mrb[0].mxu0 %v1133
        %v1549 = vpop.f32.mrb[0].mxu0
        %v1550 = vadd.f32 0.0, %v1549
        %v1551 = vpop.f32.mrb[0].mxu0
        %v1552 = vpop.f32.mrb[0].mxu0
        %v1553 = vadd.f32 0.0, %v1552
        %v1554 = vpop.f32.mrb[0].mxu0
        %1555 = vmatprep.mubr.bf16.mxu0 0
        %1556 = vmatmul.mubr.bf16.gmra.mrb[0].mxu0 %v1136
        %v1557 = vpop.f32.mrb[0].mxu0
        %v1558 = vadd.f32 0.0, %v1557
        %v1559 = vpop.f32.mrb[0].mxu0
        %v1560 = vpop.f32.mrb[0].mxu0
        %v1561 = vadd.f32 0.0, %v1560
        %v1562 = vpop.f32.mrb[0].mxu0
        %1563 = vmatprep.mubr.bf16.mxu0 0
        %1564 = vmatmul.mubr.bf16.gmra.mrb[0].mxu0 %v1139
        %v1565 = vpop.f32.mrb[0].mxu0
        %v1566 = vadd.f32 0.0, %v1565
        %v1567 = vpop.f32.mrb[0].mxu0
        %v1568 = vpop.f32.mrb[0].mxu0
        %v1569 = vadd.f32 0.0, %v1568
        %v1570 = vpop.f32.mrb[0].mxu0
        %1571 = vmatprep.mubr.bf16.mxu0 0
        %1572 = vmatmul.mubr.bf16.gmra.mrb[0].mxu0 %v1142
        %v1573 = vpop.f32.mrb[0].mxu0
        %v1574 = vadd.f32 0.0, %v1573
        %v1575 = vpop.f32.mrb[0].mxu0
        %v1576 = vpop.f32.mrb[0].mxu0
        %v1577 = vadd.f32 0.0, %v1576
        %v1578 = vpop.f32.mrb[0].mxu0
        %1579 = vmatprep.mubr.bf16.mxu0 0
        %1580 = vmatmul.mubr.bf16.gmra.mrb[0].mxu0 %v1145
        %v1581 = vpop.f32.mrb[0].mxu0
        %v1582 = vadd.f32 0.0, %v1581
        %v1583 = vpop.f32.mrb[0].mxu0
        %v1584 = vpop.f32.mrb[0].mxu0
        %v1585 = vadd.f32 0.0, %v1584
        %v1586 = vpop.f32.mrb[0].mxu0
        %1587 = vmatprep.mubr.bf16.mxu0 0
        %1588 = vmatmul.mubr.bf16.gmra.mrb[0].mxu0 %v1148
        %v1589 = vpop.f32.mrb[0].mxu0
        %v1590 = vadd.f32 0.0, %v1589
        %v1591 = vpop.f32.mrb[0].mxu0
        %v1592 = vpop.f32.mrb[0].mxu0
        %v1593 = vadd.f32 0.0, %v1592
        %v1594 = vpop.f32.mrb[0].mxu0
        %1595 = vmatprep.mubr.bf16.mxu0 0
        %1596 = vmatmul.mubr.bf16.gmra.mrb[0].mxu0 %v1151
        %v1597 = vpop.f32.mrb[0].mxu0
        %v1598 = vadd.f32 0.0, %v1597
        %v1599 = vpop.f32.mrb[0].mxu0
        %v1600 = vpop.f32.mrb[0].mxu0
        %v1601 = vadd.f32 0.0, %v1600
        %v1602 = vpop.f32.mrb[0].mxu0
        %1603 = vmatprep.mubr.bf16.mxu0 0
        %1604 = vmatmul.mubr.bf16.gmra.mrb[0].mxu0 %v1154
        %v1605 = vpop.f32.mrb[0].mxu0
        %v1606 = vadd.f32 0.0, %v1605
        %v1607 = vpop.f32.mrb[0].mxu0
        %v1608 = vpop.f32.mrb[0].mxu0
        %v1609 = vadd.f32 0.0, %v1608
        %v1610 = vpop.f32.mrb[0].mxu0
        %1611 = vdwg.mxu0
        %v1612 = vmax.f32 %v1198, %v1302
        %v1613 = vmax.f32 %v1201, %v1305
        %v1614 = vmax.f32 %v1206, %v1310
        %v1615 = vmax.f32 %v1209, %v1313
        %v1616 = vmax.f32 %v1214, %v1318
        %v1617 = vmax.f32 %v1217, %v1321
        %v1618 = vmax.f32 %v1222, %v1326
        %v1619 = vmax.f32 %v1225, %v1329
        %v1620 = vmax.f32 %v1230, %v1334
        %v1621 = vmax.f32 %v1233, %v1337
        %v1622 = vmax.f32 %v1238, %v1342
        %v1623 = vmax.f32 %v1241, %v1345
        %v1624 = vmax.f32 %v1246, %v1350
        %v1625 = vmax.f32 %v1249, %v1353
        %v1626 = vmax.f32 %v1254, %v1358
        %v1627 = vmax.f32 %v1257, %v1361
        %v1628 = vmax.f32 %v1262, %v1366
        %v1629 = vmax.f32 %v1265, %v1369
        %v1630 = vmax.f32 %v1270, %v1374
        %v1631 = vmax.f32 %v1273, %v1377
        %v1632 = vmax.f32 %v1278, %v1382
        %v1633 = vmax.f32 %v1281, %v1385
        %v1634 = vmax.f32 %v1286, %v1390
        %v1635 = vmax.f32 %v1289, %v1393
        %v1636 = vmax.f32 %v1294, %v1398
        %v1637 = vmax.f32 %v1297, %v1401
        %v1638 = vmax.f32 %v1406, %v1510
        %v1639 = vmax.f32 %v1409, %v1513
        %v1640 = vmax.f32 %v1414, %v1518
        %v1641 = vmax.f32 %v1417, %v1521
        %v1642 = vmax.f32 %v1422, %v1526
        %v1643 = vmax.f32 %v1425, %v1529
        %v1644 = vmax.f32 %v1430, %v1534
        %v1645 = vmax.f32 %v1433, %v1537
        %v1646 = vmax.f32 %v1438, %v1542
        %v1647 = vmax.f32 %v1441, %v1545
        %v1648 = vmax.f32 %v1446, %v1550
        %v1649 = vmax.f32 %v1449, %v1553
        %v1650 = vmax.f32 %v1454, %v1558
        %v1651 = vmax.f32 %v1457, %v1561
        %v1652 = vmax.f32 %v1462, %v1566
        %v1653 = vmax.f32 %v1465, %v1569
        %v1654 = vmax.f32 %v1470, %v1574
        %v1655 = vmax.f32 %v1473, %v1577
        %v1656 = vmax.f32 %v1478, %v1582
        %v1657 = vmax.f32 %v1481, %v1585
        %v1658 = vmax.f32 %v1486, %v1590
        %v1659 = vmax.f32 %v1489, %v1593
        %v1660 = vmax.f32 %v1494, %v1598
        %v1661 = vmax.f32 %v1497, %v1601
        %v1662 = vmax.f32 %v1502, %v1606
        %v1663 = vmax.f32 %v1505, %v1609
        %v1664 = vmax.f32 %v1612, %v1638
        %v1665 = vmax.f32 %v1613, %v1639
        %v1666 = vmax.f32 %v1614, %v1640
        %v1667 = vmax.f32 %v1615, %v1641
        %v1668 = vmax.f32 %v1616, %v1642
        %v1669 = vmax.f32 %v1617, %v1643
        %v1670 = vmax.f32 %v1618, %v1644
        %v1671 = vmax.f32 %v1619, %v1645
        %v1672 = vmax.f32 %v1620, %v1646
        %v1673 = vmax.f32 %v1621, %v1647
        %v1674 = vmax.f32 %v1622, %v1648
        %v1675 = vmax.f32 %v1623, %v1649
        %v1676 = vmax.f32 %v1624, %v1650
        %v1677 = vmax.f32 %v1625, %v1651
        %v1678 = vmax.f32 %v1626, %v1652
        %v1679 = vmax.f32 %v1627, %v1653
        %v1680 = vmax.f32 %v1628, %v1654
        %v1681 = vmax.f32 %v1629, %v1655
        %v1682 = vmax.f32 %v1630, %v1656
        %v1683 = vmax.f32 %v1631, %v1657
        %v1684 = vmax.f32 %v1632, %v1658
        %v1685 = vmax.f32 %v1633, %v1659
        %v1686 = vmax.f32 %v1634, %v1660
        %v1687 = vmax.f32 %v1635, %v1661
        %v1688 = vmax.f32 %v1636, %v1662
        %v1689 = vmax.f32 %v1637, %v1663
        %v1690 = vld [vmem:[%s2] sm:$0x1]
        %v1692 = vlaneseq
        %v1693 = vshrl.u32 %v1692, 7
        %v1694 = vsub.s32 0, %v1693
        %v1695 = vrot.slane %v1690, %v1694
        %v1697 = vadd.f32 %v1664, %v1695
        %v1698 = vadd.f32 %v1665, %v1695
        %v1699 = vadd.f32 %v1666, %v1695
        %v1700 = vadd.f32 %v1667, %v1695
        %v1701 = vadd.f32 %v1668, %v1695
        %v1702 = vadd.f32 %v1669, %v1695
        %v1703 = vadd.f32 %v1670, %v1695
        %v1704 = vadd.f32 %v1671, %v1695
        %v1705 = vadd.f32 %v1672, %v1695
        %v1706 = vadd.f32 %v1673, %v1695
        %v1707 = vadd.f32 %v1674, %v1695
        %v1708 = vadd.f32 %v1675, %v1695
        %v1709 = vadd.f32 %v1676, %v1695
        %v1710 = vadd.f32 %v1677, %v1695
        %v1711 = vadd.f32 %v1678, %v1695
        %v1712 = vadd.f32 %v1679, %v1695
        %v1713 = vadd.f32 %v1680, %v1695
        %v1714 = vadd.f32 %v1681, %v1695
        %v1715 = vadd.f32 %v1682, %v1695
        %v1716 = vadd.f32 %v1683, %v1695
        %v1717 = vadd.f32 %v1684, %v1695
        %v1718 = vadd.f32 %v1685, %v1695
        %v1719 = vadd.f32 %v1686, %v1695
        %v1720 = vadd.f32 %v1687, %v1695
        %v1721 = vadd.f32 %v1688, %v1695
        %v1722 = vadd.f32 %v1689, %v1695
        %v1723 = vmax.f32 %v1697, 0.0
        %v1724 = vmax.f32 %v1698, 0.0
        %v1725 = vmax.f32 %v1699, 0.0
        %v1726 = vmax.f32 %v1700, 0.0
        %v1727 = vmax.f32 %v1701, 0.0
        %v1728 = vmax.f32 %v1702, 0.0
        %v1729 = vmax.f32 %v1703, 0.0
        %v1730 = vmax.f32 %v1704, 0.0
        %v1731 = vmax.f32 %v1705, 0.0
        %v1732 = vmax.f32 %v1706, 0.0
        %v1733 = vmax.f32 %v1707, 0.0
        %v1734 = vmax.f32 %v1708, 0.0
        %v1735 = vmax.f32 %v1709, 0.0
        %v1736 = vmax.f32 %v1710, 0.0
        %v1737 = vmax.f32 %v1711, 0.0
        %v1738 = vmax.f32 %v1712, 0.0
        %v1739 = vmax.f32 %v1713, 0.0
        %v1740 = vmax.f32 %v1714, 0.0
        %v1741 = vmax.f32 %v1715, 0.0
        %v1742 = vmax.f32 %v1716, 0.0
        %v1743 = vmax.f32 %v1717, 0.0
        %v1744 = vmax.f32 %v1718, 0.0
        %v1745 = vmax.f32 %v1719, 0.0
        %v1746 = vmax.f32 %v1720, 0.0
        %v1747 = vmax.f32 %v1721, 0.0
        %v1748 = vmax.f32 %v1722, 0.0
        %v1749 = vpack.c.bf16 %v1724, %v1723
        %v1750 = vpack.c.bf16 %v1726, %v1725
        %v1751 = vpack.c.bf16 %v1728, %v1727
        %v1752 = vpack.c.bf16 %v1730, %v1729
        %v1753 = vpack.c.bf16 %v1732, %v1731
        %v1754 = vpack.c.bf16 %v1734, %v1733
        %v1755 = vpack.c.bf16 %v1736, %v1735
        %v1756 = vpack.c.bf16 %v1738, %v1737
        %v1757 = vpack.c.bf16 %v1740, %v1739
        %v1758 = vpack.c.bf16 %v1742, %v1741
        %v1759 = vpack.c.bf16 %v1744, %v1743
        %v1760 = vpack.c.bf16 %v1746, %v1745
        %v1761 = vpack.c.bf16 %v1748, %v1747
        %v1775 = vunpack.c.l.b16 %v1749
        %v1776 = vunpack.c.h.b16 %v1749
        %v1777 = vunpack.c.l.b16 %v1750
        %v1778 = vunpack.c.h.b16 %v1750
        %v1779 = vunpack.c.l.b16 %v1751
        %v1780 = vunpack.c.h.b16 %v1751
        %v1781 = vunpack.c.l.b16 %v1752
        %v1782 = vunpack.c.h.b16 %v1752
        %v1783 = vunpack.c.l.b16 %v1753
        %v1784 = vunpack.c.h.b16 %v1753
        %v1785 = vunpack.c.l.b16 %v1754
        %v1786 = vunpack.c.h.b16 %v1754
        %v1787 = vunpack.c.l.b16 %v1755
        %v1788 = vunpack.c.h.b16 %v1755
        %v1789 = vunpack.c.l.b16 %v1756
        %v1790 = vunpack.c.h.b16 %v1756
        %v1791 = vunpack.c.l.b16 %v1757
        %v1792 = vunpack.c.h.b16 %v1757
        %v1793 = vunpack.c.l.b16 %v1758
        %v1794 = vunpack.c.h.b16 %v1758
        %v1795 = vunpack.c.l.b16 %v1759
        %v1796 = vunpack.c.h.b16 %v1759
        %v1797 = vunpack.c.l.b16 %v1760
        %v1798 = vunpack.c.h.b16 %v1760
        %v1799 = vunpack.c.l.b16 %v1761
        %v1800 = vunpack.c.h.b16 %v1761
        %v1801 = vpack.c.b16 %v1775, %v1775
        %v1802 = vpack.c.b16 %v1776, %v1776
        %v1803 = vpack.c.b16 %v1777, %v1777
        %v1804 = vpack.c.b16 %v1778, %v1778
        %v1805 = vpack.c.b16 %v1779, %v1779
        %v1806 = vpack.c.b16 %v1780, %v1780
        %v1807 = vpack.c.b16 %v1781, %v1781
        %v1808 = vpack.c.b16 %v1782, %v1782
        %v1809 = vpack.c.b16 %v1783, %v1783
        %v1810 = vpack.c.b16 %v1784, %v1784
        %v1811 = vpack.c.b16 %v1785, %v1785
        %v1812 = vpack.c.b16 %v1786, %v1786
        %v1813 = vpack.c.b16 %v1787, %v1787
        %v1814 = vpack.c.b16 %v1788, %v1788
        %v1815 = vpack.c.b16 %v1789, %v1789
        %v1816 = vpack.c.b16 %v1790, %v1790
        %v1817 = vpack.c.b16 %v1791, %v1791
        %v1818 = vpack.c.b16 %v1792, %v1792
        %v1819 = vpack.c.b16 %v1793, %v1793
        %v1820 = vpack.c.b16 %v1794, %v1794
        %v1821 = vpack.c.b16 %v1795, %v1795
        %v1822 = vpack.c.b16 %v1796, %v1796
        %v1823 = vpack.c.b16 %v1797, %v1797
        %v1824 = vpack.c.b16 %v1798, %v1798
        %v1825 = vpack.c.b16 %v1799, %v1799
        %v1826 = vpack.c.b16 %v1800, %v1800
        %vm1853 = vcmask 257024
        %1854 = vst.msk [vmem:[%s625] sm:$0xf] %vm1853, %v1801
        %1855 = vst.msk [vmem:[%s625 + $0x4] sm:$0xf] %vm1853, %v1802
        %1856 = vst.msk [vmem:[%s625 + $0x8] sm:$0xf] %vm1853, %v1803
        %1857 = vst.msk [vmem:[%s625 + $0xc] sm:$0xf] %vm1853, %v1804
        %1858 = vst.msk [vmem:[%s625 + $0x10] sm:$0xf] %vm1853, %v1805
        %1859 = vst.msk [vmem:[%s625 + $0x14] sm:$0xf] %vm1853, %v1806
        %1860 = vst.msk [vmem:[%s625 + $0x18] sm:$0xf] %vm1853, %v1807
        %1861 = vst.msk [vmem:[%s625 + $0x1c] sm:$0xf] %vm1853, %v1808
        %1862 = vst.msk [vmem:[%s625 + $0x20] sm:$0xf] %vm1853, %v1809
        %1863 = vst.msk [vmem:[%s625 + $0x24] sm:$0xf] %vm1853, %v1810
        %1864 = vst.msk [vmem:[%s625 + $0x28] sm:$0xf] %vm1853, %v1811
        %1865 = vst.msk [vmem:[%s625 + $0x2c] sm:$0xf] %vm1853, %v1812
        %1866 = vst.msk [vmem:[%s625 + $0x30] sm:$0xf] %vm1853, %v1813
        %1867 = vst.msk [vmem:[%s625 + $0x34] sm:$0xf] %vm1853, %v1814
        %1868 = vst.msk [vmem:[%s625 + $0x38] sm:$0xf] %vm1853, %v1815
        %1869 = vst.msk [vmem:[%s625 + $0x3c] sm:$0xf] %vm1853, %v1816
        %1870 = vst.msk [vmem:[%s625 + $0x40] sm:$0xf] %vm1853, %v1817
        %1871 = vst.msk [vmem:[%s625 + $0x44] sm:$0xf] %vm1853, %v1818
        %1872 = vst.msk [vmem:[%s625 + $0x48] sm:$0xf] %vm1853, %v1819
        %1873 = vst.msk [vmem:[%s625 + $0x4c] sm:$0xf] %vm1853, %v1820
        %1874 = vst.msk [vmem:[%s625 + $0x50] sm:$0xf] %vm1853, %v1821
        %1875 = vst.msk [vmem:[%s625 + $0x54] sm:$0xf] %vm1853, %v1822
        %1876 = vst.msk [vmem:[%s625 + $0x58] sm:$0xf] %vm1853, %v1823
        %1877 = vst.msk [vmem:[%s625 + $0x5c] sm:$0xf] %vm1853, %v1824
        %1878 = vst.msk [vmem:[%s625 + $0x60] sm:$0xf] %vm1853, %v1825
        %1879 = vst.msk [vmem:[%s625 + $0x64] sm:$0xf] %vm1853, %v1826
        %s1880 = smul.u32 26, %s14
        %p1881 = scmp.lt.s32.totalorder %s1880, 51
        %s1882 = scalar_select %p1881, %s1880, 51
        %s1883 = smul.addr %s1882, 4
        %s1884 = scalar_lea.vmem %s3, %s1883
        // Predicated region
        $region74: #{multimodal_forward.3} parent=68 // pred_check
          %p1885 = pneg %p100
        $region75: #{multimodal_forward.3} parent=68 // pred_check_branch
          %1887 = sbr.rel (%p1885) target = $region77
        $region76: #{multimodal_forward.3} parent=68 // pred_region
          %s1888 = smul.u32 26, %s14
        $region77: #{multimodal_forward.3} parent=68 // pred_fallthru
          _
      $region69: #{multimodal_forward.3} parent=5 // pred_fallthru
        _
      %p1889 = scmp.le.s32.totalorder 2, %s9
      // Predicated region
      $region78: #{multimodal_forward.3} parent=5 // pred_check
        %p1890 = pneg %p1889
      $region79: #{multimodal_forward.3} parent=5 // pred_check_branch
        %1892 = sbr.rel (%p1890) target = $region81
      $region80: #{multimodal_forward.3} parent=5 // pred_region
        %s1893 = ssub.s32 %s9, 2
        // Predicated region
        $region82: #{multimodal_forward.3} parent=80 // pred_check
          %p1894 = pneg %p106
        $region83: #{multimodal_forward.3} parent=80 // pred_check_branch
          %1896 = sbr.rel (%p1894) target = $region85
        $region84: #{multimodal_forward.3} parent=80 // pred_region
          %s1897 = smul.u32 26, %s15
          %p1898 = scmp.lt.s32.totalorder %s1897, 51
          %s1899 = scalar_select %p1898, %s1897, 51
          %s1900 = smul.addr %s1899, 4
          %s1901 = scalar_lea.vmem %s3, %s1900
        $region85: #{multimodal_forward.3} parent=80 // pred_fallthru
          _
      $region81: #{multimodal_forward.3} parent=5 // pred_fallthru
        _
    $region6: #{multimodal_forward.3} parent=1 // loop_footer
      %s13 = sadd.s32 1, %s9
    $region7: #{multimodal_forward.3} parent=1 // loop_footer_branch
      %8 = sbr.rel target = $region3
    $region8: #{multimodal_forward.3} parent=1 // loop_exit
      _

// kernel: multimodal_forward.4
$region0: #{multimodal_forward.4}
  #allocation0 [shape = 'u32[]', space=smem, size = 0x4, offset = 0x4, fixed_abs, tag = 'smem constant byte address 0x4 - core index']
  #allocation1 [shape = 'u32[144,128]{1,0:T(1,128)}', space=vmem, size = 0x12000, scoped, tag = 'internal scratch']
  %s0 = inlined_call_operand.vmem [shape: bf16[4,128,288], index: 0, kind: input, shape index: {}]
  %s1 = inlined_call_operand.vmem [shape: bf16[288,64], index: 1, kind: input, shape index: {}]
  %s2 = inlined_call_operand.vmem [shape: f32[1,64], index: 2, kind: input, shape index: {}]
  %s3 = inlined_call_operand.vmem [shape: bf16[128,64], index: 3, kind: output, shape index: {}]
  %s4 = sld [smem:[#allocation0]]
  $region71: #{multimodal_forward.4} parent=0
    _
  %s6 = ssub.s32 1, %s4
  %s7 = scalar_select 0, %s6, %s4
  $region1: #{multimodal_forward.4} parent=0
    #allocation2 [shape = 'u8[393216]{0}', space=vmem, size = 0x60000, scoped, tag = 'input window, operand 0']
    loop: start=0, step=1, limit=4
    $region2: #{multimodal_forward.4} parent=1 // loop_pre_header
      _
    $region3: #{multimodal_forward.4} parent=1 // loop_header
      %s9 = sphi 0, %s13
      %p10 = scmp.ge.s32.totalorder %s9, 4
      %s19 = sphi 0, %s21
      %s22 = sphi 0, %s19
      %s23 = sphi 0, %s22
      %s39 = sphi 0, %s23
      %s43 = sphi 0, %s43
      %s45 = sphi 0, %s43
      %s46 = sphi 0, %s45
      %s60 = sphi 0, %s46
      %s64 = sphi 0, %s64
      %s66 = sphi 0, %s64
      %s67 = sphi 0, %s66
      %s81 = sphi 0, %s67
      %s87 = sphi 0, %s89
      %s90 = sphi 0, %s87
      %s91 = sphi 0, %s90
      %s107 = sphi 0, %s91
    $region4: #{multimodal_forward.4} parent=1 // loop_header_branch
      %12 = sbr.rel (%p10) target = $region8
    $region5: #{multimodal_forward.4} parent=1 // loop_body
      %s14 = ssub.s32 %s9, 1
      %s15 = ssub.s32 %s9, 2
      %s16 = sadd.s32 %s9, 1
      %s17 = ssub.s32 %s9, %s16
      %p18 = scmp.eq.s32.totalorder %s17, 0
      %s20 = sadd.s32 %s19, 1
      %s21 = scalar_select %p18, %s19, %s20
      %p24 = pneg %p18
      %p25 = scmp.eq.s32.totalorder %s9, 1
      %p26 = por %p24, %p25
      %p27 = scmp.ne.s32.totalorder %s19, %s22
      %p28 = scmp.eq.s32.totalorder %s9, 0
      %p29 = por %p27, %p28
      %p30 = scmp.ne.s32.totalorder %s19, %s22
      %p31 = scmp.eq.s32.totalorder %s14, 1
      %p32 = por %p30, %p31
      %p33 = scmp.ne.s32.totalorder %s22, %s23
      %p34 = scmp.eq.s32.totalorder %s14, 0
      %p35 = por %p33, %p34
      %p36 = scmp.ne.s32.totalorder %s22, %s23
      %p37 = scmp.eq.s32.totalorder %s15, 1
      %p38 = por %p36, %p37
      %p40 = scmp.ne.s32.totalorder %s23, %s39
      %p41 = scmp.eq.s32.totalorder %s15, 0
      %p42 = por %p40, %p41
      %s44 = sadd.s32 %s43, 1
      %p47 = scmp.eq.s32.totalorder %s9, 1
      %p48 = scmp.ne.s32.totalorder %s43, %s45
      %p49 = scmp.eq.s32.totalorder %s9, 0
      %p50 = por %p48, %p49
      %p51 = scmp.ne.s32.totalorder %s43, %s45
      %p52 = scmp.eq.s32.totalorder %s14, 1
      %p53 = por %p51, %p52
      %p54 = scmp.ne.s32.totalorder %s45, %s46
      %p55 = scmp.eq.s32.totalorder %s14, 0
      %p56 = por %p54, %p55
      %p57 = scmp.ne.s32.totalorder %s45, %s46
      %p58 = scmp.eq.s32.totalorder %s15, 1
      %p59 = por %p57, %p58
      %p61 = scmp.ne.s32.totalorder %s46, %s60
      %p62 = scmp.eq.s32.totalorder %s15, 0
      %p63 = por %p61, %p62
      %s65 = sadd.s32 %s64, 1
      %p68 = scmp.eq.s32.totalorder %s9, 1
      %p69 = scmp.ne.s32.totalorder %s64, %s66
      %p70 = scmp.eq.s32.totalorder %s9, 0
      %p71 = por %p69, %p70
      %p72 = scmp.ne.s32.totalorder %s64, %s66
      %p73 = scmp.eq.s32.totalorder %s14, 1
      %p74 = por %p72, %p73
      %p75 = scmp.ne.s32.totalorder %s66, %s67
      %p76 = scmp.eq.s32.totalorder %s14, 0
      %p77 = por %p75, %p76
      %p78 = scmp.ne.s32.totalorder %s66, %s67
      %p79 = scmp.eq.s32.totalorder %s15, 1
      %p80 = por %p78, %p79
      %p82 = scmp.ne.s32.totalorder %s67, %s81
      %p83 = scmp.eq.s32.totalorder %s15, 0
      %p84 = por %p82, %p83
      %s85 = ssub.s32 %s9, %s16
      %p86 = scmp.eq.s32.totalorder %s85, 0
      %s88 = sadd.s32 %s87, 1
      %s89 = scalar_select %p86, %s87, %s88
      %p92 = pneg %p86
      %p93 = scmp.eq.s32.totalorder %s9, 1
      %p94 = por %p92, %p93
      %p95 = scmp.ne.s32.totalorder %s87, %s90
      %p96 = scmp.eq.s32.totalorder %s9, 0
      %p97 = por %p95, %p96
      %p98 = scmp.ne.s32.totalorder %s87, %s90
      %p99 = scmp.eq.s32.totalorder %s14, 1
      %p100 = por %p98, %p99
      %p101 = scmp.ne.s32.totalorder %s90, %s91
      %p102 = scmp.eq.s32.totalorder %s14, 0
      %p103 = por %p101, %p102
      %p104 = scmp.ne.s32.totalorder %s90, %s91
      %p105 = scmp.eq.s32.totalorder %s15, 1
      %p106 = por %p104, %p105
      %p108 = scmp.ne.s32.totalorder %s91, %s107
      %p109 = scmp.eq.s32.totalorder %s15, 0
      %p110 = por %p108, %p109
      %p111 = scmp.le.s32.totalorder 1, %s9
      %p112 = scmp.lt.s32.totalorder %s9, 3
      %p113 = pnand %p111, %p112
      %p114 = pneg %p113
      // Predicated region
      $region9: #{multimodal_forward.4} parent=5 // pred_check
        _
      $region10: #{multimodal_forward.4} parent=5 // pred_check_branch
        %116 = sbr.rel (%p113) target = $region12
      $region11: #{multimodal_forward.4} parent=5 // pred_region
        %s117 = ssub.s32 %s9, 1
        // Predicated region
        $region13: #{multimodal_forward.4} parent=11 // pred_check
          %p118 = pneg %p56
        $region14: #{multimodal_forward.4} parent=11 // pred_check_branch
          %120 = sbr.rel (%p118) target = $region16
        $region15: #{multimodal_forward.4} parent=11 // pred_region
          _
        $region16: #{multimodal_forward.4} parent=11 // pred_fallthru
          _
        // Predicated region
        $region17: #{multimodal_forward.4} parent=11 // pred_check
          %p121 = pneg %p77
        $region18: #{multimodal_forward.4} parent=11 // pred_check_branch
          %123 = sbr.rel (%p121) target = $region20
        $region19: #{multimodal_forward.4} parent=11 // pred_region
          _
        $region20: #{multimodal_forward.4} parent=11 // pred_fallthru
          _
      $region12: #{multimodal_forward.4} parent=5 // pred_fallthru
        _
      %p124 = scmp.lt.s32.totalorder %s9, 2
      // Predicated region
      $region21: #{multimodal_forward.4} parent=5 // pred_check
        %p125 = pneg %p124
      $region22: #{multimodal_forward.4} parent=5 // pred_check_branch
        %127 = sbr.rel (%p125) target = $region24
      $region23: #{multimodal_forward.4} parent=5 // pred_region
        // Predicated region
        $region25: #{multimodal_forward.4} parent=23 // pred_check
          %p128 = pneg %p29
        $region26: #{multimodal_forward.4} parent=23 // pred_check_branch
          %130 = sbr.rel (%p128) target = $region28
        $region27: #{multimodal_forward.4} parent=23 // pred_region
          %s131 = sand.u32 %s19, 1
          %s132 = sand.u32 %s19, 1
          %s133 = smul.addr %s132, 384
          %s134 = scalar_lea.vmem [#allocation2], %s133
          %s135 = smul.u32 8, %s9
          %s136 = smul.addr %s135, 3
          %s137 = smul.addr %s136, 4
          %s138 = scalar_lea.vmem %s0, %s137
          // Predicated region
          $region29: #{multimodal_forward.4} parent=27 // pred_check
            _
          $region30: #{multimodal_forward.4} parent=27 // pred_check_branch
            %140 = sbr.rel (0) target = $region32
          $region31: #{multimodal_forward.4} parent=27 // pred_region
            // Predicated region
            $region33: #{multimodal_forward.4} parent=31 // pred_check
              _
            $region34: #{multimodal_forward.4} parent=31 // pred_check_branch
              %142 = sbr.rel (0) target = $region36
            $region35: #{multimodal_forward.4} parent=31 // pred_region
              %s143 = scalar_lea.vmem %s138, 8
              %s144 = scalar_lea.vmem %s134, 8 [#allocation2]
              loop: start=0, step=1, limit=1
              $region37: #{multimodal_forward.4} parent=35 // loop_pre_header
                _
              $region38: #{multimodal_forward.4} parent=35 // loop_header
                %s146 = sphi 0, %s150
                %p147 = scmp.ge.s32.totalorder %s146, 1
                %s151 = sphi %s138, %s138
                %s152 = sphi %s134, %s134
              $region39: #{multimodal_forward.4} parent=35 // loop_header_branch
                %149 = sbr.rel (%p147) target = $region43
              $region40: #{multimodal_forward.4} parent=35 // loop_body
                %v153 = vld [vmem:[%s151] sm:$0xff]
                %154 = vst [vmem:[%s152] sm:$0xff] %v153
                %v155 = vld [vmem:[%s151 + $0xc] sm:$0xff]
                %156 = vst [vmem:[%s152 + $0xc] sm:$0xff] %v155
                %v157 = vld [vmem:[%s151 + $0x18] sm:$0xff]
                %158 = vst [vmem:[%s152 + $0x18] sm:$0xff] %v157
                %v159 = vld [vmem:[%s151 + $0x24] sm:$0xff]
                %160 = vst [vmem:[%s152 + $0x24] sm:$0xff] %v159
                %v161 = vld [vmem:[%s151 + $0x30] sm:$0xff]
                %162 = vst [vmem:[%s152 + $0x30] sm:$0xff] %v161
                %v163 = vld [vmem:[%s151 + $0x3c] sm:$0xff]
                %164 = vst [vmem:[%s152 + $0x3c] sm:$0xff] %v163
                %v165 = vld [vmem:[%s151 + $0x48] sm:$0xff]
                %166 = vst [vmem:[%s152 + $0x48] sm:$0xff] %v165
                %v167 = vld [vmem:[%s151 + $0x54] sm:$0xff]
                %168 = vst [vmem:[%s152 + $0x54] sm:$0xff] %v167
                %v169 = vld [vmem:[%s151 + $0xc0] sm:$0xff]
                %170 = vst [vmem:[%s152 + $0x60] sm:$0xff] %v169
                %v171 = vld [vmem:[%s151 + $0xcc] sm:$0xff]
                %172 = vst [vmem:[%s152 + $0x6c] sm:$0xff] %v171
                %v173 = vld [vmem:[%s151 + $0xd8] sm:$0xff]
                %174 = vst [vmem:[%s152 + $0x78] sm:$0xff] %v173
                %v175 = vld [vmem:[%s151 + $0xe4] sm:$0xff]
                %176 = vst [vmem:[%s152 + $0x84] sm:$0xff] %v175
                %v177 = vld [vmem:[%s151 + $0xf0] sm:$0xff]
                %178 = vst [vmem:[%s152 + $0x90] sm:$0xff] %v177
                %v179 = vld [vmem:[%s151 + $0xfc] sm:$0xff]
                %180 = vst [vmem:[%s152 + $0x9c] sm:$0xff] %v179
                %v181 = vld [vmem:[%s151 + $0x108] sm:$0xff]
                %182 = vst [vmem:[%s152 + $0xa8] sm:$0xff] %v181
                %v183 = vld [vmem:[%s151 + $0x114] sm:$0xff]
                %184 = vst [vmem:[%s152 + $0xb4] sm:$0xff] %v183
                %v185 = vld [vmem:[%s151 + $0x180] sm:$0xff]
                %186 = vst [vmem:[%s152 + $0xc0] sm:$0xff] %v185
                %v187 = vld [vmem:[%s151 + $0x18c] sm:$0xff]
                %188 = vst [vmem:[%s152 + $0xcc] sm:$0xff] %v187
                %v189 = vld [vmem:[%s151 + $0x198] sm:$0xff]
                %190 = vst [vmem:[%s152 + $0xd8] sm:$0xff] %v189
                %v191 = vld [vmem:[%s151 + $0x1a4] sm:$0xff]
                %192 = vst [vmem:[%s152 + $0xe4] sm:$0xff] %v191
                %v193 = vld [vmem:[%s151 + $0x1b0] sm:$0xff]
                %194 = vst [vmem:[%s152 + $0xf0] sm:$0xff] %v193
                %v195 = vld [vmem:[%s151 + $0x1bc] sm:$0xff]
                %196 = vst [vmem:[%s152 + $0xfc] sm:$0xff] %v195
                %v197 = vld [vmem:[%s151 + $0x1c8] sm:$0xff]
                %198 = vst [vmem:[%s152 + $0x108] sm:$0xff] %v197
                %v199 = vld [vmem:[%s151 + $0x1d4] sm:$0xff]
                %200 = vst [vmem:[%s152 + $0x114] sm:$0xff] %v199
                %v201 = vld [vmem:[%s151 + $0x240] sm:$0xff]
                %202 = vst [vmem:[%s152 + $0x120] sm:$0xff] %v201
                %v203 = vld [vmem:[%s151 + $0x24c] sm:$0xff]
                %204 = vst [vmem:[%s152 + $0x12c] sm:$0xff] %v203
                %v205 = vld [vmem:[%s151 + $0x258] sm:$0xff]
                %206 = vst [vmem:[%s152 + $0x138] sm:$0xff] %v205
                %v207 = vld [vmem:[%s151 + $0x264] sm:$0xff]
                %208 = vst [vmem:[%s152 + $0x144] sm:$0xff] %v207
                %v209 = vld [vmem:[%s151 + $0x270] sm:$0xff]
                %210 = vst [vmem:[%s152 + $0x150] sm:$0xff] %v209
                %v211 = vld [vmem:[%s151 + $0x27c] sm:$0xff]
                %212 = vst [vmem:[%s152 + $0x15c] sm:$0xff] %v211
                %v213 = vld [vmem:[%s151 + $0x288] sm:$0xff]
                %214 = vst [vmem:[%s152 + $0x168] sm:$0xff] %v213
                %v215 = vld [vmem:[%s151 + $0x294] sm:$0xff]
                %216 = vst [vmem:[%s152 + $0x174] sm:$0xff] %v215
              $region41: #{multimodal_forward.4} parent=35 // loop_footer
                %s150 = sadd.s32 1, %s146
              $region42: #{multimodal_forward.4} parent=35 // loop_footer_branch
                %145 = sbr.rel target = $region38
              $region43: #{multimodal_forward.4} parent=35 // loop_exit
                _
              loop: start=0, step=1, limit=1
              $region44: #{multimodal_forward.4} parent=35 // loop_pre_header
                _
              $region45: #{multimodal_forward.4} parent=35 // loop_header
                %s219 = sphi 0, %s223
                %p220 = scmp.ge.s32.totalorder %s219, 1
                %s224 = sphi %s143, %s143
                %s225 = sphi %s144, %s144
              $region46: #{multimodal_forward.4} parent=35 // loop_header_branch
                %222 = sbr.rel (%p220) target = $region50
              $region47: #{multimodal_forward.4} parent=35 // loop_body
                %v226 = vld [vmem:[%s224] sm:$0xf]
                %227 = vst [vmem:[%s225] sm:$0xf] %v226
                %v228 = vld [vmem:[%s224 + $0xc] sm:$0xf]
                %229 = vst [vmem:[%s225 + $0xc] sm:$0xf] %v228
                %v230 = vld [vmem:[%s224 + $0x18] sm:$0xf]
                %231 = vst [vmem:[%s225 + $0x18] sm:$0xf] %v230
                %v232 = vld [vmem:[%s224 + $0x24] sm:$0xf]
                %233 = vst [vmem:[%s225 + $0x24] sm:$0xf] %v232
                %v234 = vld [vmem:[%s224 + $0x30] sm:$0xf]
                %235 = vst [vmem:[%s225 + $0x30] sm:$0xf] %v234
                %v236 = vld [vmem:[%s224 + $0x3c] sm:$0xf]
                %237 = vst [vmem:[%s225 + $0x3c] sm:$0xf] %v236
                %v238 = vld [vmem:[%s224 + $0x48] sm:$0xf]
                %239 = vst [vmem:[%s225 + $0x48] sm:$0xf] %v238
                %v240 = vld [vmem:[%s224 + $0x54] sm:$0xf]
                %241 = vst [vmem:[%s225 + $0x54] sm:$0xf] %v240
                %v242 = vld [vmem:[%s224 + $0xc0] sm:$0xf]
                %243 = vst [vmem:[%s225 + $0x60] sm:$0xf] %v242
                %v244 = vld [vmem:[%s224 + $0xcc] sm:$0xf]
                %245 = vst [vmem:[%s225 + $0x6c] sm:$0xf] %v244
                %v246 = vld [vmem:[%s224 + $0xd8] sm:$0xf]
                %247 = vst [vmem:[%s225 + $0x78] sm:$0xf] %v246
                %v248 = vld [vmem:[%s224 + $0xe4] sm:$0xf]
                %249 = vst [vmem:[%s225 + $0x84] sm:$0xf] %v248
                %v250 = vld [vmem:[%s224 + $0xf0] sm:$0xf]
                %251 = vst [vmem:[%s225 + $0x90] sm:$0xf] %v250
                %v252 = vld [vmem:[%s224 + $0xfc] sm:$0xf]
                %253 = vst [vmem:[%s225 + $0x9c] sm:$0xf] %v252
                %v254 = vld [vmem:[%s224 + $0x108] sm:$0xf]
                %255 = vst [vmem:[%s225 + $0xa8] sm:$0xf] %v254
                %v256 = vld [vmem:[%s224 + $0x114] sm:$0xf]
                %257 = vst [vmem:[%s225 + $0xb4] sm:$0xf] %v256
                %v258 = vld [vmem:[%s224 + $0x180] sm:$0xf]
                %259 = vst [vmem:[%s225 + $0xc0] sm:$0xf] %v258
                %v260 = vld [vmem:[%s224 + $0x18c] sm:$0xf]
                %261 = vst [vmem:[%s225 + $0xcc] sm:$0xf] %v260
                %v262 = vld [vmem:[%s224 + $0x198] sm:$0xf]
                %263 = vst [vmem:[%s225 + $0xd8] sm:$0xf] %v262
                %v264 = vld [vmem:[%s224 + $0x1a4] sm:$0xf]
                %265 = vst [vmem:[%s225 + $0xe4] sm:$0xf] %v264
                %v266 = vld [vmem:[%s224 + $0x1b0] sm:$0xf]
                %267 = vst [vmem:[%s225 + $0xf0] sm:$0xf] %v266
                %v268 = vld [vmem:[%s224 + $0x1bc] sm:$0xf]
                %269 = vst [vmem:[%s225 + $0xfc] sm:$0xf] %v268
                %v270 = vld [vmem:[%s224 + $0x1c8] sm:$0xf]
                %271 = vst [vmem:[%s225 + $0x108] sm:$0xf] %v270
                %v272 = vld [vmem:[%s224 + $0x1d4] sm:$0xf]
                %273 = vst [vmem:[%s225 + $0x114] sm:$0xf] %v272
                %v274 = vld [vmem:[%s224 + $0x240] sm:$0xf]
                %275 = vst [vmem:[%s225 + $0x120] sm:$0xf] %v274
                %v276 = vld [vmem:[%s224 + $0x24c] sm:$0xf]
                %277 = vst [vmem:[%s225 + $0x12c] sm:$0xf] %v276
                %v278 = vld [vmem:[%s224 + $0x258] sm:$0xf]
                %279 = vst [vmem:[%s225 + $0x138] sm:$0xf] %v278
                %v280 = vld [vmem:[%s224 + $0x264] sm:$0xf]
                %281 = vst [vmem:[%s225 + $0x144] sm:$0xf] %v280
                %v282 = vld [vmem:[%s224 + $0x270] sm:$0xf]
                %283 = vst [vmem:[%s225 + $0x150] sm:$0xf] %v282
                %v284 = vld [vmem:[%s224 + $0x27c] sm:$0xf]
                %285 = vst [vmem:[%s225 + $0x15c] sm:$0xf] %v284
                %v286 = vld [vmem:[%s224 + $0x288] sm:$0xf]
                %287 = vst [vmem:[%s225 + $0x168] sm:$0xf] %v286
                %v288 = vld [vmem:[%s224 + $0x294] sm:$0xf]
                %289 = vst [vmem:[%s225 + $0x174] sm:$0xf] %v288
              $region48: #{multimodal_forward.4} parent=35 // loop_footer
                %s223 = sadd.s32 1, %s219
              $region49: #{multimodal_forward.4} parent=35 // loop_footer_branch
                %218 = sbr.rel target = $region45
              $region50: #{multimodal_forward.4} parent=35 // loop_exit
                _
            $region36: #{multimodal_forward.4} parent=31 // pred_fallthru
              _
          $region32: #{multimodal_forward.4} parent=27 // pred_fallthru
            _
          %290 = vnop
        $region28: #{multimodal_forward.4} parent=23 // pred_fallthru
          _
      $region24: #{multimodal_forward.4} parent=5 // pred_fallthru
        _
      %p291 = scmp.le.s32.totalorder 1, %s9
      %p292 = scmp.lt.s32.totalorder %s9, 3
      %p293 = pnand %p291, %p292
      %p294 = pneg %p293
      // Predicated region
      $region51: #{multimodal_forward.4} parent=5 // pred_check
        _
      $region52: #{multimodal_forward.4} parent=5 // pred_check_branch
        %296 = sbr.rel (%p293) target = $region54
      $region53: #{multimodal_forward.4} parent=5 // pred_region
        %s297 = ssub.s32 %s9, 1
        %s298 = sand.u32 %s22, 1
        %s299 = sand.u32 %s22, 1
        %s300 = smul.addr %s299, 384
        %s301 = scalar_lea.vmem [#allocation2], %s300
        // Predicated region
        $region55: #{multimodal_forward.4} parent=53 // pred_check
          %p302 = pneg %p35
        $region56: #{multimodal_forward.4} parent=53 // pred_check_branch
          %304 = sbr.rel (%p302) target = $region58
        $region57: #{multimodal_forward.4} parent=53 // pred_region
          _
        $region58: #{multimodal_forward.4} parent=53 // pred_fallthru
          _
        %s305 = sand.u32 %s22, 1
        %s306 = sand.u32 %s22, 1
        %s307 = smul.addr %s306, 384
        %s308 = scalar_lea.vmem [#allocation2], %s307
        %p309 = pneg %p35
        %p310 = pneg %p32
        %p311 = pneg %p56
        %p312 = pneg %p53
        %p313 = pneg %p77
        %p314 = pneg %p74
        %p315 = pneg %p103
        %p316 = pneg %p100
        %s317 = smul.u32 8, %s14
        %p318 = scmp.lt.s32.totalorder %s317, 15
        %s319 = scalar_select %p318, %s317, 15
        %s320 = smul.addr %s319, 4
        %s321 = scalar_lea.vmem %s3, %s320
        %s322 = smul.u32 8, %s14
        %s323 = smul.u32 8, %s14
        %p324 = scmp.lt.s32.totalorder %s323, 15
        %s325 = scalar_select %p324, %s323, 15
        %s326 = smul.addr %s325, 4
        %s327 = scalar_lea.vmem %s3, %s326
        %s328 = smul.u32 8, %s14
        %v330 = vld [vmem:[%s301] sm:$0xff]
        %v331 = vld [vmem:[%s301 + $0x8] sm:$0xf]
        %v332 = vld [vmem:[%s301 + $0xc] sm:$0xff]
        %v333 = vld [vmem:[%s301 + $0x14] sm:$0xf]
        %v334 = vld [vmem:[%s301 + $0x18] sm:$0xff]
        %v335 = vld [vmem:[%s301 + $0x20] sm:$0xf]
        %v336 = vld [vmem:[%s301 + $0x24] sm:$0xff]
        %v337 = vld [vmem:[%s301 + $0x2c] sm:$0xf]
        %v338 = vld [vmem:[%s301 + $0x30] sm:$0xff]
        %v339 = vld [vmem:[%s301 + $0x38] sm:$0xf]
        %v340 = vld [vmem:[%s301 + $0x3c] sm:$0xff]
        %v341 = vld [vmem:[%s301 + $0x44] sm:$0xf]
        %v342 = vld [vmem:[%s301 + $0x48] sm:$0xff]
        %v343 = vld [vmem:[%s301 + $0x50] sm:$0xf]
        %v344 = vld [vmem:[%s301 + $0x54] sm:$0xff]
        %v345 = vld [vmem:[%s301 + $0x5c] sm:$0xf]
        %v346 = vld [vmem:[%s301 + $0x60] sm:$0xff]
        %v347 = vld [vmem:[%s301 + $0x68] sm:$0xf]
        %v348 = vld [vmem:[%s301 + $0x6c] sm:$0xff]
        %v349 = vld [vmem:[%s301 + $0x74] sm:$0xf]
        %v350 = vld [vmem:[%s301 + $0x78] sm:$0xff]
        %v351 = vld [vmem:[%s301 + $0x80] sm:$0xf]
        %v352 = vld [vmem:[%s301 + $0x84] sm:$0xff]
        %v353 = vld [vmem:[%s301 + $0x8c] sm:$0xf]
        %v354 = vld [vmem:[%s301 + $0x90] sm:$0xff]
        %v355 = vld [vmem:[%s301 + $0x98] sm:$0xf]
        %v356 = vld [vmem:[%s301 + $0x9c] sm:$0xff]
        %v357 = vld [vmem:[%s301 + $0xa4] sm:$0xf]
        %v358 = vld [vmem:[%s301 + $0xa8] sm:$0xff]
        %v359 = vld [vmem:[%s301 + $0xb0] sm:$0xf]
        %v360 = vld [vmem:[%s301 + $0xb4] sm:$0xff]
        %v361 = vld [vmem:[%s301 + $0xbc] sm:$0xf]
        %v362 = vld [vmem:[%s301 + $0xc0] sm:$0xff]
        %v363 = vld [vmem:[%s301 + $0xc8] sm:$0xf]
        %v364 = vld [vmem:[%s301 + $0xcc] sm:$0xff]
        %v365 = vld [vmem:[%s301 + $0xd4] sm:$0xf]
        %v366 = vld [vmem:[%s301 + $0xd8] sm:$0xff]
        %v367 = vld [vmem:[%s301 + $0xe0] sm:$0xf]
        %v368 = vld [vmem:[%s301 + $0xe4] sm:$0xff]
        %v369 = vld [vmem:[%s301 + $0xec] sm:$0xf]
        %v370 = vld [vmem:[%s301 + $0xf0] sm:$0xff]
        %v371 = vld [vmem:[%s301 + $0xf8] sm:$0xf]
        %v372 = vld [vmem:[%s301 + $0xfc] sm:$0xff]
        %v373 = vld [vmem:[%s301 + $0x104] sm:$0xf]
        %v374 = vld [vmem:[%s301 + $0x108] sm:$0xff]
        %v375 = vld [vmem:[%s301 + $0x110] sm:$0xf]
        %v376 = vld [vmem:[%s301 + $0x114] sm:$0xff]
        %v377 = vld [vmem:[%s301 + $0x11c] sm:$0xf]
        %v378 = vld [vmem:[%s301 + $0x120] sm:$0xff]
        %v379 = vld [vmem:[%s301 + $0x128] sm:$0xf]
        %v380 = vld [vmem:[%s301 + $0x12c] sm:$0xff]
        %v381 = vld [vmem:[%s301 + $0x134] sm:$0xf]
        %v382 = vld [vmem:[%s301 + $0x138] sm:$0xff]
        %v383 = vld [vmem:[%s301 + $0x140] sm:$0xf]
        %v384 = vld [vmem:[%s301 + $0x144] sm:$0xff]
        %v385 = vld [vmem:[%s301 + $0x14c] sm:$0xf]
        %v386 = vld [vmem:[%s301 + $0x150] sm:$0xff]
        %v387 = vld [vmem:[%s301 + $0x158] sm:$0xf]
        %v388 = vld [vmem:[%s301 + $0x15c] sm:$0xff]
        %v389 = vld [vmem:[%s301 + $0x164] sm:$0xf]
        %v390 = vld [vmem:[%s301 + $0x168] sm:$0xff]
        %v391 = vld [vmem:[%s301 + $0x170] sm:$0xf]
        %v392 = vld [vmem:[%s301 + $0x174] sm:$0xff]
        %v393 = vld [vmem:[%s301 + $0x17c] sm:$0xf]
        %v394 = vld [vmem:[%s1] sm:$0xf]
        %v395 = vld [vmem:[%s1 + $0x4] sm:$0xf]
        %v396 = vld [vmem:[%s1 + $0x8] sm:$0xf]
        %v397 = vld [vmem:[%s1 + $0xc] sm:$0xf]
        %v398 = vld [vmem:[%s1 + $0x10] sm:$0xf]
        %v399 = vld [vmem:[%s1 + $0x14] sm:$0xf]
        %v400 = vld [vmem:[%s1 + $0x18] sm:$0xf]
        %v401 = vld [vmem:[%s1 + $0x1c] sm:$0xf]
        %v402 = vld [vmem:[%s1 + $0x20] sm:$0xf]
        %v403 = vld [vmem:[%s1 + $0x24] sm:$0xf]
        %v404 = vld [vmem:[%s1 + $0x28] sm:$0xf]
        %v405 = vld [vmem:[%s1 + $0x2c] sm:$0xf]
        %v406 = vld [vmem:[%s1 + $0x30] sm:$0xf]
        %v407 = vld [vmem:[%s1 + $0x34] sm:$0xf]
        %v408 = vld [vmem:[%s1 + $0x38] sm:$0xf]
        %v409 = vld [vmem:[%s1 + $0x3c] sm:$0xf]
        %v410 = vld [vmem:[%s1 + $0x40] sm:$0xf]
        %v411 = vld [vmem:[%s1 + $0x44] sm:$0xf]
        %v412 = vld [vmem:[%s1 + $0x48] sm:$0xf]
        %v413 = vld [vmem:[%s1 + $0x4c] sm:$0xf]
        %v414 = vld [vmem:[%s1 + $0x50] sm:$0xf]
        %v415 = vld [vmem:[%s1 + $0x54] sm:$0xf]
        %v416 = vld [vmem:[%s1 + $0x58] sm:$0xf]
        %v417 = vld [vmem:[%s1 + $0x5c] sm:$0xf]
        %v418 = vld [vmem:[%s1 + $0x60] sm:$0xf]
        %v419 = vld [vmem:[%s1 + $0x64] sm:$0xf]
        %v420 = vld [vmem:[%s1 + $0x68] sm:$0xf]
        %v421 = vld [vmem:[%s1 + $0x6c] sm:$0xf]
        %v422 = vld [vmem:[%s1 + $0x70] sm:$0xf]
        %v423 = vld [vmem:[%s1 + $0x74] sm:$0xf]
        %v424 = vld [vmem:[%s1 + $0x78] sm:$0xf]
        %v425 = vld [vmem:[%s1 + $0x7c] sm:$0xf]
        %v426 = vld [vmem:[%s1 + $0x80] sm:$0xf]
        %v427 = vld [vmem:[%s1 + $0x84] sm:$0xf]
        %v428 = vld [vmem:[%s1 + $0x88] sm:$0xf]
        %v429 = vld [vmem:[%s1 + $0x8c] sm:$0xf]
        %v494 = vunpack.c.l.b16 %v330
        %v495 = vunpack.c.h.b16 %v330
        %v496 = vunpack.c.l.b16 %v331
        %v497 = vunpack.c.l.b16 %v332
        %v498 = vunpack.c.h.b16 %v332
        %v499 = vunpack.c.l.b16 %v333
        %v500 = vunpack.c.l.b16 %v334
        %v501 = vunpack.c.h.b16 %v334
        %v502 = vunpack.c.l.b16 %v335
        %v503 = vunpack.c.l.b16 %v336
        %v504 = vunpack.c.h.b16 %v336
        %v505 = vunpack.c.l.b16 %v337
        %v506 = vunpack.c.l.b16 %v338
        %v507 = vunpack.c.h.b16 %v338
        %v508 = vunpack.c.l.b16 %v339
        %v509 = vunpack.c.l.b16 %v340
        %v510 = vunpack.c.h.b16 %v340
        %v511 = vunpack.c.l.b16 %v341
        %v512 = vunpack.c.l.b16 %v342
        %v513 = vunpack.c.h.b16 %v342
        %v514 = vunpack.c.l.b16 %v343
        %v515 = vunpack.c.l.b16 %v344
        %v516 = vunpack.c.h.b16 %v344
        %v517 = vunpack.c.l.b16 %v345
        %v518 = vunpack.c.l.b16 %v346
        %v519 = vunpack.c.h.b16 %v346
        %v520 = vunpack.c.l.b16 %v347
        %v521 = vunpack.c.l.b16 %v348
        %v522 = vunpack.c.h.b16 %v348
        %v523 = vunpack.c.l.b16 %v349
        %v524 = vunpack.c.l.b16 %v350
        %v525 = vunpack.c.h.b16 %v350
        %v526 = vunpack.c.l.b16 %v351
        %v527 = vunpack.c.l.b16 %v352
        %v528 = vunpack.c.h.b16 %v352
        %v529 = vunpack.c.l.b16 %v353
        %v530 = vunpack.c.l.b16 %v354
        %v531 = vunpack.c.h.b16 %v354
        %v532 = vunpack.c.l.b16 %v355
        %v533 = vunpack.c.l.b16 %v356
        %v534 = vunpack.c.h.b16 %v356
        %v535 = vunpack.c.l.b16 %v357
        %v536 = vunpack.c.l.b16 %v358
        %v537 = vunpack.c.h.b16 %v358
        %v538 = vunpack.c.l.b16 %v359
        %v539 = vunpack.c.l.b16 %v360
        %v540 = vunpack.c.h.b16 %v360
        %v541 = vunpack.c.l.b16 %v361
        %v542 = vunpack.c.l.b16 %v362
        %v543 = vunpack.c.h.b16 %v362
        %v544 = vunpack.c.l.b16 %v363
        %v545 = vunpack.c.l.b16 %v364
        %v546 = vunpack.c.h.b16 %v364
        %v547 = vunpack.c.l.b16 %v365
        %v548 = vunpack.c.l.b16 %v366
        %v549 = vunpack.c.h.b16 %v366
        %v550 = vunpack.c.l.b16 %v367
        %v551 = vunpack.c.l.b16 %v368
        %v552 = vunpack.c.h.b16 %v368
        %v553 = vunpack.c.l.b16 %v369
        %v554 = vunpack.c.l.b16 %v370
        %v555 = vunpack.c.h.b16 %v370
        %v556 = vunpack.c.l.b16 %v371
        %v557 = vunpack.c.l.b16 %v372
        %v558 = vunpack.c.h.b16 %v372
        %v559 = vunpack.c.l.b16 %v373
        %v560 = vunpack.c.l.b16 %v374
        %v561 = vunpack.c.h.b16 %v374
        %v562 = vunpack.c.l.b16 %v375
        %v563 = vunpack.c.l.b16 %v376
        %v564 = vunpack.c.h.b16 %v376
        %v565 = vunpack.c.l.b16 %v377
        %v566 = vunpack.c.l.b16 %v378
        %v567 = vunpack.c.h.b16 %v378
        %v568 = vunpack.c.l.b16 %v379
        %v569 = vunpack.c.l.b16 %v380
        %v570 = vunpack.c.h.b16 %v380
        %v571 = vunpack.c.l.b16 %v381
        %v572 = vunpack.c.l.b16 %v382
        %v573 = vunpack.c.h.b16 %v382
        %v574 = vunpack.c.l.b16 %v383
        %v575 = vunpack.c.l.b16 %v384
        %v576 = vunpack.c.h.b16 %v384
        %v577 = vunpack.c.l.b16 %v385
        %v578 = vunpack.c.l.b16 %v386
        %v579 = vunpack.c.h.b16 %v386
        %v580 = vunpack.c.l.b16 %v387
        %v581 = vunpack.c.l.b16 %v388
        %v582 = vunpack.c.h.b16 %v388
        %v583 = vunpack.c.l.b16 %v389
        %v584 = vunpack.c.l.b16 %v390
        %v585 = vunpack.c.h.b16 %v390
        %v586 = vunpack.c.l.b16 %v391
        %v587 = vunpack.c.l.b16 %v392
        %v588 = vunpack.c.h.b16 %v392
        %v589 = vunpack.c.l.b16 %v393
        %v590 = vpack.c.b16 %v497, %v494
        %v591 = vpack.c.b16 %v498, %v495
        %v592 = vpack.c.b16 %v499, %v496
        %v593 = vpack.c.b16 %v503, %v500
        %v594 = vpack.c.b16 %v504, %v501
        %v595 = vpack.c.b16 %v505, %v502
        %v596 = vpack.c.b16 %v509, %v506
        %v597 = vpack.c.b16 %v510, %v507
        %v598 = vpack.c.b16 %v511, %v508
        %v599 = vpack.c.b16 %v515, %v512
        %v600 = vpack.c.b16 %v516, %v513
        %v601 = vpack.c.b16 %v517, %v514
        %v602 = vpack.c.b16 %v521, %v518
        %v603 = vpack.c.b16 %v522, %v519
        %v604 = vpack.c.b16 %v523, %v520
        %v605 = vpack.c.b16 %v527, %v524
        %v606 = vpack.c.b16 %v528, %v525
        %v607 = vpack.c.b16 %v529, %v526
        %v608 = vpack.c.b16 %v533, %v530
        %v609 = vpack.c.b16 %v534, %v531
        %v610 = vpack.c.b16 %v535, %v532
        %v611 = vpack.c.b16 %v539, %v536
        %v612 = vpack.c.b16 %v540, %v537
        %v613 = vpack.c.b16 %v541, %v538
        %v614 = vpack.c.b16 %v545, %v542
        %v615 = vpack.c.b16 %v546, %v543
        %v616 = vpack.c.b16 %v547, %v544
        %v617 = vpack.c.b16 %v551, %v548
        %v618 = vpack.c.b16 %v552, %v549
        %v619 = vpack.c.b16 %v553, %v550
        %v620 = vpack.c.b16 %v557, %v554
        %v621 = vpack.c.b16 %v558, %v555
        %v622 = vpack.c.b16 %v559, %v556
        %v623 = vpack.c.b16 %v563, %v560
        %v624 = vpack.c.b16 %v564, %v561
        %v625 = vpack.c.b16 %v565, %v562
        %v626 = vpack.c.b16 %v569, %v566
        %v627 = vpack.c.b16 %v570, %v567
        %v628 = vpack.c.b16 %v571, %v568
        %v629 = vpack.c.b16 %v575, %v572
        %v630 = vpack.c.b16 %v576, %v573
        %v631 = vpack.c.b16 %v577, %v574
        %v632 = vpack.c.b16 %v581, %v578
        %v633 = vpack.c.b16 %v582, %v579
        %v634 = vpack.c.b16 %v583, %v580
        %v635 = vpack.c.b16 %v587, %v584
        %v636 = vpack.c.b16 %v588, %v585
        %v637 = vpack.c.b16 %v589, %v586
        %v706 = vunpack.c.l.b16 %v394
        %v707 = vunpack.c.l.b16 %v395
        %v708 = vunpack.c.l.b16 %v396
        %v709 = vunpack.c.l.b16 %v397
        %v710 = vunpack.c.l.b16 %v398
        %v711 = vunpack.c.l.b16 %v399
        %v712 = vunpack.c.l.b16 %v400
        %v713 = vunpack.c.l.b16 %v401
        %v714 = vunpack.c.l.b16 %v402
        %v715 = vunpack.c.l.b16 %v403
        %v716 = vunpack.c.l.b16 %v404
        %v717 = vunpack.c.l.b16 %v405
        %v718 = vunpack.c.l.b16 %v406
        %v719 = vunpack.c.l.b16 %v407
        %v720 = vunpack.c.l.b16 %v408
        %v721 = vunpack.c.l.b16 %v409
        %v722 = vunpack.c.l.b16 %v410
        %v723 = vunpack.c.l.b16 %v411
        %v724 = vunpack.c.l.b16 %v412
        %v725 = vunpack.c.l.b16 %v413
        %v726 = vunpack.c.l.b16 %v414
        %v727 = vunpack.c.l.b16 %v415
        %v728 = vunpack.c.l.b16 %v416
        %v729 = vunpack.c.l.b16 %v417
        %v730 = vunpack.c.l.b16 %v418
        %v731 = vunpack.c.l.b16 %v419
        %v732 = vunpack.c.l.b16 %v420
        %v733 = vunpack.c.l.b16 %v421
        %v734 = vunpack.c.l.b16 %v422
        %v735 = vunpack.c.l.b16 %v423
        %v736 = vunpack.c.l.b16 %v424
        %v737 = vunpack.c.l.b16 %v425
        %v738 = vunpack.c.l.b16 %v426
        %v739 = vunpack.c.l.b16 %v427
        %v740 = vunpack.c.l.b16 %v428
        %v741 = vunpack.c.l.b16 %v429
        %v742 = vpack.c.b16 %v707, %v706
        %v743 = vpack.c.b16 %v709, %v708
        %v744 = vpack.c.b16 %v711, %v710
        %v745 = vpack.c.b16 %v713, %v712
        %v746 = vpack.c.b16 %v715, %v714
        %v747 = vpack.c.b16 %v717, %v716
        %v748 = vpack.c.b16 %v719, %v718
        %v749 = vpack.c.b16 %v721, %v720
        %v750 = vpack.c.b16 %v723, %v722
        %v751 = vpack.c.b16 %v725, %v724
        %v752 = vpack.c.b16 %v727, %v726
        %v753 = vpack.c.b16 %v729, %v728
        %v754 = vpack.c.b16 %v731, %v730
        %v755 = vpack.c.b16 %v733, %v732
        %v756 = vpack.c.b16 %v735, %v734
        %v757 = vpack.c.b16 %v737, %v736
        %v758 = vpack.c.b16 %v739, %v738
        %v759 = vpack.c.b16 %v741, %v740
        %vm778 = vcmask 261120
        %v780 = vsel %vm778, %v592, 0
        %v783 = vsel %vm778, %v595, 0
        %v786 = vsel %vm778, %v598, 0
        %v789 = vsel %vm778, %v601, 0
        %v792 = vsel %vm778, %v604, 0
        %v795 = vsel %vm778, %v607, 0
        %v798 = vsel %vm778, %v610, 0
        %v801 = vsel %vm778, %v613, 0
        %v804 = vsel %vm778, %v616, 0
        %v807 = vsel %vm778, %v619, 0
        %v810 = vsel %vm778, %v622, 0
        %v813 = vsel %vm778, %v625, 0
        %v816 = vsel %vm778, %v628, 0
        %v819 = vsel %vm778, %v631, 0
        %v822 = vsel %vm778, %v634, 0
        %v825 = vsel %vm778, %v637, 0
        %827 = vmatprep.subr.bf16.mxu0 0
        %828 = vmatpush1.bf16.msra.mxu0 %v742
        %829 = vmatprep.subr.bf16.mxu0 0
        %830 = vmatpush1.bf16.msra.mxu0 %v743
        %831 = vmatprep.subr.bf16.mxu0 0
        %832 = vmatpush1.bf16.msra.mxu0 %v744
        %833 = vmatprep.subr.bf16.mxu0 0
        %834 = vmatpush1.bf16.msra.mxu0 %v745
        %835 = vmatprep.subr.bf16.mxu0 0
        %836 = vmatpush1.bf16.msra.mxu0 %v746
        %837 = vmatprep.subr.bf16.mxu0 0
        %838 = vmatpush1.bf16.msra.mxu0 %v747
        %839 = vmatprep.subr.bf16.mxu0 0
        %840 = vmatpush1.bf16.msra.mxu0 %v748
        %841 = vmatprep.subr.bf16.mxu0 0
        %842 = vmatpush1.bf16.msra.mxu0 %v749
        %843 = vmatprep.subr.bf16.mxu0 0
        %844 = vmatpush1.bf16.msra.mxu0 %v750
        %845 = vmatprep.subr.bf16.mxu0 0
        %846 = vmatpush1.bf16.msra.mxu0 %v751
        %847 = vmatprep.subr.bf16.mxu0 0
        %848 = vmatpush1.bf16.msra.mxu0 %v752
        %849 = vmatprep.subr.bf16.mxu0 0
        %850 = vmatpush1.bf16.msra.mxu0 %v753
        %851 = vmatprep.subr.bf16.mxu0 0
        %852 = vmatpush1.bf16.msra.mxu0 %v754
        %853 = vmatprep.subr.bf16.mxu0 0
        %854 = vmatpush1.bf16.msra.mxu0 %v755
        %855 = vmatprep.subr.bf16.mxu0 0
        %856 = vmatpush1.bf16.msra.mxu0 %v756
        %857 = vmatprep.subr.bf16.mxu0 0
        %858 = vmatpush1.bf16.msra.mxu0 %v757
        %859 = vmatprep.mubr.bf16.mxu0 %v591
        %860 = vmatmul.mubr.bf16.gmra.mrb[0].mxu0 %v590
        %v861 = vpop.f32.mrb[0].mxu0
        %v862 = vadd.f32 0.0, %v861
        %v863 = vpop.f32.mrb[0].mxu0
        %v864 = vpop.f32.mrb[0].mxu0
        %v865 = vadd.f32 0.0, %v864
        %v866 = vpop.f32.mrb[0].mxu0
        %867 = vmatprep.mubr.bf16.mxu0 %v594
        %868 = vmatmul.mubr.bf16.gmra.mrb[0].mxu0 %v593
        %v869 = vpop.f32.mrb[0].mxu0
        %v870 = vadd.f32 0.0, %v869
        %v871 = vpop.f32.mrb[0].mxu0
        %v872 = vpop.f32.mrb[0].mxu0
        %v873 = vadd.f32 0.0, %v872
        %v874 = vpop.f32.mrb[0].mxu0
        %875 = vmatprep.mubr.bf16.mxu0 %v597
        %876 = vmatmul.mubr.bf16.gmra.mrb[0].mxu0 %v596
        %v877 = vpop.f32.mrb[0].mxu0
        %v878 = vadd.f32 0.0, %v877
        %v879 = vpop.f32.mrb[0].mxu0
        %v880 = vpop.f32.mrb[0].mxu0
        %v881 = vadd.f32 0.0, %v880
        %v882 = vpop.f32.mrb[0].mxu0
        %883 = vmatprep.mubr.bf16.mxu0 %v600
        %884 = vmatmul.mubr.bf16.gmra.mrb[0].mxu0 %v599
        %v885 = vpop.f32.mrb[0].mxu0
        %v886 = vadd.f32 0.0, %v885
        %v887 = vpop.f32.mrb[0].mxu0
        %v888 = vpop.f32.mrb[0].mxu0
        %v889 = vadd.f32 0.0, %v888
        %v890 = vpop.f32.mrb[0].mxu0
        %891 = vmatprep.mubr.bf16.mxu0 %v603
        %892 = vmatmul.mubr.bf16.gmra.mrb[0].mxu0 %v602
        %v893 = vpop.f32.mrb[0].mxu0
        %v894 = vadd.f32 0.0, %v893
        %v895 = vpop.f32.mrb[0].mxu0
        %v896 = vpop.f32.mrb[0].mxu0
        %v897 = vadd.f32 0.0, %v896
        %v898 = vpop.f32.mrb[0].mxu0
        %899 = vmatprep.mubr.bf16.mxu0 %v606
        %900 = vmatmul.mubr.bf16.gmra.mrb[0].mxu0 %v605
        %v901 = vpop.f32.mrb[0].mxu0
        %v902 = vadd.f32 0.0, %v901
        %v903 = vpop.f32.mrb[0].mxu0
        %v904 = vpop.f32.mrb[0].mxu0
        %v905 = vadd.f32 0.0, %v904
        %v906 = vpop.f32.mrb[0].mxu0
        %907 = vmatprep.mubr.bf16.mxu0 %v609
        %908 = vmatmul.mubr.bf16.gmra.mrb[0].mxu0 %v608
        %v909 = vpop.f32.mrb[0].mxu0
        %v910 = vadd.f32 0.0, %v909
        %v911 = vpop.f32.mrb[0].mxu0
        %v912 = vpop.f32.mrb[0].mxu0
        %v913 = vadd.f32 0.0, %v912
        %v914 = vpop.f32.mrb[0].mxu0
        %915 = vmatprep.mubr.bf16.mxu0 %v612
        %916 = vmatmul.mubr.bf16.gmra.mrb[0].mxu0 %v611
        %v917 = vpop.f32.mrb[0].mxu0
        %v918 = vadd.f32 0.0, %v917
        %v919 = vpop.f32.mrb[0].mxu0
        %v920 = vpop.f32.mrb[0].mxu0
        %v921 = vadd.f32 0.0, %v920
        %v922 = vpop.f32.mrb[0].mxu0
        %923 = vmatprep.mubr.bf16.mxu0 %v615
        %924 = vmatmul.mubr.bf16.gmra.mrb[0].mxu0 %v614
        %v925 = vpop.f32.mrb[0].mxu0
        %v926 = vadd.f32 0.0, %v925
        %v927 = vpop.f32.mrb[0].mxu0
        %v928 = vpop.f32.mrb[0].mxu0
        %v929 = vadd.f32 0.0, %v928
        %v930 = vpop.f32.mrb[0].mxu0
        %931 = vmatprep.mubr.bf16.mxu0 %v618
        %932 = vmatmul.mubr.bf16.gmra.mrb[0].mxu0 %v617
        %v933 = vpop.f32.mrb[0].mxu0
        %v934 = vadd.f32 0.0, %v933
        %v935 = vpop.f32.mrb[0].mxu0
        %v936 = vpop.f32.mrb[0].mxu0
        %v937 = vadd.f32 0.0, %v936
        %v938 = vpop.f32.mrb[0].mxu0
        %939 = vmatprep.mubr.bf16.mxu0 %v621
        %940 = vmatmul.mubr.bf16.gmra.mrb[0].mxu0 %v620
        %v941 = vpop.f32.mrb[0].mxu0
        %v942 = vadd.f32 0.0, %v941
        %v943 = vpop.f32.mrb[0].mxu0
        %v944 = vpop.f32.mrb[0].mxu0
        %v945 = vadd.f32 0.0, %v944
        %v946 = vpop.f32.mrb[0].mxu0
        %947 = vmatprep.mubr.bf16.mxu0 %v624
        %948 = vmatmul.mubr.bf16.gmra.mrb[0].mxu0 %v623
        %v949 = vpop.f32.mrb[0].mxu0
        %v950 = vadd.f32 0.0, %v949
        %v951 = vpop.f32.mrb[0].mxu0
        %v952 = vpop.f32.mrb[0].mxu0
        %v953 = vadd.f32 0.0, %v952
        %v954 = vpop.f32.mrb[0].mxu0
        %955 = vmatprep.mubr.bf16.mxu0 %v627
        %956 = vmatmul.mubr.bf16.gmra.mrb[0].mxu0 %v626
        %v957 = vpop.f32.mrb[0].mxu0
        %v958 = vadd.f32 0.0, %v957
        %v959 = vpop.f32.mrb[0].mxu0
        %v960 = vpop.f32.mrb[0].mxu0
        %v961 = vadd.f32 0.0, %v960
        %v962 = vpop.f32.mrb[0].mxu0
        %963 = vmatprep.mubr.bf16.mxu0 %v630
        %964 = vmatmul.mubr.bf16.gmra.mrb[0].mxu0 %v629
        %v965 = vpop.f32.mrb[0].mxu0
        %v966 = vadd.f32 0.0, %v965
        %v967 = vpop.f32.mrb[0].mxu0
        %v968 = vpop.f32.mrb[0].mxu0
        %v969 = vadd.f32 0.0, %v968
        %v970 = vpop.f32.mrb[0].mxu0
        %971 = vmatprep.mubr.bf16.mxu0 %v633
        %972 = vmatmul.mubr.bf16.gmra.mrb[0].mxu0 %v632
        %v973 = vpop.f32.mrb[0].mxu0
        %v974 = vadd.f32 0.0, %v973
        %v975 = vpop.f32.mrb[0].mxu0
        %v976 = vpop.f32.mrb[0].mxu0
        %v977 = vadd.f32 0.0, %v976
        %v978 = vpop.f32.mrb[0].mxu0
        %979 = vmatprep.mubr.bf16.mxu0 %v636
        %980 = vmatmul.mubr.bf16.gmra.mrb[0].mxu0 %v635
        %v981 = vpop.f32.mrb[0].mxu0
        %v982 = vadd.f32 0.0, %v981
        %v983 = vpop.f32.mrb[0].mxu0
        %v984 = vpop.f32.mrb[0].mxu0
        %v985 = vadd.f32 0.0, %v984
        %v986 = vpop.f32.mrb[0].mxu0
        %987 = vdwg.mxu0
        %988 = vmatprep.subr.bf16.mxu0 0
        %989 = vmatpush1.bf16.msra.mxu0 %v758
        %990 = vmatprep.subr.bf16.mxu0 0
        %991 = vmatpush1.bf16.msra.mxu0 %v759
        %992 = vmatprep.subr.bf16.mxu0 0
        %993 = vmatpush1.bf16.msra.mxu0 0
        %994 = vmatprep.subr.bf16.mxu0 0
        %995 = vmatpush1.bf16.msra.mxu0 0
        %996 = vmatprep.subr.bf16.mxu0 0
        %997 = vmatpush1.bf16.msra.mxu0 0
        %998 = vmatprep.subr.bf16.mxu0 0
        %999 = vmatpush1.bf16.msra.mxu0 0
        %1000 = vmatprep.subr.bf16.mxu0 0
        %1001 = vmatpush1.bf16.msra.mxu0 0
        %1002 = vmatprep.subr.bf16.mxu0 0
        %1003 = vmatpush1.bf16.msra.mxu0 0
        %1004 = vmatprep.subr.bf16.mxu0 0
        %1005 = vmatpush1.bf16.msra.mxu0 0
        %1006 = vmatprep.subr.bf16.mxu0 0
        %1007 = vmatpush1.bf16.msra.mxu0 0
        %1008 = vmatprep.subr.bf16.mxu0 0
        %1009 = vmatpush1.bf16.msra.mxu0 0
        %1010 = vmatprep.subr.bf16.mxu0 0
        %1011 = vmatpush1.bf16.msra.mxu0 0
        %1012 = vmatprep.subr.bf16.mxu0 0
        %1013 = vmatpush1.bf16.msra.mxu0 0
        %1014 = vmatprep.subr.bf16.mxu0 0
        %1015 = vmatpush1.bf16.msra.mxu0 0
        %1016 = vmatprep.subr.bf16.mxu0 0
        %1017 = vmatpush1.bf16.msra.mxu0 0
        %1018 = vmatprep.subr.bf16.mxu0 0
        %1019 = vmatpush1.bf16.msra.mxu0 0
        %1020 = vmatprep.mubr.bf16.mxu0 0
        %1021 = vmatmul.mubr.bf16.gmra.mrb[0].mxu0 %v780
        %v1022 = vpop.f32.mrb[0].mxu0
        %v1023 = vadd.f32 %v862, %v1022
        %v1024 = vpop.f32.mrb[0].mxu0
        %v1025 = vpop.f32.mrb[0].mxu0
        %v1026 = vadd.f32 %v865, %v1025
        %v1027 = vpop.f32.mrb[0].mxu0
        %1028 = vmatprep.mubr.bf16.mxu0 0
        %1029 = vmatmul.mubr.bf16.gmra.mrb[0].mxu0 %v783
        %v1030 = vpop.f32.mrb[0].mxu0
        %v1031 = vadd.f32 %v870, %v1030
        %v1032 = vpop.f32.mrb[0].mxu0
        %v1033 = vpop.f32.mrb[0].mxu0
        %v1034 = vadd.f32 %v873, %v1033
        %v1035 = vpop.f32.mrb[0].mxu0
        %1036 = vmatprep.mubr.bf16.mxu0 0
        %1037 = vmatmul.mubr.bf16.gmra.mrb[0].mxu0 %v786
        %v1038 = vpop.f32.mrb[0].mxu0
        %v1039 = vadd.f32 %v878, %v1038
        %v1040 = vpop.f32.mrb[0].mxu0
        %v1041 = vpop.f32.mrb[0].mxu0
        %v1042 = vadd.f32 %v881, %v1041
        %v1043 = vpop.f32.mrb[0].mxu0
        %1044 = vmatprep.mubr.bf16.mxu0 0
        %1045 = vmatmul.mubr.bf16.gmra.mrb[0].mxu0 %v789
        %v1046 = vpop.f32.mrb[0].mxu0
        %v1047 = vadd.f32 %v886, %v1046
        %v1048 = vpop.f32.mrb[0].mxu0
        %v1049 = vpop.f32.mrb[0].mxu0
        %v1050 = vadd.f32 %v889, %v1049
        %v1051 = vpop.f32.mrb[0].mxu0
        %1052 = vmatprep.mubr.bf16.mxu0 0
        %1053 = vmatmul.mubr.bf16.gmra.mrb[0].mxu0 %v792
        %v1054 = vpop.f32.mrb[0].mxu0
        %v1055 = vadd.f32 %v894, %v1054
        %v1056 = vpop.f32.mrb[0].mxu0
        %v1057 = vpop.f32.mrb[0].mxu0
        %v1058 = vadd.f32 %v897, %v1057
        %v1059 = vpop.f32.mrb[0].mxu0
        %1060 = vmatprep.mubr.bf16.mxu0 0
        %1061 = vmatmul.mubr.bf16.gmra.mrb[0].mxu0 %v795
        %v1062 = vpop.f32.mrb[0].mxu0
        %v1063 = vadd.f32 %v902, %v1062
        %v1064 = vpop.f32.mrb[0].mxu0
        %v1065 = vpop.f32.mrb[0].mxu0
        %v1066 = vadd.f32 %v905, %v1065
        %v1067 = vpop.f32.mrb[0].mxu0
        %1068 = vmatprep.mubr.bf16.mxu0 0
        %1069 = vmatmul.mubr.bf16.gmra.mrb[0].mxu0 %v798
        %v1070 = vpop.f32.mrb[0].mxu0
        %v1071 = vadd.f32 %v910, %v1070
        %v1072 = vpop.f32.mrb[0].mxu0
        %v1073 = vpop.f32.mrb[0].mxu0
        %v1074 = vadd.f32 %v913, %v1073
        %v1075 = vpop.f32.mrb[0].mxu0
        %1076 = vmatprep.mubr.bf16.mxu0 0
        %1077 = vmatmul.mubr.bf16.gmra.mrb[0].mxu0 %v801
        %v1078 = vpop.f32.mrb[0].mxu0
        %v1079 = vadd.f32 %v918, %v1078
        %v1080 = vpop.f32.mrb[0].mxu0
        %v1081 = vpop.f32.mrb[0].mxu0
        %v1082 = vadd.f32 %v921, %v1081
        %v1083 = vpop.f32.mrb[0].mxu0
        %1084 = vmatprep.mubr.bf16.mxu0 0
        %1085 = vmatmul.mubr.bf16.gmra.mrb[0].mxu0 %v804
        %v1086 = vpop.f32.mrb[0].mxu0
        %v1087 = vadd.f32 %v926, %v1086
        %v1088 = vpop.f32.mrb[0].mxu0
        %v1089 = vpop.f32.mrb[0].mxu0
        %v1090 = vadd.f32 %v929, %v1089
        %v1091 = vpop.f32.mrb[0].mxu0
        %1092 = vmatprep.mubr.bf16.mxu0 0
        %1093 = vmatmul.mubr.bf16.gmra.mrb[0].mxu0 %v807
        %v1094 = vpop.f32.mrb[0].mxu0
        %v1095 = vadd.f32 %v934, %v1094
        %v1096 = vpop.f32.mrb[0].mxu0
        %v1097 = vpop.f32.mrb[0].mxu0
        %v1098 = vadd.f32 %v937, %v1097
        %v1099 = vpop.f32.mrb[0].mxu0
        %1100 = vmatprep.mubr.bf16.mxu0 0
        %1101 = vmatmul.mubr.bf16.gmra.mrb[0].mxu0 %v810
        %v1102 = vpop.f32.mrb[0].mxu0
        %v1103 = vadd.f32 %v942, %v1102
        %v1104 = vpop.f32.mrb[0].mxu0
        %v1105 = vpop.f32.mrb[0].mxu0
        %v1106 = vadd.f32 %v945, %v1105
        %v1107 = vpop.f32.mrb[0].mxu0
        %1108 = vmatprep.mubr.bf16.mxu0 0
        %1109 = vmatmul.mubr.bf16.gmra.mrb[0].mxu0 %v813
        %v1110 = vpop.f32.mrb[0].mxu0
        %v1111 = vadd.f32 %v950, %v1110
        %v1112 = vpop.f32.mrb[0].mxu0
        %v1113 = vpop.f32.mrb[0].mxu0
        %v1114 = vadd.f32 %v953, %v1113
        %v1115 = vpop.f32.mrb[0].mxu0
        %1116 = vmatprep.mubr.bf16.mxu0 0
        %1117 = vmatmul.mubr.bf16.gmra.mrb[0].mxu0 %v816
        %v1118 = vpop.f32.mrb[0].mxu0
        %v1119 = vadd.f32 %v958, %v1118
        %v1120 = vpop.f32.mrb[0].mxu0
        %v1121 = vpop.f32.mrb[0].mxu0
        %v1122 = vadd.f32 %v961, %v1121
        %v1123 = vpop.f32.mrb[0].mxu0
        %1124 = vmatprep.mubr.bf16.mxu0 0
        %1125 = vmatmul.mubr.bf16.gmra.mrb[0].mxu0 %v819
        %v1126 = vpop.f32.mrb[0].mxu0
        %v1127 = vadd.f32 %v966, %v1126
        %v1128 = vpop.f32.mrb[0].mxu0
        %v1129 = vpop.f32.mrb[0].mxu0
        %v1130 = vadd.f32 %v969, %v1129
        %v1131 = vpop.f32.mrb[0].mxu0
        %1132 = vmatprep.mubr.bf16.mxu0 0
        %1133 = vmatmul.mubr.bf16.gmra.mrb[0].mxu0 %v822
        %v1134 = vpop.f32.mrb[0].mxu0
        %v1135 = vadd.f32 %v974, %v1134
        %v1136 = vpop.f32.mrb[0].mxu0
        %v1137 = vpop.f32.mrb[0].mxu0
        %v1138 = vadd.f32 %v977, %v1137
        %v1139 = vpop.f32.mrb[0].mxu0
        %1140 = vmatprep.mubr.bf16.mxu0 0
        %1141 = vmatmul.mubr.bf16.gmra.mrb[0].mxu0 %v825
        %v1142 = vpop.f32.mrb[0].mxu0
        %v1143 = vadd.f32 %v982, %v1142
        %v1144 = vpop.f32.mrb[0].mxu0
        %v1145 = vpop.f32.mrb[0].mxu0
        %v1146 = vadd.f32 %v985, %v1145
        %v1147 = vpop.f32.mrb[0].mxu0
        %1148 = vdwg.mxu0
        %v1149 = vmax.f32 %v1023, %v1055
        %v1150 = vmax.f32 %v1026, %v1058
        %v1151 = vmax.f32 %v1031, %v1063
        %v1152 = vmax.f32 %v1034, %v1066
        %v1153 = vmax.f32 %v1039, %v1071
        %v1154 = vmax.f32 %v1042, %v1074
        %v1155 = vmax.f32 %v1047, %v1079
        %v1156 = vmax.f32 %v1050, %v1082
        %v1157 = vmax.f32 %v1087, %v1119
        %v1158 = vmax.f32 %v1090, %v1122
        %v1159 = vmax.f32 %v1095, %v1127
        %v1160 = vmax.f32 %v1098, %v1130
        %v1161 = vmax.f32 %v1103, %v1135
        %v1162 = vmax.f32 %v1106, %v1138
        %v1163 = vmax.f32 %v1111, %v1143
        %v1164 = vmax.f32 %v1114, %v1146
        %v1165 = vmax.f32 %v1149, %v1157
        %v1166 = vmax.f32 %v1150, %v1158
        %v1167 = vmax.f32 %v1151, %v1159
        %v1168 = vmax.f32 %v1152, %v1160
        %v1169 = vmax.f32 %v1153, %v1161
        %v1170 = vmax.f32 %v1154, %v1162
        %v1171 = vmax.f32 %v1155, %v1163
        %v1172 = vmax.f32 %v1156, %v1164
        %v1173 = vld [vmem:[%s2] sm:$0x1]
        %v1175 = vlaneseq
        %v1176 = vshrl.u32 %v1175, 7
        %v1177 = vsub.s32 0, %v1176
        %v1178 = vrot.slane %v1173, %v1177
        %v1180 = vadd.f32 %v1165, %v1178
        %v1181 = vadd.f32 %v1166, %v1178
        %v1182 = vadd.f32 %v1167, %v1178
        %v1183 = vadd.f32 %v1168, %v1178
        %v1184 = vadd.f32 %v1169, %v1178
        %v1185 = vadd.f32 %v1170, %v1178
        %v1186 = vadd.f32 %v1171, %v1178
        %v1187 = vadd.f32 %v1172, %v1178
        %v1188 = vmax.f32 %v1180, 0.0
        %v1189 = vmax.f32 %v1181, 0.0
        %v1190 = vmax.f32 %v1182, 0.0
        %v1191 = vmax.f32 %v1183, 0.0
        %v1192 = vmax.f32 %v1184, 0.0
        %v1193 = vmax.f32 %v1185, 0.0
        %v1194 = vmax.f32 %v1186, 0.0
        %v1195 = vmax.f32 %v1187, 0.0
        %v1196 = vpack.c.bf16 %v1189, %v1188
        %v1197 = vpack.c.bf16 %v1191, %v1190
        %v1198 = vpack.c.bf16 %v1193, %v1192
        %v1199 = vpack.c.bf16 %v1195, %v1194
        %v1204 = vunpack.c.l.b16 %v1196
        %v1205 = vunpack.c.h.b16 %v1196
        %v1206 = vunpack.c.l.b16 %v1197
        %v1207 = vunpack.c.h.b16 %v1197
        %v1208 = vunpack.c.l.b16 %v1198
        %v1209 = vunpack.c.h.b16 %v1198
        %v1210 = vunpack.c.l.b16 %v1199
        %v1211 = vunpack.c.h.b16 %v1199
        %v1212 = vpack.c.b16 %v1204, %v1204
        %v1213 = vpack.c.b16 %v1205, %v1205
        %v1214 = vpack.c.b16 %v1206, %v1206
        %v1215 = vpack.c.b16 %v1207, %v1207
        %v1216 = vpack.c.b16 %v1208, %v1208
        %v1217 = vpack.c.b16 %v1209, %v1209
        %v1218 = vpack.c.b16 %v1210, %v1210
        %v1219 = vpack.c.b16 %v1211, %v1211
        %vm1228 = vcmask 519168
        %1229 = vst.msk [vmem:[%s327] sm:$0xf] %vm1228, %v1212
        %1230 = vst.msk [vmem:[%s327 + $0x4] sm:$0xf] %vm1228, %v1213
        %1231 = vst.msk [vmem:[%s327 + $0x8] sm:$0xf] %vm1228, %v1214
        %1232 = vst.msk [vmem:[%s327 + $0xc] sm:$0xf] %vm1228, %v1215
        %1233 = vst.msk [vmem:[%s327 + $0x10] sm:$0xf] %vm1228, %v1216
        %1234 = vst.msk [vmem:[%s327 + $0x14] sm:$0xf] %vm1228, %v1217
        %1235 = vst.msk [vmem:[%s327 + $0x18] sm:$0xf] %vm1228, %v1218
        %1236 = vst.msk [vmem:[%s327 + $0x1c] sm:$0xf] %vm1228, %v1219
        %s1237 = smul.u32 8, %s14
        %p1238 = scmp.lt.s32.totalorder %s1237, 15
        %s1239 = scalar_select %p1238, %s1237, 15
        %s1240 = smul.addr %s1239, 4
        %s1241 = scalar_lea.vmem %s3, %s1240
        // Predicated region
        $region59: #{multimodal_forward.4} parent=53 // pred_check
          %p1242 = pneg %p100
        $region60: #{multimodal_forward.4} parent=53 // pred_check_branch
          %1244 = sbr.rel (%p1242) target = $region62
        $region61: #{multimodal_forward.4} parent=53 // pred_region
          %s1245 = smul.u32 8, %s14
        $region62: #{multimodal_forward.4} parent=53 // pred_fallthru
          _
      $region54: #{multimodal_forward.4} parent=5 // pred_fallthru
        _
      %p1246 = scmp.le.s32.totalorder 2, %s9
      // Predicated region
      $region63: #{multimodal_forward.4} parent=5 // pred_check
        %p1247 = pneg %p1246
      $region64: #{multimodal_forward.4} parent=5 // pred_check_branch
        %1249 = sbr.rel (%p1247) target = $region66
      $region65: #{multimodal_forward.4} parent=5 // pred_region
        %s1250 = ssub.s32 %s9, 2
        // Predicated region
        $region67: #{multimodal_forward.4} parent=65 // pred_check
          %p1251 = pneg %p106
        $region68: #{multimodal_forward.4} parent=65 // pred_check_branch
          %1253 = sbr.rel (%p1251) target = $region70
        $region69: #{multimodal_forward.4} parent=65 // pred_region
          %s1254 = smul.u32 8, %s15
          %p1255 = scmp.lt.s32.totalorder %s1254, 15
          %s1256 = scalar_select %p1255, %s1254, 15
          %s1257 = smul.addr %s1256, 4
          %s1258 = scalar_lea.vmem %s3, %s1257
        $region70: #{multimodal_forward.4} parent=65 // pred_fallthru
          _
      $region66: #{multimodal_forward.4} parent=5 // pred_fallthru
        _
    $region6: #{multimodal_forward.4} parent=1 // loop_footer
      %s13 = sadd.s32 1, %s9
    $region7: #{multimodal_forward.4} parent=1 // loop_footer_branch
      %8 = sbr.rel target = $region3
    $region8: #{multimodal_forward.4} parent=1 // loop_exit
      _

// kernel: multimodal_forward.5
$region0: #{multimodal_forward.5}
  #allocation0 [shape = 'u32[]', space=smem, size = 0x4, offset = 0x4, fixed_abs, tag = 'smem constant byte address 0x4 - core index']
  #allocation1 [shape = 'u32[144,128]{1,0:T(1,128)}', space=vmem, size = 0x12000, scoped, tag = 'internal scratch']
  %s0 = inlined_call_operand.vmem [shape: bf16[16,3136], index: 0, kind: input, shape index: {}]
  %s1 = inlined_call_operand.vmem [shape: bf16[3136,128], index: 1, kind: input, shape index: {}]
  %s2 = inlined_call_operand.vmem [shape: f32[1,128], index: 2, kind: input, shape index: {}]
  %s3 = inlined_call_operand.vmem [shape: bf16[16,768], index: 3, kind: input, shape index: {}]
  %s4 = inlined_call_operand.vmem [shape: bf16[768,256], index: 4, kind: input, shape index: {}]
  %s5 = inlined_call_operand.vmem [shape: f32[1,256], index: 5, kind: input, shape index: {}]
  %s6 = inlined_call_operand.vmem [shape: bf16[256,128], index: 6, kind: input, shape index: {}]
  %s7 = inlined_call_operand.vmem [shape: f32[1,128], index: 7, kind: input, shape index: {}]
  %s8 = inlined_call_operand.vmem [shape: f32[16,128], index: 8, kind: output, shape index: {0}]
  %s9 = inlined_call_operand.vmem [shape: f32[16,128], index: 9, kind: output, shape index: {1}]
  %10 = xla_tuple %s8, %s9
  %s11 = sld [smem:[#allocation0]]
  $region50: #{multimodal_forward.5} parent=0
    _
  %s13 = ssub.s32 1, %s11
  %s14 = scalar_select 0, %s13, %s11
  // Predicated region
  $region2: #{multimodal_forward.5} parent=0 // pred_check
    _
  $region3: #{multimodal_forward.5} parent=0 // pred_check_branch
    %16 = sbr.rel (0) target = $region5
  $region4: #{multimodal_forward.5} parent=0 // pred_region
    _
  $region5: #{multimodal_forward.5} parent=0 // pred_fallthru
    _
  // Predicated region
  $region6: #{multimodal_forward.5} parent=0 // pred_check
    _
  $region7: #{multimodal_forward.5} parent=0 // pred_check_branch
    %18 = sbr.rel (0) target = $region9
  $region8: #{multimodal_forward.5} parent=0 // pred_region
    _
  $region9: #{multimodal_forward.5} parent=0 // pred_fallthru
    _
  // Predicated region
  $region10: #{multimodal_forward.5} parent=0 // pred_check
    _
  $region11: #{multimodal_forward.5} parent=0 // pred_check_branch
    %20 = sbr.rel (0) target = $region13
  $region12: #{multimodal_forward.5} parent=0 // pred_region
    _
  $region13: #{multimodal_forward.5} parent=0 // pred_fallthru
    _
  // Predicated region
  $region14: #{multimodal_forward.5} parent=0 // pred_check
    _
  $region15: #{multimodal_forward.5} parent=0 // pred_check_branch
    %22 = sbr.rel (0) target = $region17
  $region16: #{multimodal_forward.5} parent=0 // pred_region
    _
  $region17: #{multimodal_forward.5} parent=0 // pred_fallthru
    _
  // Predicated region
  $region18: #{multimodal_forward.5} parent=0 // pred_check
    _
  $region19: #{multimodal_forward.5} parent=0 // pred_check_branch
    %24 = sbr.rel (0) target = $region21
  $region20: #{multimodal_forward.5} parent=0 // pred_region
    _
  $region21: #{multimodal_forward.5} parent=0 // pred_fallthru
    _
  // Predicated region
  $region22: #{multimodal_forward.5} parent=0 // pred_check
    _
  $region23: #{multimodal_forward.5} parent=0 // pred_check_branch
    %26 = sbr.rel (0) target = $region25
  $region24: #{multimodal_forward.5} parent=0 // pred_region
    _
  $region25: #{multimodal_forward.5} parent=0 // pred_fallthru
    _
  // Predicated region
  $region26: #{multimodal_forward.5} parent=0 // pred_check
    _
  $region27: #{multimodal_forward.5} parent=0 // pred_check_branch
    %28 = sbr.rel (0) target = $region29
  $region28: #{multimodal_forward.5} parent=0 // pred_region
    _
  $region29: #{multimodal_forward.5} parent=0 // pred_fallthru
    _
  // Predicated region
  $region30: #{multimodal_forward.5} parent=0 // pred_check
    _
  $region31: #{multimodal_forward.5} parent=0 // pred_check_branch
    %30 = sbr.rel (0) target = $region33
  $region32: #{multimodal_forward.5} parent=0 // pred_region
    _
  $region33: #{multimodal_forward.5} parent=0 // pred_fallthru
    _
  %v32 = vld [vmem:[%s0] sm:$0xff]
  %v33 = vld [vmem:[%s0 + $0x8] sm:$0xff]
  %v34 = vld [vmem:[%s0 + $0x10] sm:$0xff]
  %v35 = vld [vmem:[%s0 + $0x18] sm:$0xff]
  %v36 = vld [vmem:[%s0 + $0x20] sm:$0xff]
  %v37 = vld [vmem:[%s0 + $0x28] sm:$0xff]
  %v38 = vld [vmem:[%s0 + $0x30] sm:$0xff]
  %v39 = vld [vmem:[%s0 + $0x38] sm:$0xff]
  %v40 = vld [vmem:[%s0 + $0x40] sm:$0xff]
  %v41 = vld [vmem:[%s0 + $0x48] sm:$0xff]
  %v42 = vld [vmem:[%s0 + $0x50] sm:$0xff]
  %v43 = vld [vmem:[%s0 + $0x58] sm:$0xff]
  %v44 = vld [vmem:[%s0 + $0x60] sm:$0xf]
  %v45 = vld [vmem:[%s0 + $0x64] sm:$0xff]
  %v46 = vld [vmem:[%s0 + $0x6c] sm:$0xff]
  %v47 = vld [vmem:[%s0 + $0x74] sm:$0xff]
  %v48 = vld [vmem:[%s0 + $0x7c] sm:$0xff]
  %v49 = vld [vmem:[%s0 + $0x84] sm:$0xff]
  %v50 = vld [vmem:[%s0 + $0x8c] sm:$0xff]
  %v51 = vld [vmem:[%s0 + $0x94] sm:$0xff]
  %v52 = vld [vmem:[%s0 + $0x9c] sm:$0xff]
  %v53 = vld [vmem:[%s0 + $0xa4] sm:$0xff]
  %v54 = vld [vmem:[%s0 + $0xac] sm:$0xff]
  %v55 = vld [vmem:[%s0 + $0xb4] sm:$0xff]
  %v56 = vld [vmem:[%s0 + $0xbc] sm:$0xff]
  %v57 = vld [vmem:[%s0 + $0xc4] sm:$0xf]
  %v58 = vld [vmem:[%s1] sm:$0xf]
  %v59 = vld [vmem:[%s1 + $0x4] sm:$0xf]
  %v60 = vld [vmem:[%s1 + $0x8] sm:$0xf]
  %v61 = vld [vmem:[%s1 + $0xc] sm:$0xf]
  %v62 = vld [vmem:[%s1 + $0x10] sm:$0xf]
  %v63 = vld [vmem:[%s1 + $0x14] sm:$0xf]
  %v64 = vld [vmem:[%s1 + $0x18] sm:$0xf]
  %v65 = vld [vmem:[%s1 + $0x1c] sm:$0xf]
  %v66 = vld [vmem:[%s1 + $0x20] sm:$0xf]
  %v67 = vld [vmem:[%s1 + $0x24] sm:$0xf]
  %v68 = vld [vmem:[%s1 + $0x28] sm:$0xf]
  %v69 = vld [vmem:[%s1 + $0x2c] sm:$0xf]
  %v70 = vld [vmem:[%s1 + $0x30] sm:$0xf]
  %v71 = vld [vmem:[%s1 + $0x34] sm:$0xf]
  %v72 = vld [vmem:[%s1 + $0x38] sm:$0xf]
  %v73 = vld [vmem:[%s1 + $0x3c] sm:$0xf]
  %v74 = vld [vmem:[%s1 + $0x40] sm:$0xf]
  %v75 = vld [vmem:[%s1 + $0x44] sm:$0xf]
  %v76 = vld [vmem:[%s1 + $0x48] sm:$0xf]
  %v77 = vld [vmem:[%s1 + $0x4c] sm:$0xf]
  %v78 = vld [vmem:[%s1 + $0x50] sm:$0xf]
  %v79 = vld [vmem:[%s1 + $0x54] sm:$0xf]
  %v80 = vld [vmem:[%s1 + $0x58] sm:$0xf]
  %v81 = vld [vmem:[%s1 + $0x5c] sm:$0xf]
  %v82 = vld [vmem:[%s1 + $0x60] sm:$0xf]
  %v83 = vld [vmem:[%s1 + $0x64] sm:$0xf]
  %v84 = vld [vmem:[%s1 + $0x68] sm:$0xf]
  %v85 = vld [vmem:[%s1 + $0x6c] sm:$0xf]
  %v86 = vld [vmem:[%s1 + $0x70] sm:$0xf]
  %v87 = vld [vmem:[%s1 + $0x74] sm:$0xf]
  %v88 = vld [vmem:[%s1 + $0x78] sm:$0xf]
  %v89 = vld [vmem:[%s1 + $0x7c] sm:$0xf]
  %v90 = vld [vmem:[%s1 + $0x80] sm:$0xf]
  %v91 = vld [vmem:[%s1 + $0x84] sm:$0xf]
  %v92 = vld [vmem:[%s1 + $0x88] sm:$0xf]
  %v93 = vld [vmem:[%s1 + $0x8c] sm:$0xf]
  %v94 = vld [vmem:[%s1 + $0x90] sm:$0xf]
  %v95 = vld [vmem:[%s1 + $0x94] sm:$0xf]
  %v96 = vld [vmem:[%s1 + $0x98] sm:$0xf]
  %v97 = vld [vmem:[%s1 + $0x9c] sm:$0xf]
  %v98 = vld [vmem:[%s1 + $0xa0] sm:$0xf]
  %v99 = vld [vmem:[%s1 + $0xa4] sm:$0xf]
  %v100 = vld [vmem:[%s1 + $0xa8] sm:$0xf]
  %v101 = vld [vmem:[%s1 + $0xac] sm:$0xf]
  %v102 = vld [vmem:[%s1 + $0xb0] sm:$0xf]
  %v103 = vld [vmem:[%s1 + $0xb4] sm:$0xf]
  %v104 = vld [vmem:[%s1 + $0xb8] sm:$0xf]
  %v105 = vld [vmem:[%s1 + $0xbc] sm:$0xf]
  %v106 = vld [vmem:[%s1 + $0xc0] sm:$0xf]
  %v107 = vld [vmem:[%s1 + $0xc4] sm:$0xf]
  %v108 = vld [vmem:[%s1 + $0xc8] sm:$0xf]
  %v109 = vld [vmem:[%s1 + $0xcc] sm:$0xf]
  %v110 = vld [vmem:[%s1 + $0xd0] sm:$0xf]
  %v111 = vld [vmem:[%s1 + $0xd4] sm:$0xf]
  %v112 = vld [vmem:[%s1 + $0xd8] sm:$0xf]
  %v113 = vld [vmem:[%s1 + $0xdc] sm:$0xf]
  %v114 = vld [vmem:[%s1 + $0xe0] sm:$0xf]
  %v115 = vld [vmem:[%s1 + $0xe4] sm:$0xf]
  %v116 = vld [vmem:[%s1 + $0xe8] sm:$0xf]
  %v117 = vld [vmem:[%s1 + $0xec] sm:$0xf]
  %v118 = vld [vmem:[%s1 + $0xf0] sm:$0xf]
  %v119 = vld [vmem:[%s1 + $0xf4] sm:$0xf]
  %v120 = vld [vmem:[%s1 + $0xf8] sm:$0xf]
  %v121 = vld [vmem:[%s1 + $0xfc] sm:$0xf]
  %v122 = vld [vmem:[%s1 + $0x100] sm:$0xf]
  %v123 = vld [vmem:[%s1 + $0x104] sm:$0xf]
  %v124 = vld [vmem:[%s1 + $0x108] sm:$0xf]
  %v125 = vld [vmem:[%s1 + $0x10c] sm:$0xf]
  %v126 = vld [vmem:[%s1 + $0x110] sm:$0xf]
  %v127 = vld [vmem:[%s1 + $0x114] sm:$0xf]
  %v128 = vld [vmem:[%s1 + $0x118] sm:$0xf]
  %v129 = vld [vmem:[%s1 + $0x11c] sm:$0xf]
  %v130 = vld [vmem:[%s1 + $0x120] sm:$0xf]
  %v131 = vld [vmem:[%s1 + $0x124] sm:$0xf]
  %v132 = vld [vmem:[%s1 + $0x128] sm:$0xf]
  %v133 = vld [vmem:[%s1 + $0x12c] sm:$0xf]
  %v134 = vld [vmem:[%s1 + $0x130] sm:$0xf]
  %v135 = vld [vmem:[%s1 + $0x134] sm:$0xf]
  %v136 = vld [vmem:[%s1 + $0x138] sm:$0xf]
  %v137 = vld [vmem:[%s1 + $0x13c] sm:$0xf]
  %v138 = vld [vmem:[%s1 + $0x140] sm:$0xf]
  %v139 = vld [vmem:[%s1 + $0x144] sm:$0xf]
  %v140 = vld [vmem:[%s1 + $0x148] sm:$0xf]
  %v141 = vld [vmem:[%s1 + $0x14c] sm:$0xf]
  %v142 = vld [vmem:[%s1 + $0x150] sm:$0xf]
  %v143 = vld [vmem:[%s1 + $0x154] sm:$0xf]
  %v144 = vld [vmem:[%s1 + $0x158] sm:$0xf]
  %v145 = vld [vmem:[%s1 + $0x15c] sm:$0xf]
  %v146 = vld [vmem:[%s1 + $0x160] sm:$0xf]
  %v147 = vld [vmem:[%s1 + $0x164] sm:$0xf]
  %v148 = vld [vmem:[%s1 + $0x168] sm:$0xf]
  %v149 = vld [vmem:[%s1 + $0x16c] sm:$0xf]
  %v150 = vld [vmem:[%s1 + $0x170] sm:$0xf]
  %v151 = vld [vmem:[%s1 + $0x174] sm:$0xf]
  %v152 = vld [vmem:[%s1 + $0x178] sm:$0xf]
  %v153 = vld [vmem:[%s1 + $0x17c] sm:$0xf]
  %v154 = vld [vmem:[%s1 + $0x180] sm:$0xf]
  %v155 = vld [vmem:[%s1 + $0x184] sm:$0xf]
  %v156 = vld [vmem:[%s1 + $0x188] sm:$0xf]
  %v157 = vld [vmem:[%s1 + $0x18c] sm:$0xf]
  %v158 = vld [vmem:[%s1 + $0x190] sm:$0xf]
  %v159 = vld [vmem:[%s1 + $0x194] sm:$0xf]
  %v160 = vld [vmem:[%s1 + $0x198] sm:$0xf]
  %v161 = vld [vmem:[%s1 + $0x19c] sm:$0xf]
  %v162 = vld [vmem:[%s1 + $0x1a0] sm:$0xf]
  %v163 = vld [vmem:[%s1 + $0x1a4] sm:$0xf]
  %v164 = vld [vmem:[%s1 + $0x1a8] sm:$0xf]
  %v165 = vld [vmem:[%s1 + $0x1ac] sm:$0xf]
  %v166 = vld [vmem:[%s1 + $0x1b0] sm:$0xf]
  %v167 = vld [vmem:[%s1 + $0x1b4] sm:$0xf]
  %v168 = vld [vmem:[%s1 + $0x1b8] sm:$0xf]
  %v169 = vld [vmem:[%s1 + $0x1bc] sm:$0xf]
  %v170 = vld [vmem:[%s1 + $0x1c0] sm:$0xf]
  %v171 = vld [vmem:[%s1 + $0x1c4] sm:$0xf]
  %v172 = vld [vmem:[%s1 + $0x1c8] sm:$0xf]
  %v173 = vld [vmem:[%s1 + $0x1cc] sm:$0xf]
  %v174 = vld [vmem:[%s1 + $0x1d0] sm:$0xf]
  %v175 = vld [vmem:[%s1 + $0x1d4] sm:$0xf]
  %v176 = vld [vmem:[%s1 + $0x1d8] sm:$0xf]
  %v177 = vld [vmem:[%s1 + $0x1dc] sm:$0xf]
  %v178 = vld [vmem:[%s1 + $0x1e0] sm:$0xf]
  %v179 = vld [vmem:[%s1 + $0x1e4] sm:$0xf]
  %v180 = vld [vmem:[%s1 + $0x1e8] sm:$0xf]
  %v181 = vld [vmem:[%s1 + $0x1ec] sm:$0xf]
  %v182 = vld [vmem:[%s1 + $0x1f0] sm:$0xf]
  %v183 = vld [vmem:[%s1 + $0x1f4] sm:$0xf]
  %v184 = vld [vmem:[%s1 + $0x1f8] sm:$0xf]
  %v185 = vld [vmem:[%s1 + $0x1fc] sm:$0xf]
  %v186 = vld [vmem:[%s1 + $0x200] sm:$0xf]
  %v187 = vld [vmem:[%s1 + $0x204] sm:$0xf]
  %v188 = vld [vmem:[%s1 + $0x208] sm:$0xf]
  %v189 = vld [vmem:[%s1 + $0x20c] sm:$0xf]
  %v190 = vld [vmem:[%s1 + $0x210] sm:$0xf]
  %v191 = vld [vmem:[%s1 + $0x214] sm:$0xf]
  %v192 = vld [vmem:[%s1 + $0x218] sm:$0xf]
  %v193 = vld [vmem:[%s1 + $0x21c] sm:$0xf]
  %v194 = vld [vmem:[%s1 + $0x220] sm:$0xf]
  %v195 = vld [vmem:[%s1 + $0x224] sm:$0xf]
  %v196 = vld [vmem:[%s1 + $0x228] sm:$0xf]
  %v197 = vld [vmem:[%s1 + $0x22c] sm:$0xf]
  %v198 = vld [vmem:[%s1 + $0x230] sm:$0xf]
  %v199 = vld [vmem:[%s1 + $0x234] sm:$0xf]
  %v200 = vld [vmem:[%s1 + $0x238] sm:$0xf]
  %v201 = vld [vmem:[%s1 + $0x23c] sm:$0xf]
  %v202 = vld [vmem:[%s1 + $0x240] sm:$0xf]
  %v203 = vld [vmem:[%s1 + $0x244] sm:$0xf]
  %v204 = vld [vmem:[%s1 + $0x248] sm:$0xf]
  %v205 = vld [vmem:[%s1 + $0x24c] sm:$0xf]
  %v206 = vld [vmem:[%s1 + $0x250] sm:$0xf]
  %v207 = vld [vmem:[%s1 + $0x254] sm:$0xf]
  %v208 = vld [vmem:[%s1 + $0x258] sm:$0xf]
  %v209 = vld [vmem:[%s1 + $0x25c] sm:$0xf]
  %v210 = vld [vmem:[%s1 + $0x260] sm:$0xf]
  %v211 = vld [vmem:[%s1 + $0x264] sm:$0xf]
  %v212 = vld [vmem:[%s1 + $0x268] sm:$0xf]
  %v213 = vld [vmem:[%s1 + $0x26c] sm:$0xf]
  %v214 = vld [vmem:[%s1 + $0x270] sm:$0xf]
  %v215 = vld [vmem:[%s1 + $0x274] sm:$0xf]
  %v216 = vld [vmem:[%s1 + $0x278] sm:$0xf]
  %v217 = vld [vmem:[%s1 + $0x27c] sm:$0xf]
  %v218 = vld [vmem:[%s1 + $0x280] sm:$0xf]
  %v219 = vld [vmem:[%s1 + $0x284] sm:$0xf]
  %v220 = vld [vmem:[%s1 + $0x288] sm:$0xf]
  %v221 = vld [vmem:[%s1 + $0x28c] sm:$0xf]
  %v222 = vld [vmem:[%s1 + $0x290] sm:$0xf]
  %v223 = vld [vmem:[%s1 + $0x294] sm:$0xf]
  %v224 = vld [vmem:[%s1 + $0x298] sm:$0xf]
  %v225 = vld [vmem:[%s1 + $0x29c] sm:$0xf]
  %v226 = vld [vmem:[%s1 + $0x2a0] sm:$0xf]
  %v227 = vld [vmem:[%s1 + $0x2a4] sm:$0xf]
  %v228 = vld [vmem:[%s1 + $0x2a8] sm:$0xf]
  %v229 = vld [vmem:[%s1 + $0x2ac] sm:$0xf]
  %v230 = vld [vmem:[%s1 + $0x2b0] sm:$0xf]
  %v231 = vld [vmem:[%s1 + $0x2b4] sm:$0xf]
  %v232 = vld [vmem:[%s1 + $0x2b8] sm:$0xf]
  %v233 = vld [vmem:[%s1 + $0x2bc] sm:$0xf]
  %v234 = vld [vmem:[%s1 + $0x2c0] sm:$0xf]
  %v235 = vld [vmem:[%s1 + $0x2c4] sm:$0xf]
  %v236 = vld [vmem:[%s1 + $0x2c8] sm:$0xf]
  %v237 = vld [vmem:[%s1 + $0x2cc] sm:$0xf]
  %v238 = vld [vmem:[%s1 + $0x2d0] sm:$0xf]
  %v239 = vld [vmem:[%s1 + $0x2d4] sm:$0xf]
  %v240 = vld [vmem:[%s1 + $0x2d8] sm:$0xf]
  %v241 = vld [vmem:[%s1 + $0x2dc] sm:$0xf]
  %v242 = vld [vmem:[%s1 + $0x2e0] sm:$0xf]
  %v243 = vld [vmem:[%s1 + $0x2e4] sm:$0xf]
  %v244 = vld [vmem:[%s1 + $0x2e8] sm:$0xf]
  %v245 = vld [vmem:[%s1 + $0x2ec] sm:$0xf]
  %v246 = vld [vmem:[%s1 + $0x2f0] sm:$0xf]
  %v247 = vld [vmem:[%s1 + $0x2f4] sm:$0xf]
  %v248 = vld [vmem:[%s1 + $0x2f8] sm:$0xf]
  %v249 = vld [vmem:[%s1 + $0x2fc] sm:$0xf]
  %v250 = vld [vmem:[%s1 + $0x300] sm:$0xf]
  %v251 = vld [vmem:[%s1 + $0x304] sm:$0xf]
  %v252 = vld [vmem:[%s1 + $0x308] sm:$0xf]
  %v253 = vld [vmem:[%s1 + $0x30c] sm:$0xf]
  %v254 = vld [vmem:[%s1 + $0x310] sm:$0xf]
  %v255 = vld [vmem:[%s1 + $0x314] sm:$0xf]
  %v256 = vld [vmem:[%s1 + $0x318] sm:$0xf]
  %v257 = vld [vmem:[%s1 + $0x31c] sm:$0xf]
  %v258 = vld [vmem:[%s1 + $0x320] sm:$0xf]
  %v259 = vld [vmem:[%s1 + $0x324] sm:$0xf]
  %v260 = vld [vmem:[%s1 + $0x328] sm:$0xf]
  %v261 = vld [vmem:[%s1 + $0x32c] sm:$0xf]
  %v262 = vld [vmem:[%s1 + $0x330] sm:$0xf]
  %v263 = vld [vmem:[%s1 + $0x334] sm:$0xf]
  %v264 = vld [vmem:[%s1 + $0x338] sm:$0xf]
  %v265 = vld [vmem:[%s1 + $0x33c] sm:$0xf]
  %v266 = vld [vmem:[%s1 + $0x340] sm:$0xf]
  %v267 = vld [vmem:[%s1 + $0x344] sm:$0xf]
  %v268 = vld [vmem:[%s1 + $0x348] sm:$0xf]
  %v269 = vld [vmem:[%s1 + $0x34c] sm:$0xf]
  %v270 = vld [vmem:[%s1 + $0x350] sm:$0xf]
  %v271 = vld [vmem:[%s1 + $0x354] sm:$0xf]
  %v272 = vld [vmem:[%s1 + $0x358] sm:$0xf]
  %v273 = vld [vmem:[%s1 + $0x35c] sm:$0xf]
  %v274 = vld [vmem:[%s1 + $0x360] sm:$0xf]
  %v275 = vld [vmem:[%s1 + $0x364] sm:$0xf]
  %v276 = vld [vmem:[%s1 + $0x368] sm:$0xf]
  %v277 = vld [vmem:[%s1 + $0x36c] sm:$0xf]
  %v278 = vld [vmem:[%s1 + $0x370] sm:$0xf]
  %v279 = vld [vmem:[%s1 + $0x374] sm:$0xf]
  %v280 = vld [vmem:[%s1 + $0x378] sm:$0xf]
  %v281 = vld [vmem:[%s1 + $0x37c] sm:$0xf]
  %v282 = vld [vmem:[%s1 + $0x380] sm:$0xf]
  %v283 = vld [vmem:[%s1 + $0x384] sm:$0xf]
  %v284 = vld [vmem:[%s1 + $0x388] sm:$0xf]
  %v285 = vld [vmem:[%s1 + $0x38c] sm:$0xf]
  %v286 = vld [vmem:[%s1 + $0x390] sm:$0xf]
  %v287 = vld [vmem:[%s1 + $0x394] sm:$0xf]
  %v288 = vld [vmem:[%s1 + $0x398] sm:$0xf]
  %v289 = vld [vmem:[%s1 + $0x39c] sm:$0xf]
  %v290 = vld [vmem:[%s1 + $0x3a0] sm:$0xf]
  %v291 = vld [vmem:[%s1 + $0x3a4] sm:$0xf]
  %v292 = vld [vmem:[%s1 + $0x3a8] sm:$0xf]
  %v293 = vld [vmem:[%s1 + $0x3ac] sm:$0xf]
  %v294 = vld [vmem:[%s1 + $0x3b0] sm:$0xf]
  %v295 = vld [vmem:[%s1 + $0x3b4] sm:$0xf]
  %v296 = vld [vmem:[%s1 + $0x3b8] sm:$0xf]
  %v297 = vld [vmem:[%s1 + $0x3bc] sm:$0xf]
  %v298 = vld [vmem:[%s1 + $0x3c0] sm:$0xf]
  %v299 = vld [vmem:[%s1 + $0x3c4] sm:$0xf]
  %v300 = vld [vmem:[%s1 + $0x3c8] sm:$0xf]
  %v301 = vld [vmem:[%s1 + $0x3cc] sm:$0xf]
  %v302 = vld [vmem:[%s1 + $0x3d0] sm:$0xf]
  %v303 = vld [vmem:[%s1 + $0x3d4] sm:$0xf]
  %v304 = vld [vmem:[%s1 + $0x3d8] sm:$0xf]
  %v305 = vld [vmem:[%s1 + $0x3dc] sm:$0xf]
  %v306 = vld [vmem:[%s1 + $0x3e0] sm:$0xf]
  %v307 = vld [vmem:[%s1 + $0x3e4] sm:$0xf]
  %v308 = vld [vmem:[%s1 + $0x3e8] sm:$0xf]
  %v309 = vld [vmem:[%s1 + $0x3ec] sm:$0xf]
  %v310 = vld [vmem:[%s1 + $0x3f0] sm:$0xf]
  %v311 = vld [vmem:[%s1 + $0x3f4] sm:$0xf]
  %v312 = vld [vmem:[%s1 + $0x3f8] sm:$0xf]
  %v313 = vld [vmem:[%s1 + $0x3fc] sm:$0xf]
  %v314 = vld [vmem:[%s1 + $0x400] sm:$0xf]
  %v315 = vld [vmem:[%s1 + $0x404] sm:$0xf]
  %v316 = vld [vmem:[%s1 + $0x408] sm:$0xf]
  %v317 = vld [vmem:[%s1 + $0x40c] sm:$0xf]
  %v318 = vld [vmem:[%s1 + $0x410] sm:$0xf]
  %v319 = vld [vmem:[%s1 + $0x414] sm:$0xf]
  %v320 = vld [vmem:[%s1 + $0x418] sm:$0xf]
  %v321 = vld [vmem:[%s1 + $0x41c] sm:$0xf]
  %v322 = vld [vmem:[%s1 + $0x420] sm:$0xf]
  %v323 = vld [vmem:[%s1 + $0x424] sm:$0xf]
  %v324 = vld [vmem:[%s1 + $0x428] sm:$0xf]
  %v325 = vld [vmem:[%s1 + $0x42c] sm:$0xf]
  %v326 = vld [vmem:[%s1 + $0x430] sm:$0xf]
  %v327 = vld [vmem:[%s1 + $0x434] sm:$0xf]
  %v328 = vld [vmem:[%s1 + $0x438] sm:$0xf]
  %v329 = vld [vmem:[%s1 + $0x43c] sm:$0xf]
  %v330 = vld [vmem:[%s1 + $0x440] sm:$0xf]
  %v331 = vld [vmem:[%s1 + $0x444] sm:$0xf]
  %v332 = vld [vmem:[%s1 + $0x448] sm:$0xf]
  %v333 = vld [vmem:[%s1 + $0x44c] sm:$0xf]
  %v334 = vld [vmem:[%s1 + $0x450] sm:$0xf]
  %v335 = vld [vmem:[%s1 + $0x454] sm:$0xf]
  %v336 = vld [vmem:[%s1 + $0x458] sm:$0xf]
  %v337 = vld [vmem:[%s1 + $0x45c] sm:$0xf]
  %v338 = vld [vmem:[%s1 + $0x460] sm:$0xf]
  %v339 = vld [vmem:[%s1 + $0x464] sm:$0xf]
  %v340 = vld [vmem:[%s1 + $0x468] sm:$0xf]
  %v341 = vld [vmem:[%s1 + $0x46c] sm:$0xf]
  %v342 = vld [vmem:[%s1 + $0x470] sm:$0xf]
  %v343 = vld [vmem:[%s1 + $0x474] sm:$0xf]
  %v344 = vld [vmem:[%s1 + $0x478] sm:$0xf]
  %v345 = vld [vmem:[%s1 + $0x47c] sm:$0xf]
  %v346 = vld [vmem:[%s1 + $0x480] sm:$0xf]
  %v347 = vld [vmem:[%s1 + $0x484] sm:$0xf]
  %v348 = vld [vmem:[%s1 + $0x488] sm:$0xf]
  %v349 = vld [vmem:[%s1 + $0x48c] sm:$0xf]
  %v350 = vld [vmem:[%s1 + $0x490] sm:$0xf]
  %v351 = vld [vmem:[%s1 + $0x494] sm:$0xf]
  %v352 = vld [vmem:[%s1 + $0x498] sm:$0xf]
  %v353 = vld [vmem:[%s1 + $0x49c] sm:$0xf]
  %v354 = vld [vmem:[%s1 + $0x4a0] sm:$0xf]
  %v355 = vld [vmem:[%s1 + $0x4a4] sm:$0xf]
  %v356 = vld [vmem:[%s1 + $0x4a8] sm:$0xf]
  %v357 = vld [vmem:[%s1 + $0x4ac] sm:$0xf]
  %v358 = vld [vmem:[%s1 + $0x4b0] sm:$0xf]
  %v359 = vld [vmem:[%s1 + $0x4b4] sm:$0xf]
  %v360 = vld [vmem:[%s1 + $0x4b8] sm:$0xf]
  %v361 = vld [vmem:[%s1 + $0x4bc] sm:$0xf]
  %v362 = vld [vmem:[%s1 + $0x4c0] sm:$0xf]
  %v363 = vld [vmem:[%s1 + $0x4c4] sm:$0xf]
  %v364 = vld [vmem:[%s1 + $0x4c8] sm:$0xf]
  %v365 = vld [vmem:[%s1 + $0x4cc] sm:$0xf]
  %v366 = vld [vmem:[%s1 + $0x4d0] sm:$0xf]
  %v367 = vld [vmem:[%s1 + $0x4d4] sm:$0xf]
  %v368 = vld [vmem:[%s1 + $0x4d8] sm:$0xf]
  %v369 = vld [vmem:[%s1 + $0x4dc] sm:$0xf]
  %v370 = vld [vmem:[%s1 + $0x4e0] sm:$0xf]
  %v371 = vld [vmem:[%s1 + $0x4e4] sm:$0xf]
  %v372 = vld [vmem:[%s1 + $0x4e8] sm:$0xf]
  %v373 = vld [vmem:[%s1 + $0x4ec] sm:$0xf]
  %v374 = vld [vmem:[%s1 + $0x4f0] sm:$0xf]
  %v375 = vld [vmem:[%s1 + $0x4f4] sm:$0xf]
  %v376 = vld [vmem:[%s1 + $0x4f8] sm:$0xf]
  %v377 = vld [vmem:[%s1 + $0x4fc] sm:$0xf]
  %v378 = vld [vmem:[%s1 + $0x500] sm:$0xf]
  %v379 = vld [vmem:[%s1 + $0x504] sm:$0xf]
  %v380 = vld [vmem:[%s1 + $0x508] sm:$0xf]
  %v381 = vld [vmem:[%s1 + $0x50c] sm:$0xf]
  %v382 = vld [vmem:[%s1 + $0x510] sm:$0xf]
  %v383 = vld [vmem:[%s1 + $0x514] sm:$0xf]
  %v384 = vld [vmem:[%s1 + $0x518] sm:$0xf]
  %v385 = vld [vmem:[%s1 + $0x51c] sm:$0xf]
  %v386 = vld [vmem:[%s1 + $0x520] sm:$0xf]
  %v387 = vld [vmem:[%s1 + $0x524] sm:$0xf]
  %v388 = vld [vmem:[%s1 + $0x528] sm:$0xf]
  %v389 = vld [vmem:[%s1 + $0x52c] sm:$0xf]
  %v390 = vld [vmem:[%s1 + $0x530] sm:$0xf]
  %v391 = vld [vmem:[%s1 + $0x534] sm:$0xf]
  %v392 = vld [vmem:[%s1 + $0x538] sm:$0xf]
  %v393 = vld [vmem:[%s1 + $0x53c] sm:$0xf]
  %v394 = vld [vmem:[%s1 + $0x540] sm:$0xf]
  %v395 = vld [vmem:[%s1 + $0x544] sm:$0xf]
  %v396 = vld [vmem:[%s1 + $0x548] sm:$0xf]
  %v397 = vld [vmem:[%s1 + $0x54c] sm:$0xf]
  %v398 = vld [vmem:[%s1 + $0x550] sm:$0xf]
  %v399 = vld [vmem:[%s1 + $0x554] sm:$0xf]
  %v400 = vld [vmem:[%s1 + $0x558] sm:$0xf]
  %v401 = vld [vmem:[%s1 + $0x55c] sm:$0xf]
  %v402 = vld [vmem:[%s1 + $0x560] sm:$0xf]
  %v403 = vld [vmem:[%s1 + $0x564] sm:$0xf]
  %v404 = vld [vmem:[%s1 + $0x568] sm:$0xf]
  %v405 = vld [vmem:[%s1 + $0x56c] sm:$0xf]
  %v406 = vld [vmem:[%s1 + $0x570] sm:$0xf]
  %v407 = vld [vmem:[%s1 + $0x574] sm:$0xf]
  %v408 = vld [vmem:[%s1 + $0x578] sm:$0xf]
  %v409 = vld [vmem:[%s1 + $0x57c] sm:$0xf]
  %v410 = vld [vmem:[%s1 + $0x580] sm:$0xf]
  %v411 = vld [vmem:[%s1 + $0x584] sm:$0xf]
  %v412 = vld [vmem:[%s1 + $0x588] sm:$0xf]
  %v413 = vld [vmem:[%s1 + $0x58c] sm:$0xf]
  %v414 = vld [vmem:[%s1 + $0x590] sm:$0xf]
  %v415 = vld [vmem:[%s1 + $0x594] sm:$0xf]
  %v416 = vld [vmem:[%s1 + $0x598] sm:$0xf]
  %v417 = vld [vmem:[%s1 + $0x59c] sm:$0xf]
  %v418 = vld [vmem:[%s1 + $0x5a0] sm:$0xf]
  %v419 = vld [vmem:[%s1 + $0x5a4] sm:$0xf]
  %v420 = vld [vmem:[%s1 + $0x5a8] sm:$0xf]
  %v421 = vld [vmem:[%s1 + $0x5ac] sm:$0xf]
  %v422 = vld [vmem:[%s1 + $0x5b0] sm:$0xf]
  %v423 = vld [vmem:[%s1 + $0x5b4] sm:$0xf]
  %v424 = vld [vmem:[%s1 + $0x5b8] sm:$0xf]
  %v425 = vld [vmem:[%s1 + $0x5bc] sm:$0xf]
  %v426 = vld [vmem:[%s1 + $0x5c0] sm:$0xf]
  %v427 = vld [vmem:[%s1 + $0x5c4] sm:$0xf]
  %v428 = vld [vmem:[%s1 + $0x5c8] sm:$0xf]
  %v429 = vld [vmem:[%s1 + $0x5cc] sm:$0xf]
  %v430 = vld [vmem:[%s1 + $0x5d0] sm:$0xf]
  %v431 = vld [vmem:[%s1 + $0x5d4] sm:$0xf]
  %v432 = vld [vmem:[%s1 + $0x5d8] sm:$0xf]
  %v433 = vld [vmem:[%s1 + $0x5dc] sm:$0xf]
  %v434 = vld [vmem:[%s1 + $0x5e0] sm:$0xf]
  %v435 = vld [vmem:[%s1 + $0x5e4] sm:$0xf]
  %v436 = vld [vmem:[%s1 + $0x5e8] sm:$0xf]
  %v437 = vld [vmem:[%s1 + $0x5ec] sm:$0xf]
  %v438 = vld [vmem:[%s1 + $0x5f0] sm:$0xf]
  %v439 = vld [vmem:[%s1 + $0x5f4] sm:$0xf]
  %v440 = vld [vmem:[%s1 + $0x5f8] sm:$0xf]
  %v441 = vld [vmem:[%s1 + $0x5fc] sm:$0xf]
  %v442 = vld [vmem:[%s1 + $0x600] sm:$0xf]
  %v443 = vld [vmem:[%s1 + $0x604] sm:$0xf]
  %v444 = vld [vmem:[%s1 + $0x608] sm:$0xf]
  %v445 = vld [vmem:[%s1 + $0x60c] sm:$0xf]
  %v446 = vld [vmem:[%s1 + $0x610] sm:$0xf]
  %v447 = vld [vmem:[%s1 + $0x614] sm:$0xf]
  %v448 = vld [vmem:[%s1 + $0x618] sm:$0xf]
  %v449 = vld [vmem:[%s1 + $0x61c] sm:$0xf]
  %v450 = vld [vmem:[%s2] sm:$0x1]
  %v452 = vlaneseq
  %v453 = vshrl.u32 %v452, 7
  %v454 = vsub.s32 0, %v453
  %v455 = vrot.slane %v450, %v454
  %v483 = vunpack.c.l.b16 %v32
  %v484 = vunpack.c.h.b16 %v32
  %v485 = vunpack.c.l.b16 %v33
  %v486 = vunpack.c.h.b16 %v33
  %v487 = vunpack.c.l.b16 %v34
  %v488 = vunpack.c.h.b16 %v34
  %v489 = vunpack.c.l.b16 %v35
  %v490 = vunpack.c.h.b16 %v35
  %v491 = vunpack.c.l.b16 %v36
  %v492 = vunpack.c.h.b16 %v36
  %v493 = vunpack.c.l.b16 %v37
  %v494 = vunpack.c.h.b16 %v37
  %v495 = vunpack.c.l.b16 %v38
  %v496 = vunpack.c.h.b16 %v38
  %v497 = vunpack.c.l.b16 %v39
  %v498 = vunpack.c.h.b16 %v39
  %v499 = vunpack.c.l.b16 %v40
  %v500 = vunpack.c.h.b16 %v40
  %v501 = vunpack.c.l.b16 %v41
  %v502 = vunpack.c.h.b16 %v41
  %v503 = vunpack.c.l.b16 %v42
  %v504 = vunpack.c.h.b16 %v42
  %v505 = vunpack.c.l.b16 %v43
  %v506 = vunpack.c.h.b16 %v43
  %v507 = vunpack.c.l.b16 %v44
  %v508 = vunpack.c.l.b16 %v45
  %v509 = vunpack.c.h.b16 %v45
  %v510 = vunpack.c.l.b16 %v46
  %v511 = vunpack.c.h.b16 %v46
  %v512 = vunpack.c.l.b16 %v47
  %v513 = vunpack.c.h.b16 %v47
  %v514 = vunpack.c.l.b16 %v48
  %v515 = vunpack.c.h.b16 %v48
  %v516 = vunpack.c.l.b16 %v49
  %v517 = vunpack.c.h.b16 %v49
  %v518 = vunpack.c.l.b16 %v50
  %v519 = vunpack.c.h.b16 %v50
  %v520 = vunpack.c.l.b16 %v51
  %v521 = vunpack.c.h.b16 %v51
  %v522 = vunpack.c.l.b16 %v52
  %v523 = vunpack.c.h.b16 %v52
  %v524 = vunpack.c.l.b16 %v53
  %v525 = vunpack.c.h.b16 %v53
  %v526 = vunpack.c.l.b16 %v54
  %v527 = vunpack.c.h.b16 %v54
  %v528 = vunpack.c.l.b16 %v55
  %v529 = vunpack.c.h.b16 %v55
  %v530 = vunpack.c.l.b16 %v56
  %v531 = vunpack.c.h.b16 %v56
  %v532 = vunpack.c.l.b16 %v57
  %v533 = vpack.c.b16 %v508, %v483
  %v534 = vpack.c.b16 %v509, %v484
  %v535 = vpack.c.b16 %v510, %v485
  %v536 = vpack.c.b16 %v511, %v486
  %v537 = vpack.c.b16 %v512, %v487
  %v538 = vpack.c.b16 %v513, %v488
  %v539 = vpack.c.b16 %v514, %v489
  %v540 = vpack.c.b16 %v515, %v490
  %v541 = vpack.c.b16 %v516, %v491
  %v542 = vpack.c.b16 %v517, %v492
  %v543 = vpack.c.b16 %v518, %v493
  %v544 = vpack.c.b16 %v519, %v494
  %v545 = vpack.c.b16 %v520, %v495
  %v546 = vpack.c.b16 %v521, %v496
  %v547 = vpack.c.b16 %v522, %v497
  %v548 = vpack.c.b16 %v523, %v498
  %v549 = vpack.c.b16 %v524, %v499
  %v550 = vpack.c.b16 %v525, %v500
  %v551 = vpack.c.b16 %v526, %v501
  %v552 = vpack.c.b16 %v527, %v502
  %v553 = vpack.c.b16 %v528, %v503
  %v554 = vpack.c.b16 %v529, %v504
  %v555 = vpack.c.b16 %v530, %v505
  %v556 = vpack.c.b16 %v531, %v506
  %v557 = vpack.c.b16 %v532, %v507
  %v974 = vunpack.c.l.b16 %v58
  %v975 = vunpack.c.l.b16 %v59
  %v976 = vunpack.c.l.b16 %v60
  %v977 = vunpack.c.l.b16 %v61
  %v978 = vunpack.c.l.b16 %v62
  %v979 = vunpack.c.l.b16 %v63
  %v980 = vunpack.c.l.b16 %v64
  %v981 = vunpack.c.l.b16 %v65
  %v982 = vunpack.c.l.b16 %v66
  %v983 = vunpack.c.l.b16 %v67
  %v984 = vunpack.c.l.b16 %v68
  %v985 = vunpack.c.l.b16 %v69
  %v986 = vunpack.c.l.b16 %v70
  %v987 = vunpack.c.l.b16 %v71
  %v988 = vunpack.c.l.b16 %v72
  %v989 = vunpack.c.l.b16 %v73
  %v990 = vunpack.c.l.b16 %v74
  %v991 = vunpack.c.l.b16 %v75
  %v992 = vunpack.c.l.b16 %v76
  %v993 = vunpack.c.l.b16 %v77
  %v994 = vunpack.c.l.b16 %v78
  %v995 = vunpack.c.l.b16 %v79
  %v996 = vunpack.c.l.b16 %v80
  %v997 = vunpack.c.l.b16 %v81
  %v998 = vunpack.c.l.b16 %v82
  %v999 = vunpack.c.l.b16 %v83
  %v1000 = vunpack.c.l.b16 %v84
  %v1001 = vunpack.c.l.b16 %v85
  %v1002 = vunpack.c.l.b16 %v86
  %v1003 = vunpack.c.l.b16 %v87
  %v1004 = vunpack.c.l.b16 %v88
  %v1005 = vunpack.c.l.b16 %v89
  %v1006 = vunpack.c.l.b16 %v90
  %v1007 = vunpack.c.l.b16 %v91
  %v1008 = vunpack.c.l.b16 %v92
  %v1009 = vunpack.c.l.b16 %v93
  %v1010 = vunpack.c.l.b16 %v94
  %v1011 = vunpack.c.l.b16 %v95
  %v1012 = vunpack.c.l.b16 %v96
  %v1013 = vunpack.c.l.b16 %v97
  %v1014 = vunpack.c.l.b16 %v98
  %v1015 = vunpack.c.l.b16 %v99
  %v1016 = vunpack.c.l.b16 %v100
  %v1017 = vunpack.c.l.b16 %v101
  %v1018 = vunpack.c.l.b16 %v102
  %v1019 = vunpack.c.l.b16 %v103
  %v1020 = vunpack.c.l.b16 %v104
  %v1021 = vunpack.c.l.b16 %v105
  %v1022 = vunpack.c.l.b16 %v106
  %v1023 = vunpack.c.l.b16 %v107
  %v1024 = vunpack.c.l.b16 %v108
  %v1025 = vunpack.c.l.b16 %v109
  %v1026 = vunpack.c.l.b16 %v110
  %v1027 = vunpack.c.l.b16 %v111
  %v1028 = vunpack.c.l.b16 %v112
  %v1029 = vunpack.c.l.b16 %v113
  %v1030 = vunpack.c.l.b16 %v114
  %v1031 = vunpack.c.l.b16 %v115
  %v1032 = vunpack.c.l.b16 %v116
  %v1033 = vunpack.c.l.b16 %v117
  %v1034 = vunpack.c.l.b16 %v118
  %v1035 = vunpack.c.l.b16 %v119
  %v1036 = vunpack.c.l.b16 %v120
  %v1037 = vunpack.c.l.b16 %v121
  %v1038 = vunpack.c.l.b16 %v122
  %v1039 = vunpack.c.l.b16 %v123
  %v1040 = vunpack.c.l.b16 %v124
  %v1041 = vunpack.c.l.b16 %v125
  %v1042 = vunpack.c.l.b16 %v126
  %v1043 = vunpack.c.l.b16 %v127
  %v1044 = vunpack.c.l.b16 %v128
  %v1045 = vunpack.c.l.b16 %v129
  %v1046 = vunpack.c.l.b16 %v130
  %v1047 = vunpack.c.l.b16 %v131
  %v1048 = vunpack.c.l.b16 %v132
  %v1049 = vunpack.c.l.b16 %v133
  %v1050 = vunpack.c.l.b16 %v134
  %v1051 = vunpack.c.l.b16 %v135
  %v1052 = vunpack.c.l.b16 %v136
  %v1053 = vunpack.c.l.b16 %v137
  %v1054 = vunpack.c.l.b16 %v138
  %v1055 = vunpack.c.l.b16 %v139
  %v1056 = vunpack.c.l.b16 %v140
  %v1057 = vunpack.c.l.b16 %v141
  %v1058 = vunpack.c.l.b16 %v142
  %v1059 = vunpack.c.l.b16 %v143
  %v1060 = vunpack.c.l.b16 %v144
  %v1061 = vunpack.c.l.b16 %v145
  %v1062 = vunpack.c.l.b16 %v146
  %v1063 = vunpack.c.l.b16 %v147
  %v1064 = vunpack.c.l.b16 %v148
  %v1065 = vunpack.c.l.b16 %v149
  %v1066 = vunpack.c.l.b16 %v150
  %v1067 = vunpack.c.l.b16 %v151
  %v1068 = vunpack.c.l.b16 %v152
  %v1069 = vunpack.c.l.b16 %v153
  %v1070 = vunpack.c.l.b16 %v154
  %v1071 = vunpack.c.l.b16 %v155
  %v1072 = vunpack.c.l.b16 %v156
  %v1073 = vunpack.c.l.b16 %v157
  %v1074 = vunpack.c.l.b16 %v158
  %v1075 = vunpack.c.l.b16 %v159
  %v1076 = vunpack.c.l.b16 %v160
  %v1077 = vunpack.c.l.b16 %v161
  %v1078 = vunpack.c.l.b16 %v162
  %v1079 = vunpack.c.l.b16 %v163
  %v1080 = vunpack.c.l.b16 %v164
  %v1081 = vunpack.c.l.b16 %v165
  %v1082 = vunpack.c.l.b16 %v166
  %v1083 = vunpack.c.l.b16 %v167
  %v1084 = vunpack.c.l.b16 %v168
  %v1085 = vunpack.c.l.b16 %v169
  %v1086 = vunpack.c.l.b16 %v170
  %v1087 = vunpack.c.l.b16 %v171
  %v1088 = vunpack.c.l.b16 %v172
  %v1089 = vunpack.c.l.b16 %v173
  %v1090 = vunpack.c.l.b16 %v174
  %v1091 = vunpack.c.l.b16 %v175
  %v1092 = vunpack.c.l.b16 %v176
  %v1093 = vunpack.c.l.b16 %v177
  %v1094 = vunpack.c.l.b16 %v178
  %v1095 = vunpack.c.l.b16 %v179
  %v1096 = vunpack.c.l.b16 %v180
  %v1097 = vunpack.c.l.b16 %v181
  %v1098 = vunpack.c.l.b16 %v182
  %v1099 = vunpack.c.l.b16 %v183
  %v1100 = vunpack.c.l.b16 %v184
  %v1101 = vunpack.c.l.b16 %v185
  %v1102 = vunpack.c.l.b16 %v186
  %v1103 = vunpack.c.l.b16 %v187
  %v1104 = vunpack.c.l.b16 %v188
  %v1105 = vunpack.c.l.b16 %v189
  %v1106 = vunpack.c.l.b16 %v190
  %v1107 = vunpack.c.l.b16 %v191
  %v1108 = vunpack.c.l.b16 %v192
  %v1109 = vunpack.c.l.b16 %v193
  %v1110 = vunpack.c.l.b16 %v194
  %v1111 = vunpack.c.l.b16 %v195
  %v1112 = vunpack.c.l.b16 %v196
  %v1113 = vunpack.c.l.b16 %v197
  %v1114 = vunpack.c.l.b16 %v198
  %v1115 = vunpack.c.l.b16 %v199
  %v1116 = vunpack.c.l.b16 %v200
  %v1117 = vunpack.c.l.b16 %v201
  %v1118 = vunpack.c.l.b16 %v202
  %v1119 = vunpack.c.l.b16 %v203
  %v1120 = vunpack.c.l.b16 %v204
  %v1121 = vunpack.c.l.b16 %v205
  %v1122 = vunpack.c.l.b16 %v206
  %v1123 = vunpack.c.l.b16 %v207
  %v1124 = vunpack.c.l.b16 %v208
  %v1125 = vunpack.c.l.b16 %v209
  %v1126 = vunpack.c.l.b16 %v210
  %v1127 = vunpack.c.l.b16 %v211
  %v1128 = vunpack.c.l.b16 %v212
  %v1129 = vunpack.c.l.b16 %v213
  %v1130 = vunpack.c.l.b16 %v214
  %v1131 = vunpack.c.l.b16 %v215
  %v1132 = vunpack.c.l.b16 %v216
  %v1133 = vunpack.c.l.b16 %v217
  %v1134 = vunpack.c.l.b16 %v218
  %v1135 = vunpack.c.l.b16 %v219
  %v1136 = vunpack.c.l.b16 %v220
  %v1137 = vunpack.c.l.b16 %v221
  %v1138 = vunpack.c.l.b16 %v222
  %v1139 = vunpack.c.l.b16 %v223
  %v1140 = vunpack.c.l.b16 %v224
  %v1141 = vunpack.c.l.b16 %v225
  %v1142 = vunpack.c.l.b16 %v226
  %v1143 = vunpack.c.l.b16 %v227
  %v1144 = vunpack.c.l.b16 %v228
  %v1145 = vunpack.c.l.b16 %v229
  %v1146 = vunpack.c.l.b16 %v230
  %v1147 = vunpack.c.l.b16 %v231
  %v1148 = vunpack.c.l.b16 %v232
  %v1149 = vunpack.c.l.b16 %v233
  %v1150 = vunpack.c.l.b16 %v234
  %v1151 = vunpack.c.l.b16 %v235
  %v1152 = vunpack.c.l.b16 %v236
  %v1153 = vunpack.c.l.b16 %v237
  %v1154 = vunpack.c.l.b16 %v238
  %v1155 = vunpack.c.l.b16 %v239
  %v1156 = vunpack.c.l.b16 %v240
  %v1157 = vunpack.c.l.b16 %v241
  %v1158 = vunpack.c.l.b16 %v242
  %v1159 = vunpack.c.l.b16 %v243
  %v1160 = vunpack.c.l.b16 %v244
  %v1161 = vunpack.c.l.b16 %v245
  %v1162 = vunpack.c.l.b16 %v246
  %v1163 = vunpack.c.l.b16 %v247
  %v1164 = vunpack.c.l.b16 %v248
  %v1165 = vunpack.c.l.b16 %v249
  %v1166 = vunpack.c.l.b16 %v250
  %v1167 = vunpack.c.l.b16 %v251
  %v1168 = vunpack.c.l.b16 %v252
  %v1169 = vunpack.c.l.b16 %v253
  %v1170 = vunpack.c.l.b16 %v254
  %v1171 = vunpack.c.l.b16 %v255
  %v1172 = vunpack.c.l.b16 %v256
  %v1173 = vunpack.c.l.b16 %v257
  %v1174 = vunpack.c.l.b16 %v258
  %v1175 = vunpack.c.l.b16 %v259
  %v1176 = vunpack.c.l.b16 %v260
  %v1177 = vunpack.c.l.b16 %v261
  %v1178 = vunpack.c.l.b16 %v262
  %v1179 = vunpack.c.l.b16 %v263
  %v1180 = vunpack.c.l.b16 %v264
  %v1181 = vunpack.c.l.b16 %v265
  %v1182 = vunpack.c.l.b16 %v266
  %v1183 = vunpack.c.l.b16 %v267
  %v1184 = vunpack.c.l.b16 %v268
  %v1185 = vunpack.c.l.b16 %v269
  %v1186 = vunpack.c.l.b16 %v270
  %v1187 = vunpack.c.l.b16 %v271
  %v1188 = vunpack.c.l.b16 %v272
  %v1189 = vunpack.c.l.b16 %v273
  %v1190 = vunpack.c.l.b16 %v274
  %v1191 = vunpack.c.l.b16 %v275
  %v1192 = vunpack.c.l.b16 %v276
  %v1193 = vunpack.c.l.b16 %v277
  %v1194 = vunpack.c.l.b16 %v278
  %v1195 = vunpack.c.l.b16 %v279
  %v1196 = vunpack.c.l.b16 %v280
  %v1197 = vunpack.c.l.b16 %v281
  %v1198 = vunpack.c.l.b16 %v282
  %v1199 = vunpack.c.l.b16 %v283
  %v1200 = vunpack.c.l.b16 %v284
  %v1201 = vunpack.c.l.b16 %v285
  %v1202 = vunpack.c.l.b16 %v286
  %v1203 = vunpack.c.l.b16 %v287
  %v1204 = vunpack.c.l.b16 %v288
  %v1205 = vunpack.c.l.b16 %v289
  %v1206 = vunpack.c.l.b16 %v290
  %v1207 = vunpack.c.l.b16 %v291
  %v1208 = vunpack.c.l.b16 %v292
  %v1209 = vunpack.c.l.b16 %v293
  %v1210 = vunpack.c.l.b16 %v294
  %v1211 = vunpack.c.l.b16 %v295
  %v1212 = vunpack.c.l.b16 %v296
  %v1213 = vunpack.c.l.b16 %v297
  %v1214 = vunpack.c.l.b16 %v298
  %v1215 = vunpack.c.l.b16 %v299
  %v1216 = vunpack.c.l.b16 %v300
  %v1217 = vunpack.c.l.b16 %v301
  %v1218 = vunpack.c.l.b16 %v302
  %v1219 = vunpack.c.l.b16 %v303
  %v1220 = vunpack.c.l.b16 %v304
  %v1221 = vunpack.c.l.b16 %v305
  %v1222 = vunpack.c.l.b16 %v306
  %v1223 = vunpack.c.l.b16 %v307
  %v1224 = vunpack.c.l.b16 %v308
  %v1225 = vunpack.c.l.b16 %v309
  %v1226 = vunpack.c.l.b16 %v310
  %v1227 = vunpack.c.l.b16 %v311
  %v1228 = vunpack.c.l.b16 %v312
  %v1229 = vunpack.c.l.b16 %v313
  %v1230 = vunpack.c.l.b16 %v314
  %v1231 = vunpack.c.l.b16 %v315
  %v1232 = vunpack.c.l.b16 %v316
  %v1233 = vunpack.c.l.b16 %v317
  %v1234 = vunpack.c.l.b16 %v318
  %v1235 = vunpack.c.l.b16 %v319
  %v1236 = vunpack.c.l.b16 %v320
  %v1237 = vunpack.c.l.b16 %v321
  %v1238 = vunpack.c.l.b16 %v322
  %v1239 = vunpack.c.l.b16 %v323
  %v1240 = vunpack.c.l.b16 %v324
  %v1241 = vunpack.c.l.b16 %v325
  %v1242 = vunpack.c.l.b16 %v326
  %v1243 = vunpack.c.l.b16 %v327
  %v1244 = vunpack.c.l.b16 %v328
  %v1245 = vunpack.c.l.b16 %v329
  %v1246 = vunpack.c.l.b16 %v330
  %v1247 = vunpack.c.l.b16 %v331
  %v1248 = vunpack.c.l.b16 %v332
  %v1249 = vunpack.c.l.b16 %v333
  %v1250 = vunpack.c.l.b16 %v334
  %v1251 = vunpack.c.l.b16 %v335
  %v1252 = vunpack.c.l.b16 %v336
  %v1253 = vunpack.c.l.b16 %v337
  %v1254 = vunpack.c.l.b16 %v338
  %v1255 = vunpack.c.l.b16 %v339
  %v1256 = vunpack.c.l.b16 %v340
  %v1257 = vunpack.c.l.b16 %v341
  %v1258 = vunpack.c.l.b16 %v342
  %v1259 = vunpack.c.l.b16 %v343
  %v1260 = vunpack.c.l.b16 %v344
  %v1261 = vunpack.c.l.b16 %v345
  %v1262 = vunpack.c.l.b16 %v346
  %v1263 = vunpack.c.l.b16 %v347
  %v1264 = vunpack.c.l.b16 %v348
  %v1265 = vunpack.c.l.b16 %v349
  %v1266 = vunpack.c.l.b16 %v350
  %v1267 = vunpack.c.l.b16 %v351
  %v1268 = vunpack.c.l.b16 %v352
  %v1269 = vunpack.c.l.b16 %v353
  %v1270 = vunpack.c.l.b16 %v354
  %v1271 = vunpack.c.l.b16 %v355
  %v1272 = vunpack.c.l.b16 %v356
  %v1273 = vunpack.c.l.b16 %v357
  %v1274 = vunpack.c.l.b16 %v358
  %v1275 = vunpack.c.l.b16 %v359
  %v1276 = vunpack.c.l.b16 %v360
  %v1277 = vunpack.c.l.b16 %v361
  %v1278 = vunpack.c.l.b16 %v362
  %v1279 = vunpack.c.l.b16 %v363
  %v1280 = vunpack.c.l.b16 %v364
  %v1281 = vunpack.c.l.b16 %v365
  %v1282 = vunpack.c.l.b16 %v366
  %v1283 = vunpack.c.l.b16 %v367
  %v1284 = vunpack.c.l.b16 %v368
  %v1285 = vunpack.c.l.b16 %v369
  %v1286 = vunpack.c.l.b16 %v370
  %v1287 = vunpack.c.l.b16 %v371
  %v1288 = vunpack.c.l.b16 %v372
  %v1289 = vunpack.c.l.b16 %v373
  %v1290 = vunpack.c.l.b16 %v374
  %v1291 = vunpack.c.l.b16 %v375
  %v1292 = vunpack.c.l.b16 %v376
  %v1293 = vunpack.c.l.b16 %v377
  %v1294 = vunpack.c.l.b16 %v378
  %v1295 = vunpack.c.l.b16 %v379
  %v1296 = vunpack.c.l.b16 %v380
  %v1297 = vunpack.c.l.b16 %v381
  %v1298 = vunpack.c.l.b16 %v382
  %v1299 = vunpack.c.l.b16 %v383
  %v1300 = vunpack.c.l.b16 %v384
  %v1301 = vunpack.c.l.b16 %v385
  %v1302 = vunpack.c.l.b16 %v386
  %v1303 = vunpack.c.l.b16 %v387
  %v1304 = vunpack.c.l.b16 %v388
  %v1305 = vunpack.c.l.b16 %v389
  %v1306 = vunpack.c.l.b16 %v390
  %v1307 = vunpack.c.l.b16 %v391
  %v1308 = vunpack.c.l.b16 %v392
  %v1309 = vunpack.c.l.b16 %v393
  %v1310 = vunpack.c.l.b16 %v394
  %v1311 = vunpack.c.l.b16 %v395
  %v1312 = vunpack.c.l.b16 %v396
  %v1313 = vunpack.c.l.b16 %v397
  %v1314 = vunpack.c.l.b16 %v398
  %v1315 = vunpack.c.l.b16 %v399
  %v1316 = vunpack.c.l.b16 %v400
  %v1317 = vunpack.c.l.b16 %v401
  %v1318 = vunpack.c.l.b16 %v402
  %v1319 = vunpack.c.l.b16 %v403
  %v1320 = vunpack.c.l.b16 %v404
  %v1321 = vunpack.c.l.b16 %v405
  %v1322 = vunpack.c.l.b16 %v406
  %v1323 = vunpack.c.l.b16 %v407
  %v1324 = vunpack.c.l.b16 %v408
  %v1325 = vunpack.c.l.b16 %v409
  %v1326 = vunpack.c.l.b16 %v410
  %v1327 = vunpack.c.l.b16 %v411
  %v1328 = vunpack.c.l.b16 %v412
  %v1329 = vunpack.c.l.b16 %v413
  %v1330 = vunpack.c.l.b16 %v414
  %v1331 = vunpack.c.l.b16 %v415
  %v1332 = vunpack.c.l.b16 %v416
  %v1333 = vunpack.c.l.b16 %v417
  %v1334 = vunpack.c.l.b16 %v418
  %v1335 = vunpack.c.l.b16 %v419
  %v1336 = vunpack.c.l.b16 %v420
  %v1337 = vunpack.c.l.b16 %v421
  %v1338 = vunpack.c.l.b16 %v422
  %v1339 = vunpack.c.l.b16 %v423
  %v1340 = vunpack.c.l.b16 %v424
  %v1341 = vunpack.c.l.b16 %v425
  %v1342 = vunpack.c.l.b16 %v426
  %v1343 = vunpack.c.l.b16 %v427
  %v1344 = vunpack.c.l.b16 %v428
  %v1345 = vunpack.c.l.b16 %v429
  %v1346 = vunpack.c.l.b16 %v430
  %v1347 = vunpack.c.l.b16 %v431
  %v1348 = vunpack.c.l.b16 %v432
  %v1349 = vunpack.c.l.b16 %v433
  %v1350 = vunpack.c.l.b16 %v434
  %v1351 = vunpack.c.l.b16 %v435
  %v1352 = vunpack.c.l.b16 %v436
  %v1353 = vunpack.c.l.b16 %v437
  %v1354 = vunpack.c.l.b16 %v438
  %v1355 = vunpack.c.l.b16 %v439
  %v1356 = vunpack.c.l.b16 %v440
  %v1357 = vunpack.c.l.b16 %v441
  %v1358 = vunpack.c.l.b16 %v442
  %v1359 = vunpack.c.l.b16 %v443
  %v1360 = vunpack.c.l.b16 %v444
  %v1361 = vunpack.c.l.b16 %v445
  %v1362 = vunpack.c.l.b16 %v446
  %v1363 = vunpack.c.l.b16 %v447
  %v1364 = vunpack.c.l.b16 %v448
  %v1365 = vunpack.c.l.b16 %v449
  %v1366 = vpack.c.b16 %v975, %v974
  %v1367 = vpack.c.b16 %v977, %v976
  %v1368 = vpack.c.b16 %v979, %v978
  %v1369 = vpack.c.b16 %v981, %v980
  %v1370 = vpack.c.b16 %v983, %v982
  %v1371 = vpack.c.b16 %v985, %v984
  %v1372 = vpack.c.b16 %v987, %v986
  %v1373 = vpack.c.b16 %v989, %v988
  %v1374 = vpack.c.b16 %v991, %v990
  %v1375 = vpack.c.b16 %v993, %v992
  %v1376 = vpack.c.b16 %v995, %v994
  %v1377 = vpack.c.b16 %v997, %v996
  %v1378 = vpack.c.b16 %v999, %v998
  %v1379 = vpack.c.b16 %v1001, %v1000
  %v1380 = vpack.c.b16 %v1003, %v1002
  %v1381 = vpack.c.b16 %v1005, %v1004
  %v1382 = vpack.c.b16 %v1007, %v1006
  %v1383 = vpack.c.b16 %v1009, %v1008
  %v1384 = vpack.c.b16 %v1011, %v1010
  %v1385 = vpack.c.b16 %v1013, %v1012
  %v1386 = vpack.c.b16 %v1015, %v1014
  %v1387 = vpack.c.b16 %v1017, %v1016
  %v1388 = vpack.c.b16 %v1019, %v1018
  %v1389 = vpack.c.b16 %v1021, %v1020
  %v1390 = vpack.c.b16 %v1023, %v1022
  %v1391 = vpack.c.b16 %v1025, %v1024
  %v1392 = vpack.c.b16 %v1027, %v1026
  %v1393 = vpack.c.b16 %v1029, %v1028
  %v1394 = vpack.c.b16 %v1031, %v1030
  %v1395 = vpack.c.b16 %v1033, %v1032
  %v1396 = vpack.c.b16 %v1035, %v1034
  %v1397 = vpack.c.b16 %v1037, %v1036
  %v1398 = vpack.c.b16 %v1039, %v1038
  %v1399 = vpack.c.b16 %v1041, %v1040
  %v1400 = vpack.c.b16 %v1043, %v1042
  %v1401 = vpack.c.b16 %v1045, %v1044
  %v1402 = vpack.c.b16 %v1047, %v1046
  %v1403 = vpack.c.b16 %v1049, %v1048
  %v1404 = vpack.c.b16 %v1051, %v1050
  %v1405 = vpack.c.b16 %v1053, %v1052
  %v1406 = vpack.c.b16 %v1055, %v1054
  %v1407 = vpack.c.b16 %v1057, %v1056
  %v1408 = vpack.c.b16 %v1059, %v1058
  %v1409 = vpack.c.b16 %v1061, %v1060
  %v1410 = vpack.c.b16 %v1063, %v1062
  %v1411 = vpack.c.b16 %v1065, %v1064
  %v1412 = vpack.c.b16 %v1067, %v1066
  %v1413 = vpack.c.b16 %v1069, %v1068
  %v1414 = vpack.c.b16 %v1071, %v1070
  %v1415 = vpack.c.b16 %v1073, %v1072
  %v1416 = vpack.c.b16 %v1075, %v1074
  %v1417 = vpack.c.b16 %v1077, %v1076
  %v1418 = vpack.c.b16 %v1079, %v1078
  %v1419 = vpack.c.b16 %v1081, %v1080
  %v1420 = vpack.c.b16 %v1083, %v1082
  %v1421 = vpack.c.b16 %v1085, %v1084
  %v1422 = vpack.c.b16 %v1087, %v1086
  %v1423 = vpack.c.b16 %v1089, %v1088
  %v1424 = vpack.c.b16 %v1091, %v1090
  %v1425 = vpack.c.b16 %v1093, %v1092
  %v1426 = vpack.c.b16 %v1095, %v1094
  %v1427 = vpack.c.b16 %v1097, %v1096
  %v1428 = vpack.c.b16 %v1099, %v1098
  %v1429 = vpack.c.b16 %v1101, %v1100
  %v1430 = vpack.c.b16 %v1103, %v1102
  %v1431 = vpack.c.b16 %v1105, %v1104
  %v1432 = vpack.c.b16 %v1107, %v1106
  %v1433 = vpack.c.b16 %v1109, %v1108
  %v1434 = vpack.c.b16 %v1111, %v1110
  %v1435 = vpack.c.b16 %v1113, %v1112
  %v1436 = vpack.c.b16 %v1115, %v1114
  %v1437 = vpack.c.b16 %v1117, %v1116
  %v1438 = vpack.c.b16 %v1119, %v1118
  %v1439 = vpack.c.b16 %v1121, %v1120
  %v1440 = vpack.c.b16 %v1123, %v1122
  %v1441 = vpack.c.b16 %v1125, %v1124
  %v1442 = vpack.c.b16 %v1127, %v1126
  %v1443 = vpack.c.b16 %v1129, %v1128
  %v1444 = vpack.c.b16 %v1131, %v1130
  %v1445 = vpack.c.b16 %v1133, %v1132
  %v1446 = vpack.c.b16 %v1135, %v1134
  %v1447 = vpack.c.b16 %v1137, %v1136
  %v1448 = vpack.c.b16 %v1139, %v1138
  %v1449 = vpack.c.b16 %v1141, %v1140
  %v1450 = vpack.c.b16 %v1143, %v1142
  %v1451 = vpack.c.b16 %v1145, %v1144
  %v1452 = vpack.c.b16 %v1147, %v1146
  %v1453 = vpack.c.b16 %v1149, %v1148
  %v1454 = vpack.c.b16 %v1151, %v1150
  %v1455 = vpack.c.b16 %v1153, %v1152
  %v1456 = vpack.c.b16 %v1155, %v1154
  %v1457 = vpack.c.b16 %v1157, %v1156
  %v1458 = vpack.c.b16 %v1159, %v1158
  %v1459 = vpack.c.b16 %v1161, %v1160
  %v1460 = vpack.c.b16 %v1163, %v1162
  %v1461 = vpack.c.b16 %v1165, %v1164
  %v1462 = vpack.c.b16 %v1167, %v1166
  %v1463 = vpack.c.b16 %v1169, %v1168
  %v1464 = vpack.c.b16 %v1171, %v1170
  %v1465 = vpack.c.b16 %v1173, %v1172
  %v1466 = vpack.c.b16 %v1175, %v1174
  %v1467 = vpack.c.b16 %v1177, %v1176
  %v1468 = vpack.c.b16 %v1179, %v1178
  %v1469 = vpack.c.b16 %v1181, %v1180
  %v1470 = vpack.c.b16 %v1183, %v1182
  %v1471 = vpack.c.b16 %v1185, %v1184
  %v1472 = vpack.c.b16 %v1187, %v1186
  %v1473 = vpack.c.b16 %v1189, %v1188
  %v1474 = vpack.c.b16 %v1191, %v1190
  %v1475 = vpack.c.b16 %v1193, %v1192
  %v1476 = vpack.c.b16 %v1195, %v1194
  %v1477 = vpack.c.b16 %v1197, %v1196
  %v1478 = vpack.c.b16 %v1199, %v1198
  %v1479 = vpack.c.b16 %v1201, %v1200
  %v1480 = vpack.c.b16 %v1203, %v1202
  %v1481 = vpack.c.b16 %v1205, %v1204
  %v1482 = vpack.c.b16 %v1207, %v1206
  %v1483 = vpack.c.b16 %v1209, %v1208
  %v1484 = vpack.c.b16 %v1211, %v1210
  %v1485 = vpack.c.b16 %v1213, %v1212
  %v1486 = vpack.c.b16 %v1215, %v1214
  %v1487 = vpack.c.b16 %v1217, %v1216
  %v1488 = vpack.c.b16 %v1219, %v1218
  %v1489 = vpack.c.b16 %v1221, %v1220
  %v1490 = vpack.c.b16 %v1223, %v1222
  %v1491 = vpack.c.b16 %v1225, %v1224
  %v1492 = vpack.c.b16 %v1227, %v1226
  %v1493 = vpack.c.b16 %v1229, %v1228
  %v1494 = vpack.c.b16 %v1231, %v1230
  %v1495 = vpack.c.b16 %v1233, %v1232
  %v1496 = vpack.c.b16 %v1235, %v1234
  %v1497 = vpack.c.b16 %v1237, %v1236
  %v1498 = vpack.c.b16 %v1239, %v1238
  %v1499 = vpack.c.b16 %v1241, %v1240
  %v1500 = vpack.c.b16 %v1243, %v1242
  %v1501 = vpack.c.b16 %v1245, %v1244
  %v1502 = vpack.c.b16 %v1247, %v1246
  %v1503 = vpack.c.b16 %v1249, %v1248
  %v1504 = vpack.c.b16 %v1251, %v1250
  %v1505 = vpack.c.b16 %v1253, %v1252
  %v1506 = vpack.c.b16 %v1255, %v1254
  %v1507 = vpack.c.b16 %v1257, %v1256
  %v1508 = vpack.c.b16 %v1259, %v1258
  %v1509 = vpack.c.b16 %v1261, %v1260
  %v1510 = vpack.c.b16 %v1263, %v1262
  %v1511 = vpack.c.b16 %v1265, %v1264
  %v1512 = vpack.c.b16 %v1267, %v1266
  %v1513 = vpack.c.b16 %v1269, %v1268
  %v1514 = vpack.c.b16 %v1271, %v1270
  %v1515 = vpack.c.b16 %v1273, %v1272
  %v1516 = vpack.c.b16 %v1275, %v1274
  %v1517 = vpack.c.b16 %v1277, %v1276
  %v1518 = vpack.c.b16 %v1279, %v1278
  %v1519 = vpack.c.b16 %v1281, %v1280
  %v1520 = vpack.c.b16 %v1283, %v1282
  %v1521 = vpack.c.b16 %v1285, %v1284
  %v1522 = vpack.c.b16 %v1287, %v1286
  %v1523 = vpack.c.b16 %v1289, %v1288
  %v1524 = vpack.c.b16 %v1291, %v1290
  %v1525 = vpack.c.b16 %v1293, %v1292
  %v1526 = vpack.c.b16 %v1295, %v1294
  %v1527 = vpack.c.b16 %v1297, %v1296
  %v1528 = vpack.c.b16 %v1299, %v1298
  %v1529 = vpack.c.b16 %v1301, %v1300
  %v1530 = vpack.c.b16 %v1303, %v1302
  %v1531 = vpack.c.b16 %v1305, %v1304
  %v1532 = vpack.c.b16 %v1307, %v1306
  %v1533 = vpack.c.b16 %v1309, %v1308
  %v1534 = vpack.c.b16 %v1311, %v1310
  %v1535 = vpack.c.b16 %v1313, %v1312
  %v1536 = vpack.c.b16 %v1315, %v1314
  %v1537 = vpack.c.b16 %v1317, %v1316
  %v1538 = vpack.c.b16 %v1319, %v1318
  %v1539 = vpack.c.b16 %v1321, %v1320
  %v1540 = vpack.c.b16 %v1323, %v1322
  %v1541 = vpack.c.b16 %v1325, %v1324
  %v1542 = vpack.c.b16 %v1327, %v1326
  %v1543 = vpack.c.b16 %v1329, %v1328
  %v1544 = vpack.c.b16 %v1331, %v1330
  %v1545 = vpack.c.b16 %v1333, %v1332
  %v1546 = vpack.c.b16 %v1335, %v1334
  %v1547 = vpack.c.b16 %v1337, %v1336
  %v1548 = vpack.c.b16 %v1339, %v1338
  %v1549 = vpack.c.b16 %v1341, %v1340
  %v1550 = vpack.c.b16 %v1343, %v1342
  %v1551 = vpack.c.b16 %v1345, %v1344
  %v1552 = vpack.c.b16 %v1347, %v1346
  %v1553 = vpack.c.b16 %v1349, %v1348
  %v1554 = vpack.c.b16 %v1351, %v1350
  %v1555 = vpack.c.b16 %v1353, %v1352
  %v1556 = vpack.c.b16 %v1355, %v1354
  %v1557 = vpack.c.b16 %v1357, %v1356
  %v1558 = vpack.c.b16 %v1359, %v1358
  %v1559 = vpack.c.b16 %v1361, %v1360
  %v1560 = vpack.c.b16 %v1363, %v1362
  %v1561 = vpack.c.b16 %v1365, %v1364
  %vm1758 = vcmask 523264
  %v1760 = vsel %vm1758, %v557, 0
  %1762 = vmatprep.subr.bf16.mxu0 0
  %1763 = vmatpush1.bf16.msra.mxu0 %v1366
  %1764 = vmatprep.subr.bf16.mxu0 0
  %1765 = vmatpush1.bf16.msra.mxu0 %v1367
  %1766 = vmatprep.subr.bf16.mxu0 0
  %1767 = vmatpush1.bf16.msra.mxu0 %v1368
  %1768 = vmatprep.subr.bf16.mxu0 0
  %1769 = vmatpush1.bf16.msra.mxu0 %v1369
  %1770 = vmatprep.subr.bf16.mxu0 0
  %1771 = vmatpush1.bf16.msra.mxu0 %v1370
  %1772 = vmatprep.subr.bf16.mxu0 0
  %1773 = vmatpush1.bf16.msra.mxu0 %v1371
  %1774 = vmatprep.subr.bf16.mxu0 0
  %1775 = vmatpush1.bf16.msra.mxu0 %v1372
  %1776 = vmatprep.subr.bf16.mxu0 0
  %1777 = vmatpush1.bf16.msra.mxu0 %v1373
  %1778 = vmatprep.subr.bf16.mxu0 0
  %1779 = vmatpush1.bf16.msra.mxu0 %v1374
  %1780 = vmatprep.subr.bf16.mxu0 0
  %1781 = vmatpush1.bf16.msra.mxu0 %v1375
  %1782 = vmatprep.subr.bf16.mxu0 0
  %1783 = vmatpush1.bf16.msra.mxu0 %v1376
  %1784 = vmatprep.subr.bf16.mxu0 0
  %1785 = vmatpush1.bf16.msra.mxu0 %v1377
  %1786 = vmatprep.subr.bf16.mxu0 0
  %1787 = vmatpush1.bf16.msra.mxu0 %v1378
  %1788 = vmatprep.subr.bf16.mxu0 0
  %1789 = vmatpush1.bf16.msra.mxu0 %v1379
  %1790 = vmatprep.subr.bf16.mxu0 0
  %1791 = vmatpush1.bf16.msra.mxu0 %v1380
  %1792 = vmatprep.subr.bf16.mxu0 0
  %1793 = vmatpush1.bf16.msra.mxu0 %v1381
  %1794 = vmatprep.mubr.bf16.mxu0 %v534
  %1795 = vmatmul.mubr.bf16.gmra.mrb[0].mxu0 %v533
  %v1796 = vpop.f32.mrb[0].mxu0
  %v1797 = vadd.f32 %v455, %v1796
  %v1798 = vpop.f32.mrb[0].mxu0
  %v1799 = vpop.f32.mrb[0].mxu0
  %v1800 = vadd.f32 %v455, %v1799
  %v1801 = vpop.f32.mrb[0].mxu0
  %1802 = vdwg.mxu0
  %1803 = vmatprep.subr.bf16.mxu0 0
  %1804 = vmatpush1.bf16.msra.mxu0 %v1382
  %1805 = vmatprep.subr.bf16.mxu0 0
  %1806 = vmatpush1.bf16.msra.mxu0 %v1383
  %1807 = vmatprep.subr.bf16.mxu0 0
  %1808 = vmatpush1.bf16.msra.mxu0 %v1384
  %1809 = vmatprep.subr.bf16.mxu0 0
  %1810 = vmatpush1.bf16.msra.mxu0 %v1385
  %1811 = vmatprep.subr.bf16.mxu0 0
  %1812 = vmatpush1.bf16.msra.mxu0 %v1386
  %1813 = vmatprep.subr.bf16.mxu0 0
  %1814 = vmatpush1.bf16.msra.mxu0 %v1387
  %1815 = vmatprep.subr.bf16.mxu0 0
  %1816 = vmatpush1.bf16.msra.mxu0 %v1388
  %1817 = vmatprep.subr.bf16.mxu0 0
  %1818 = vmatpush1.bf16.msra.mxu0 %v1389
  %1819 = vmatprep.subr.bf16.mxu0 0
  %1820 = vmatpush1.bf16.msra.mxu0 %v1390
  %1821 = vmatprep.subr.bf16.mxu0 0
  %1822 = vmatpush1.bf16.msra.mxu0 %v1391
  %1823 = vmatprep.subr.bf16.mxu0 0
  %1824 = vmatpush1.bf16.msra.mxu0 %v1392
  %1825 = vmatprep.subr.bf16.mxu0 0
  %1826 = vmatpush1.bf16.msra.mxu0 %v1393
  %1827 = vmatprep.subr.bf16.mxu0 0
  %1828 = vmatpush1.bf16.msra.mxu0 %v1394
  %1829 = vmatprep.subr.bf16.mxu0 0
  %1830 = vmatpush1.bf16.msra.mxu0 %v1395
  %1831 = vmatprep.subr.bf16.mxu0 0
  %1832 = vmatpush1.bf16.msra.mxu0 %v1396
  %1833 = vmatprep.subr.bf16.mxu0 0
  %1834 = vmatpush1.bf16.msra.mxu0 %v1397
  %1835 = vmatprep.mubr.bf16.mxu0 %v536
  %1836 = vmatmul.mubr.bf16.gmra.mrb[0].mxu0 %v535
  %v1837 = vpop.f32.mrb[0].mxu0
  %v1838 = vadd.f32 %v1797, %v1837
  %v1839 = vpop.f32.mrb[0].mxu0
  %v1840 = vpop.f32.mrb[0].mxu0
  %v1841 = vadd.f32 %v1800, %v1840
  %v1842 = vpop.f32.mrb[0].mxu0
  %1843 = vdwg.mxu0
  %1844 = vmatprep.subr.bf16.mxu0 0
  %1845 = vmatpush1.bf16.msra.mxu0 %v1398
  %1846 = vmatprep.subr.bf16.mxu0 0
  %1847 = vmatpush1.bf16.msra.mxu0 %v1399
  %1848 = vmatprep.subr.bf16.mxu0 0
  %1849 = vmatpush1.bf16.msra.mxu0 %v1400
  %1850 = vmatprep.subr.bf16.mxu0 0
  %1851 = vmatpush1.bf16.msra.mxu0 %v1401
  %1852 = vmatprep.subr.bf16.mxu0 0
  %1853 = vmatpush1.bf16.msra.mxu0 %v1402
  %1854 = vmatprep.subr.bf16.mxu0 0
  %1855 = vmatpush1.bf16.msra.mxu0 %v1403
  %1856 = vmatprep.subr.bf16.mxu0 0
  %1857 = vmatpush1.bf16.msra.mxu0 %v1404
  %1858 = vmatprep.subr.bf16.mxu0 0
  %1859 = vmatpush1.bf16.msra.mxu0 %v1405
  %1860 = vmatprep.subr.bf16.mxu0 0
  %1861 = vmatpush1.bf16.msra.mxu0 %v1406
  %1862 = vmatprep.subr.bf16.mxu0 0
  %1863 = vmatpush1.bf16.msra.mxu0 %v1407
  %1864 = vmatprep.subr.bf16.mxu0 0
  %1865 = vmatpush1.bf16.msra.mxu0 %v1408
  %1866 = vmatprep.subr.bf16.mxu0 0
  %1867 = vmatpush1.bf16.msra.mxu0 %v1409
  %1868 = vmatprep.subr.bf16.mxu0 0
  %1869 = vmatpush1.bf16.msra.mxu0 %v1410
  %1870 = vmatprep.subr.bf16.mxu0 0
  %1871 = vmatpush1.bf16.msra.mxu0 %v1411
  %1872 = vmatprep.subr.bf16.mxu0 0
  %1873 = vmatpush1.bf16.msra.mxu0 %v1412
  %1874 = vmatprep.subr.bf16.mxu0 0
  %1875 = vmatpush1.bf16.msra.mxu0 %v1413
  %1876 = vmatprep.mubr.bf16.mxu0 %v538
  %1877 = vmatmul.mubr.bf16.gmra.mrb[0].mxu0 %v537
  %v1878 = vpop.f32.mrb[0].mxu0
  %v1879 = vadd.f32 %v1838, %v1878
  %v1880 = vpop.f32.mrb[0].mxu0
  %v1881 = vpop.f32.mrb[0].mxu0
  %v1882 = vadd.f32 %v1841, %v1881
  %v1883 = vpop.f32.mrb[0].mxu0
  %1884 = vdwg.mxu0
  %1885 = vmatprep.subr.bf16.mxu0 0
  %1886 = vmatpush1.bf16.msra.mxu0 %v1414
  %1887 = vmatprep.subr.bf16.mxu0 0
  %1888 = vmatpush1.bf16.msra.mxu0 %v1415
  %1889 = vmatprep.subr.bf16.mxu0 0
  %1890 = vmatpush1.bf16.msra.mxu0 %v1416
  %1891 = vmatprep.subr.bf16.mxu0 0
  %1892 = vmatpush1.bf16.msra.mxu0 %v1417
  %1893 = vmatprep.subr.bf16.mxu0 0
  %1894 = vmatpush1.bf16.msra.mxu0 %v1418
  %1895 = vmatprep.subr.bf16.mxu0 0
  %1896 = vmatpush1.bf16.msra.mxu0 %v1419
  %1897 = vmatprep.subr.bf16.mxu0 0
  %1898 = vmatpush1.bf16.msra.mxu0 %v1420
  %1899 = vmatprep.subr.bf16.mxu0 0
  %1900 = vmatpush1.bf16.msra.mxu0 %v1421
  %1901 = vmatprep.subr.bf16.mxu0 0
  %1902 = vmatpush1.bf16.msra.mxu0 %v1422
  %1903 = vmatprep.subr.bf16.mxu0 0
  %1904 = vmatpush1.bf16.msra.mxu0 %v1423
  %1905 = vmatprep.subr.bf16.mxu0 0
  %1906 = vmatpush1.bf16.msra.mxu0 %v1424
  %1907 = vmatprep.subr.bf16.mxu0 0
  %1908 = vmatpush1.bf16.msra.mxu0 %v1425
  %1909 = vmatprep.subr.bf16.mxu0 0
  %1910 = vmatpush1.bf16.msra.mxu0 %v1426
  %1911 = vmatprep.subr.bf16.mxu0 0
  %1912 = vmatpush1.bf16.msra.mxu0 %v1427
  %1913 = vmatprep.subr.bf16.mxu0 0
  %1914 = vmatpush1.bf16.msra.mxu0 %v1428
  %1915 = vmatprep.subr.bf16.mxu0 0
  %1916 = vmatpush1.bf16.msra.mxu0 %v1429
  %1917 = vmatprep.mubr.bf16.mxu0 %v540
  %1918 = vmatmul.mubr.bf16.gmra.mrb[0].mxu0 %v539
  %v1919 = vpop.f32.mrb[0].mxu0
  %v1920 = vadd.f32 %v1879, %v1919
  %v1921 = vpop.f32.mrb[0].mxu0
  %v1922 = vpop.f32.mrb[0].mxu0
  %v1923 = vadd.f32 %v1882, %v1922
  %v1924 = vpop.f32.mrb[0].mxu0
  %1925 = vdwg.mxu0
  %1926 = vmatprep.subr.bf16.mxu0 0
  %1927 = vmatpush1.bf16.msra.mxu0 %v1430
  %1928 = vmatprep.subr.bf16.mxu0 0
  %1929 = vmatpush1.bf16.msra.mxu0 %v1431
  %1930 = vmatprep.subr.bf16.mxu0 0
  %1931 = vmatpush1.bf16.msra.mxu0 %v1432
  %1932 = vmatprep.subr.bf16.mxu0 0
  %1933 = vmatpush1.bf16.msra.mxu0 %v1433
  %1934 = vmatprep.subr.bf16.mxu0 0
  %1935 = vmatpush1.bf16.msra.mxu0 %v1434
  %1936 = vmatprep.subr.bf16.mxu0 0
  %1937 = vmatpush1.bf16.msra.mxu0 %v1435
  %1938 = vmatprep.subr.bf16.mxu0 0
  %1939 = vmatpush1.bf16.msra.mxu0 %v1436
  %1940 = vmatprep.subr.bf16.mxu0 0
  %1941 = vmatpush1.bf16.msra.mxu0 %v1437
  %1942 = vmatprep.subr.bf16.mxu0 0
  %1943 = vmatpush1.bf16.msra.mxu0 %v1438
  %1944 = vmatprep.subr.bf16.mxu0 0
  %1945 = vmatpush1.bf16.msra.mxu0 %v1439
  %1946 = vmatprep.subr.bf16.mxu0 0
  %1947 = vmatpush1.bf16.msra.mxu0 %v1440
  %1948 = vmatprep.subr.bf16.mxu0 0
  %1949 = vmatpush1.bf16.msra.mxu0 %v1441
  %1950 = vmatprep.subr.bf16.mxu0 0
  %1951 = vmatpush1.bf16.msra.mxu0 %v1442
  %1952 = vmatprep.subr.bf16.mxu0 0
  %1953 = vmatpush1.bf16.msra.mxu0 %v1443
  %1954 = vmatprep.subr.bf16.mxu0 0
  %1955 = vmatpush1.bf16.msra.mxu0 %v1444
  %1956 = vmatprep.subr.bf16.mxu0 0
  %1957 = vmatpush1.bf16.msra.mxu0 %v1445
  %1958 = vmatprep.mubr.bf16.mxu0 %v542
  %1959 = vmatmul.mubr.bf16.gmra.mrb[0].mxu0 %v541
  %v1960 = vpop.f32.mrb[0].mxu0
  %v1961 = vadd.f32 %v1920, %v1960
  %v1962 = vpop.f32.mrb[0].mxu0
  %v1963 = vpop.f32.mrb[0].mxu0
  %v1964 = vadd.f32 %v1923, %v1963
  %v1965 = vpop.f32.mrb[0].mxu0
  %1966 = vdwg.mxu0
  %1967 = vmatprep.subr.bf16.mxu0 0
  %1968 = vmatpush1.bf16.msra.mxu0 %v1446
  %1969 = vmatprep.subr.bf16.mxu0 0
  %1970 = vmatpush1.bf16.msra.mxu0 %v1447
  %1971 = vmatprep.subr.bf16.mxu0 0
  %1972 = vmatpush1.bf16.msra.mxu0 %v1448
  %1973 = vmatprep.subr.bf16.mxu0 0
  %1974 = vmatpush1.bf16.msra.mxu0 %v1449
  %1975 = vmatprep.subr.bf16.mxu0 0
  %1976 = vmatpush1.bf16.msra.mxu0 %v1450
  %1977 = vmatprep.subr.bf16.mxu0 0
  %1978 = vmatpush1.bf16.msra.mxu0 %v1451
  %1979 = vmatprep.subr.bf16.mxu0 0
  %1980 = vmatpush1.bf16.msra.mxu0 %v1452
  %1981 = vmatprep.subr.bf16.mxu0 0
  %1982 = vmatpush1.bf16.msra.mxu0 %v1453
  %1983 = vmatprep.subr.bf16.mxu0 0
  %1984 = vmatpush1.bf16.msra.mxu0 %v1454
  %1985 = vmatprep.subr.bf16.mxu0 0
  %1986 = vmatpush1.bf16.msra.mxu0 %v1455
  %1987 = vmatprep.subr.bf16.mxu0 0
  %1988 = vmatpush1.bf16.msra.mxu0 %v1456
  %1989 = vmatprep.subr.bf16.mxu0 0
  %1990 = vmatpush1.bf16.msra.mxu0 %v1457
  %1991 = vmatprep.subr.bf16.mxu0 0
  %1992 = vmatpush1.bf16.msra.mxu0 %v1458
  %1993 = vmatprep.subr.bf16.mxu0 0
  %1994 = vmatpush1.bf16.msra.mxu0 %v1459
  %1995 = vmatprep.subr.bf16.mxu0 0
  %1996 = vmatpush1.bf16.msra.mxu0 %v1460
  %1997 = vmatprep.subr.bf16.mxu0 0
  %1998 = vmatpush1.bf16.msra.mxu0 %v1461
  %1999 = vmatprep.mubr.bf16.mxu0 %v544
  %2000 = vmatmul.mubr.bf16.gmra.mrb[0].mxu0 %v543
  %v2001 = vpop.f32.mrb[0].mxu0
  %v2002 = vadd.f32 %v1961, %v2001
  %v2003 = vpop.f32.mrb[0].mxu0
  %v2004 = vpop.f32.mrb[0].mxu0
  %v2005 = vadd.f32 %v1964, %v2004
  %v2006 = vpop.f32.mrb[0].mxu0
  %2007 = vdwg.mxu0
  %2008 = vmatprep.subr.bf16.mxu0 0
  %2009 = vmatpush1.bf16.msra.mxu0 %v1462
  %2010 = vmatprep.subr.bf16.mxu0 0
  %2011 = vmatpush1.bf16.msra.mxu0 %v1463
  %2012 = vmatprep.subr.bf16.mxu0 0
  %2013 = vmatpush1.bf16.msra.mxu0 %v1464
  %2014 = vmatprep.subr.bf16.mxu0 0
  %2015 = vmatpush1.bf16.msra.mxu0 %v1465
  %2016 = vmatprep.subr.bf16.mxu0 0
  %2017 = vmatpush1.bf16.msra.mxu0 %v1466
  %2018 = vmatprep.subr.bf16.mxu0 0
  %2019 = vmatpush1.bf16.msra.mxu0 %v1467
  %2020 = vmatprep.subr.bf16.mxu0 0
  %2021 = vmatpush1.bf16.msra.mxu0 %v1468
  %2022 = vmatprep.subr.bf16.mxu0 0
  %2023 = vmatpush1.bf16.msra.mxu0 %v1469
  %2024 = vmatprep.subr.bf16.mxu0 0
  %2025 = vmatpush1.bf16.msra.mxu0 %v1470
  %2026 = vmatprep.subr.bf16.mxu0 0
  %2027 = vmatpush1.bf16.msra.mxu0 %v1471
  %2028 = vmatprep.subr.bf16.mxu0 0
  %2029 = vmatpush1.bf16.msra.mxu0 %v1472
  %2030 = vmatprep.subr.bf16.mxu0 0
  %2031 = vmatpush1.bf16.msra.mxu0 %v1473
  %2032 = vmatprep.subr.bf16.mxu0 0
  %2033 = vmatpush1.bf16.msra.mxu0 %v1474
  %2034 = vmatprep.subr.bf16.mxu0 0
  %2035 = vmatpush1.bf16.msra.mxu0 %v1475
  %2036 = vmatprep.subr.bf16.mxu0 0
  %2037 = vmatpush1.bf16.msra.mxu0 %v1476
  %2038 = vmatprep.subr.bf16.mxu0 0
  %2039 = vmatpush1.bf16.msra.mxu0 %v1477
  %2040 = vmatprep.mubr.bf16.mxu0 %v546
  %2041 = vmatmul.mubr.bf16.gmra.mrb[0].mxu0 %v545
  %v2042 = vpop.f32.mrb[0].mxu0
  %v2043 = vadd.f32 %v2002, %v2042
  %v2044 = vpop.f32.mrb[0].mxu0
  %v2045 = vpop.f32.mrb[0].mxu0
  %v2046 = vadd.f32 %v2005, %v2045
  %v2047 = vpop.f32.mrb[0].mxu0
  %2048 = vdwg.mxu0
  %2049 = vmatprep.subr.bf16.mxu0 0
  %2050 = vmatpush1.bf16.msra.mxu0 %v1478
  %2051 = vmatprep.subr.bf16.mxu0 0
  %2052 = vmatpush1.bf16.msra.mxu0 %v1479
  %2053 = vmatprep.subr.bf16.mxu0 0
  %2054 = vmatpush1.bf16.msra.mxu0 %v1480
  %2055 = vmatprep.subr.bf16.mxu0 0
  %2056 = vmatpush1.bf16.msra.mxu0 %v1481
  %2057 = vmatprep.subr.bf16.mxu0 0
  %2058 = vmatpush1.bf16.msra.mxu0 %v1482
  %2059 = vmatprep.subr.bf16.mxu0 0
  %2060 = vmatpush1.bf16.msra.mxu0 %v1483
  %2061 = vmatprep.subr.bf16.mxu0 0
  %2062 = vmatpush1.bf16.msra.mxu0 %v1484
  %2063 = vmatprep.subr.bf16.mxu0 0
  %2064 = vmatpush1.bf16.msra.mxu0 %v1485
  %2065 = vmatprep.subr.bf16.mxu0 0
  %2066 = vmatpush1.bf16.msra.mxu0 %v1486
  %2067 = vmatprep.subr.bf16.mxu0 0
  %2068 = vmatpush1.bf16.msra.mxu0 %v1487
  %2069 = vmatprep.subr.bf16.mxu0 0
  %2070 = vmatpush1.bf16.msra.mxu0 %v1488
  %2071 = vmatprep.subr.bf16.mxu0 0
  %2072 = vmatpush1.bf16.msra.mxu0 %v1489
  %2073 = vmatprep.subr.bf16.mxu0 0
  %2074 = vmatpush1.bf16.msra.mxu0 %v1490
  %2075 = vmatprep.subr.bf16.mxu0 0
  %2076 = vmatpush1.bf16.msra.mxu0 %v1491
  %2077 = vmatprep.subr.bf16.mxu0 0
  %2078 = vmatpush1.bf16.msra.mxu0 %v1492
  %2079 = vmatprep.subr.bf16.mxu0 0
  %2080 = vmatpush1.bf16.msra.mxu0 %v1493
  %2081 = vmatprep.mubr.bf16.mxu0 %v548
  %2082 = vmatmul.mubr.bf16.gmra.mrb[0].mxu0 %v547
  %v2083 = vpop.f32.mrb[0].mxu0
  %v2084 = vadd.f32 %v2043, %v2083
  %v2085 = vpop.f32.mrb[0].mxu0
  %v2086 = vpop.f32.mrb[0].mxu0
  %v2087 = vadd.f32 %v2046, %v2086
  %v2088 = vpop.f32.mrb[0].mxu0
  %2089 = vdwg.mxu0
  %2090 = vmatprep.subr.bf16.mxu0 0
  %2091 = vmatpush1.bf16.msra.mxu0 %v1494
  %2092 = vmatprep.subr.bf16.mxu0 0
  %2093 = vmatpush1.bf16.msra.mxu0 %v1495
  %2094 = vmatprep.subr.bf16.mxu0 0
  %2095 = vmatpush1.bf16.msra.mxu0 %v1496
  %2096 = vmatprep.subr.bf16.mxu0 0
  %2097 = vmatpush1.bf16.msra.mxu0 %v1497
  %2098 = vmatprep.subr.bf16.mxu0 0
  %2099 = vmatpush1.bf16.msra.mxu0 %v1498
  %2100 = vmatprep.subr.bf16.mxu0 0
  %2101 = vmatpush1.bf16.msra.mxu0 %v1499
  %2102 = vmatprep.subr.bf16.mxu0 0
  %2103 = vmatpush1.bf16.msra.mxu0 %v1500
  %2104 = vmatprep.subr.bf16.mxu0 0
  %2105 = vmatpush1.bf16.msra.mxu0 %v1501
  %2106 = vmatprep.subr.bf16.mxu0 0
  %2107 = vmatpush1.bf16.msra.mxu0 %v1502
  %2108 = vmatprep.subr.bf16.mxu0 0
  %2109 = vmatpush1.bf16.msra.mxu0 %v1503
  %2110 = vmatprep.subr.bf16.mxu0 0
  %2111 = vmatpush1.bf16.msra.mxu0 %v1504
  %2112 = vmatprep.subr.bf16.mxu0 0
  %2113 = vmatpush1.bf16.msra.mxu0 %v1505
  %2114 = vmatprep.subr.bf16.mxu0 0
  %2115 = vmatpush1.bf16.msra.mxu0 %v1506
  %2116 = vmatprep.subr.bf16.mxu0 0
  %2117 = vmatpush1.bf16.msra.mxu0 %v1507
  %2118 = vmatprep.subr.bf16.mxu0 0
  %2119 = vmatpush1.bf16.msra.mxu0 %v1508
  %2120 = vmatprep.subr.bf16.mxu0 0
  %2121 = vmatpush1.bf16.msra.mxu0 %v1509
  %2122 = vmatprep.mubr.bf16.mxu0 %v550
  %2123 = vmatmul.mubr.bf16.gmra.mrb[0].mxu0 %v549
  %v2124 = vpop.f32.mrb[0].mxu0
  %v2125 = vadd.f32 %v2084, %v2124
  %v2126 = vpop.f32.mrb[0].mxu0
  %v2127 = vpop.f32.mrb[0].mxu0
  %v2128 = vadd.f32 %v2087, %v2127
  %v2129 = vpop.f32.mrb[0].mxu0
  %2130 = vdwg.mxu0
  %2131 = vmatprep.subr.bf16.mxu0 0
  %2132 = vmatpush1.bf16.msra.mxu0 %v1510
  %2133 = vmatprep.subr.bf16.mxu0 0
  %2134 = vmatpush1.bf16.msra.mxu0 %v1511
  %2135 = vmatprep.subr.bf16.mxu0 0
  %2136 = vmatpush1.bf16.msra.mxu0 %v1512
  %2137 = vmatprep.subr.bf16.mxu0 0
  %2138 = vmatpush1.bf16.msra.mxu0 %v1513
  %2139 = vmatprep.subr.bf16.mxu0 0
  %2140 = vmatpush1.bf16.msra.mxu0 %v1514
  %2141 = vmatprep.subr.bf16.mxu0 0
  %2142 = vmatpush1.bf16.msra.mxu0 %v1515
  %2143 = vmatprep.subr.bf16.mxu0 0
  %2144 = vmatpush1.bf16.msra.mxu0 %v1516
  %2145 = vmatprep.subr.bf16.mxu0 0
  %2146 = vmatpush1.bf16.msra.mxu0 %v1517
  %2147 = vmatprep.subr.bf16.mxu0 0
  %2148 = vmatpush1.bf16.msra.mxu0 %v1518
  %2149 = vmatprep.subr.bf16.mxu0 0
  %2150 = vmatpush1.bf16.msra.mxu0 %v1519
  %2151 = vmatprep.subr.bf16.mxu0 0
  %2152 = vmatpush1.bf16.msra.mxu0 %v1520
  %2153 = vmatprep.subr.bf16.mxu0 0
  %2154 = vmatpush1.bf16.msra.mxu0 %v1521
  %2155 = vmatprep.subr.bf16.mxu0 0
  %2156 = vmatpush1.bf16.msra.mxu0 %v1522
  %2157 = vmatprep.subr.bf16.mxu0 0
  %2158 = vmatpush1.bf16.msra.mxu0 %v1523
  %2159 = vmatprep.subr.bf16.mxu0 0
  %2160 = vmatpush1.bf16.msra.mxu0 %v1524
  %2161 = vmatprep.subr.bf16.mxu0 0
  %2162 = vmatpush1.bf16.msra.mxu0 %v1525
  %2163 = vmatprep.mubr.bf16.mxu0 %v552
  %2164 = vmatmul.mubr.bf16.gmra.mrb[0].mxu0 %v551
  %v2165 = vpop.f32.mrb[0].mxu0
  %v2166 = vadd.f32 %v2125, %v2165
  %v2167 = vpop.f32.mrb[0].mxu0
  %v2168 = vpop.f32.mrb[0].mxu0
  %v2169 = vadd.f32 %v2128, %v2168
  %v2170 = vpop.f32.mrb[0].mxu0
  %2171 = vdwg.mxu0
  %2172 = vmatprep.subr.bf16.mxu0 0
  %2173 = vmatpush1.bf16.msra.mxu0 %v1526
  %2174 = vmatprep.subr.bf16.mxu0 0
  %2175 = vmatpush1.bf16.msra.mxu0 %v1527
  %2176 = vmatprep.subr.bf16.mxu0 0
  %2177 = vmatpush1.bf16.msra.mxu0 %v1528
  %2178 = vmatprep.subr.bf16.mxu0 0
  %2179 = vmatpush1.bf16.msra.mxu0 %v1529
  %2180 = vmatprep.subr.bf16.mxu0 0
  %2181 = vmatpush1.bf16.msra.mxu0 %v1530
  %2182 = vmatprep.subr.bf16.mxu0 0
  %2183 = vmatpush1.bf16.msra.mxu0 %v1531
  %2184 = vmatprep.subr.bf16.mxu0 0
  %2185 = vmatpush1.bf16.msra.mxu0 %v1532
  %2186 = vmatprep.subr.bf16.mxu0 0
  %2187 = vmatpush1.bf16.msra.mxu0 %v1533
  %2188 = vmatprep.subr.bf16.mxu0 0
  %2189 = vmatpush1.bf16.msra.mxu0 %v1534
  %2190 = vmatprep.subr.bf16.mxu0 0
  %2191 = vmatpush1.bf16.msra.mxu0 %v1535
  %2192 = vmatprep.subr.bf16.mxu0 0
  %2193 = vmatpush1.bf16.msra.mxu0 %v1536
  %2194 = vmatprep.subr.bf16.mxu0 0
  %2195 = vmatpush1.bf16.msra.mxu0 %v1537
  %2196 = vmatprep.subr.bf16.mxu0 0
  %2197 = vmatpush1.bf16.msra.mxu0 %v1538
  %2198 = vmatprep.subr.bf16.mxu0 0
  %2199 = vmatpush1.bf16.msra.mxu0 %v1539
  %2200 = vmatprep.subr.bf16.mxu0 0
  %2201 = vmatpush1.bf16.msra.mxu0 %v1540
  %2202 = vmatprep.subr.bf16.mxu0 0
  %2203 = vmatpush1.bf16.msra.mxu0 %v1541
  %2204 = vmatprep.mubr.bf16.mxu0 %v554
  %2205 = vmatmul.mubr.bf16.gmra.mrb[0].mxu0 %v553
  %v2206 = vpop.f32.mrb[0].mxu0
  %v2207 = vadd.f32 %v2166, %v2206
  %v2208 = vpop.f32.mrb[0].mxu0
  %v2209 = vpop.f32.mrb[0].mxu0
  %v2210 = vadd.f32 %v2169, %v2209
  %v2211 = vpop.f32.mrb[0].mxu0
  %2212 = vdwg.mxu0
  %2213 = vmatprep.subr.bf16.mxu0 0
  %2214 = vmatpush1.bf16.msra.mxu0 %v1542
  %2215 = vmatprep.subr.bf16.mxu0 0
  %2216 = vmatpush1.bf16.msra.mxu0 %v1543
  %2217 = vmatprep.subr.bf16.mxu0 0
  %2218 = vmatpush1.bf16.msra.mxu0 %v1544
  %2219 = vmatprep.subr.bf16.mxu0 0
  %2220 = vmatpush1.bf16.msra.mxu0 %v1545
  %2221 = vmatprep.subr.bf16.mxu0 0
  %2222 = vmatpush1.bf16.msra.mxu0 %v1546
  %2223 = vmatprep.subr.bf16.mxu0 0
  %2224 = vmatpush1.bf16.msra.mxu0 %v1547
  %2225 = vmatprep.subr.bf16.mxu0 0
  %2226 = vmatpush1.bf16.msra.mxu0 %v1548
  %2227 = vmatprep.subr.bf16.mxu0 0
  %2228 = vmatpush1.bf16.msra.mxu0 %v1549
  %2229 = vmatprep.subr.bf16.mxu0 0
  %2230 = vmatpush1.bf16.msra.mxu0 %v1550
  %2231 = vmatprep.subr.bf16.mxu0 0
  %2232 = vmatpush1.bf16.msra.mxu0 %v1551
  %2233 = vmatprep.subr.bf16.mxu0 0
  %2234 = vmatpush1.bf16.msra.mxu0 %v1552
  %2235 = vmatprep.subr.bf16.mxu0 0
  %2236 = vmatpush1.bf16.msra.mxu0 %v1553
  %2237 = vmatprep.subr.bf16.mxu0 0
  %2238 = vmatpush1.bf16.msra.mxu0 %v1554
  %2239 = vmatprep.subr.bf16.mxu0 0
  %2240 = vmatpush1.bf16.msra.mxu0 %v1555
  %2241 = vmatprep.subr.bf16.mxu0 0
  %2242 = vmatpush1.bf16.msra.mxu0 %v1556
  %2243 = vmatprep.subr.bf16.mxu0 0
  %2244 = vmatpush1.bf16.msra.mxu0 %v1557
  %2245 = vmatprep.mubr.bf16.mxu0 %v556
  %2246 = vmatmul.mubr.bf16.gmra.mrb[0].mxu0 %v555
  %v2247 = vpop.f32.mrb[0].mxu0
  %v2248 = vadd.f32 %v2207, %v2247
  %v2249 = vpop.f32.mrb[0].mxu0
  %v2250 = vpop.f32.mrb[0].mxu0
  %v2251 = vadd.f32 %v2210, %v2250
  %v2252 = vpop.f32.mrb[0].mxu0
  %2253 = vdwg.mxu0
  %2254 = vmatprep.subr.bf16.mxu0 0
  %2255 = vmatpush1.bf16.msra.mxu0 %v1558
  %2256 = vmatprep.subr.bf16.mxu0 0
  %2257 = vmatpush1.bf16.msra.mxu0 %v1559
  %2258 = vmatprep.subr.bf16.mxu0 0
  %2259 = vmatpush1.bf16.msra.mxu0 %v1560
  %2260 = vmatprep.subr.bf16.mxu0 0
  %2261 = vmatpush1.bf16.msra.mxu0 %v1561
  %2262 = vmatprep.subr.bf16.mxu0 0
  %2263 = vmatpush1.bf16.msra.mxu0 0
  %2264 = vmatprep.subr.bf16.mxu0 0
  %2265 = vmatpush1.bf16.msra.mxu0 0
  %2266 = vmatprep.subr.bf16.mxu0 0
  %2267 = vmatpush1.bf16.msra.mxu0 0
  %2268 = vmatprep.subr.bf16.mxu0 0
  %2269 = vmatpush1.bf16.msra.mxu0 0
  %2270 = vmatprep.subr.bf16.mxu0 0
  %2271 = vmatpush1.bf16.msra.mxu0 0
  %2272 = vmatprep.subr.bf16.mxu0 0
  %2273 = vmatpush1.bf16.msra.mxu0 0
  %2274 = vmatprep.subr.bf16.mxu0 0
  %2275 = vmatpush1.bf16.msra.mxu0 0
  %2276 = vmatprep.subr.bf16.mxu0 0
  %2277 = vmatpush1.bf16.msra.mxu0 0
  %2278 = vmatprep.subr.bf16.mxu0 0
  %2279 = vmatpush1.bf16.msra.mxu0 0
  %2280 = vmatprep.subr.bf16.mxu0 0
  %2281 = vmatpush1.bf16.msra.mxu0 0
  %2282 = vmatprep.subr.bf16.mxu0 0
  %2283 = vmatpush1.bf16.msra.mxu0 0
  %2284 = vmatprep.subr.bf16.mxu0 0
  %2285 = vmatpush1.bf16.msra.mxu0 0
  %2286 = vmatprep.mubr.bf16.mxu0 0
  %2287 = vmatmul.mubr.bf16.gmra.mrb[0].mxu0 %v1760
  %v2288 = vpop.f32.mrb[0].mxu0
  %v2289 = vadd.f32 %v2248, %v2288
  %v2290 = vpop.f32.mrb[0].mxu0
  %v2291 = vpop.f32.mrb[0].mxu0
  %v2292 = vadd.f32 %v2251, %v2291
  %v2293 = vpop.f32.mrb[0].mxu0
  %2294 = vdwg.mxu0
  %v2295 = vmax.f32 %v2289, 0.0
  %v2296 = vmax.f32 %v2292, 0.0
  %2297 = vst [vmem:[%s8] sm:$0xff] %v2295
  %2298 = vst [vmem:[%s8 + $0x8] sm:$0xff] %v2296
  %v2299 = vld [vmem:[%s3] sm:$0xff]
  %v2300 = vld [vmem:[%s3 + $0x8] sm:$0xff]
  %v2301 = vld [vmem:[%s3 + $0x10] sm:$0xff]
  %v2302 = vld [vmem:[%s3 + $0x18] sm:$0xff]
  %v2303 = vld [vmem:[%s3 + $0x20] sm:$0xff]
  %v2304 = vld [vmem:[%s3 + $0x28] sm:$0xff]
  %v2305 = vld [vmem:[%s4] sm:$0xff]
  %v2306 = vld [vmem:[%s4 + $0x8] sm:$0xff]
  %v2307 = vld [vmem:[%s4 + $0x10] sm:$0xff]
  %v2308 = vld [vmem:[%s4 + $0x18] sm:$0xff]
  %v2309 = vld [vmem:[%s4 + $0x20] sm:$0xff]
  %v2310 = vld [vmem:[%s4 + $0x28] sm:$0xff]
  %v2311 = vld [vmem:[%s4 + $0x30] sm:$0xff]
  %v2312 = vld [vmem:[%s4 + $0x38] sm:$0xff]
  %v2313 = vld [vmem:[%s4 + $0x40] sm:$0xff]
  %v2314 = vld [vmem:[%s4 + $0x48] sm:$0xff]
  %v2315 = vld [vmem:[%s4 + $0x50] sm:$0xff]
  %v2316 = vld [vmem:[%s4 + $0x58] sm:$0xff]
  %v2317 = vld [vmem:[%s4 + $0x60] sm:$0xff]
  %v2318 = vld [vmem:[%s4 + $0x68] sm:$0xff]
  %v2319 = vld [vmem:[%s4 + $0x70] sm:$0xff]
  %v2320 = vld [vmem:[%s4 + $0x78] sm:$0xff]
  %v2321 = vld [vmem:[%s4 + $0x80] sm:$0xff]
  %v2322 = vld [vmem:[%s4 + $0x88] sm:$0xff]
  %v2323 = vld [vmem:[%s4 + $0x90] sm:$0xff]
  %v2324 = vld [vmem:[%s4 + $0x98] sm:$0xff]
  %v2325 = vld [vmem:[%s4 + $0xa0] sm:$0xff]
  %v2326 = vld [vmem:[%s4 + $0xa8] sm:$0xff]
  %v2327 = vld [vmem:[%s4 + $0xb0] sm:$0xff]
  %v2328 = vld [vmem:[%s4 + $0xb8] sm:$0xff]
  %v2329 = vld [vmem:[%s4 + $0xc0] sm:$0xff]
  %v2330 = vld [vmem:[%s4 + $0xc8] sm:$0xff]
  %v2331 = vld [vmem:[%s4 + $0xd0] sm:$0xff]
  %v2332 = vld [vmem:[%s4 + $0xd8] sm:$0xff]
  %v2333 = vld [vmem:[%s4 + $0xe0] sm:$0xff]
  %v2334 = vld [vmem:[%s4 + $0xe8] sm:$0xff]
  %v2335 = vld [vmem:[%s4 + $0xf0] sm:$0xff]
  %v2336 = vld [vmem:[%s4 + $0xf8] sm:$0xff]
  %v2337 = vld [vmem:[%s4 + $0x100] sm:$0xff]
  %v2338 = vld [vmem:[%s4 + $0x108] sm:$0xff]
  %v2339 = vld [vmem:[%s4 + $0x110] sm:$0xff]
  %v2340 = vld [vmem:[%s4 + $0x118] sm:$0xff]
  %v2341 = vld [vmem:[%s4 + $0x120] sm:$0xff]
  %v2342 = vld [vmem:[%s4 + $0x128] sm:$0xff]
  %v2343 = vld [vmem:[%s4 + $0x130] sm:$0xff]
  %v2344 = vld [vmem:[%s4 + $0x138] sm:$0xff]
  %v2345 = vld [vmem:[%s4 + $0x140] sm:$0xff]
  %v2346 = vld [vmem:[%s4 + $0x148] sm:$0xff]
  %v2347 = vld [vmem:[%s4 + $0x150] sm:$0xff]
  %v2348 = vld [vmem:[%s4 + $0x158] sm:$0xff]
  %v2349 = vld [vmem:[%s4 + $0x160] sm:$0xff]
  %v2350 = vld [vmem:[%s4 + $0x168] sm:$0xff]
  %v2351 = vld [vmem:[%s4 + $0x170] sm:$0xff]
  %v2352 = vld [vmem:[%s4 + $0x178] sm:$0xff]
  %v2353 = vld [vmem:[%s4 + $0x180] sm:$0xff]
  %v2354 = vld [vmem:[%s4 + $0x188] sm:$0xff]
  %v2355 = vld [vmem:[%s4 + $0x190] sm:$0xff]
  %v2356 = vld [vmem:[%s4 + $0x198] sm:$0xff]
  %v2357 = vld [vmem:[%s4 + $0x1a0] sm:$0xff]
  %v2358 = vld [vmem:[%s4 + $0x1a8] sm:$0xff]
  %v2359 = vld [vmem:[%s4 + $0x1b0] sm:$0xff]
  %v2360 = vld [vmem:[%s4 + $0x1b8] sm:$0xff]
  %v2361 = vld [vmem:[%s4 + $0x1c0] sm:$0xff]
  %v2362 = vld [vmem:[%s4 + $0x1c8] sm:$0xff]
  %v2363 = vld [vmem:[%s4 + $0x1d0] sm:$0xff]
  %v2364 = vld [vmem:[%s4 + $0x1d8] sm:$0xff]
  %v2365 = vld [vmem:[%s4 + $0x1e0] sm:$0xff]
  %v2366 = vld [vmem:[%s4 + $0x1e8] sm:$0xff]
  %v2367 = vld [vmem:[%s4 + $0x1f0] sm:$0xff]
  %v2368 = vld [vmem:[%s4 + $0x1f8] sm:$0xff]
  %v2369 = vld [vmem:[%s4 + $0x200] sm:$0xff]
  %v2370 = vld [vmem:[%s4 + $0x208] sm:$0xff]
  %v2371 = vld [vmem:[%s4 + $0x210] sm:$0xff]
  %v2372 = vld [vmem:[%s4 + $0x218] sm:$0xff]
  %v2373 = vld [vmem:[%s4 + $0x220] sm:$0xff]
  %v2374 = vld [vmem:[%s4 + $0x228] sm:$0xff]
  %v2375 = vld [vmem:[%s4 + $0x230] sm:$0xff]
  %v2376 = vld [vmem:[%s4 + $0x238] sm:$0xff]
  %v2377 = vld [vmem:[%s4 + $0x240] sm:$0xff]
  %v2378 = vld [vmem:[%s4 + $0x248] sm:$0xff]
  %v2379 = vld [vmem:[%s4 + $0x250] sm:$0xff]
  %v2380 = vld [vmem:[%s4 + $0x258] sm:$0xff]
  %v2381 = vld [vmem:[%s4 + $0x260] sm:$0xff]
  %v2382 = vld [vmem:[%s4 + $0x268] sm:$0xff]
  %v2383 = vld [vmem:[%s4 + $0x270] sm:$0xff]
  %v2384 = vld [vmem:[%s4 + $0x278] sm:$0xff]
  %v2385 = vld [vmem:[%s4 + $0x280] sm:$0xff]
  %v2386 = vld [vmem:[%s4 + $0x288] sm:$0xff]
  %v2387 = vld [vmem:[%s4 + $0x290] sm:$0xff]
  %v2388 = vld [vmem:[%s4 + $0x298] sm:$0xff]
  %v2389 = vld [vmem:[%s4 + $0x2a0] sm:$0xff]
  %v2390 = vld [vmem:[%s4 + $0x2a8] sm:$0xff]
  %v2391 = vld [vmem:[%s4 + $0x2b0] sm:$0xff]
  %v2392 = vld [vmem:[%s4 + $0x2b8] sm:$0xff]
  %v2393 = vld [vmem:[%s4 + $0x2c0] sm:$0xff]
  %v2394 = vld [vmem:[%s4 + $0x2c8] sm:$0xff]
  %v2395 = vld [vmem:[%s4 + $0x2d0] sm:$0xff]
  %v2396 = vld [vmem:[%s4 + $0x2d8] sm:$0xff]
  %v2397 = vld [vmem:[%s4 + $0x2e0] sm:$0xff]
  %v2398 = vld [vmem:[%s4 + $0x2e8] sm:$0xff]
  %v2399 = vld [vmem:[%s4 + $0x2f0] sm:$0xff]
  %v2400 = vld [vmem:[%s4 + $0x2f8] sm:$0xff]
  %v2401 = vld [vmem:[%s5] sm:$0x3]
  %v2403 = vlaneseq
  %v2404 = vshrl.u32 %v2403, 7
  %v2405 = vsub.s32 0, %v2404
  %v2406 = vrot.slane %v2401, %v2405
  %v2407 = vlaneseq
  %v2408 = vshrl.u32 %v2407, 7
  %v2409 = vsub.s32 1, %v2408
  %v2410 = vrot.slane %v2401, %v2409
  %v2419 = vunpack.c.l.b16 %v2299
  %v2420 = vunpack.c.h.b16 %v2299
  %v2421 = vunpack.c.l.b16 %v2300
  %v2422 = vunpack.c.h.b16 %v2300
  %v2423 = vunpack.c.l.b16 %v2301
  %v2424 = vunpack.c.h.b16 %v2301
  %v2425 = vunpack.c.l.b16 %v2302
  %v2426 = vunpack.c.h.b16 %v2302
  %v2427 = vunpack.c.l.b16 %v2303
  %v2428 = vunpack.c.h.b16 %v2303
  %v2429 = vunpack.c.l.b16 %v2304
  %v2430 = vunpack.c.h.b16 %v2304
  %v2431 = vpack.c.b16 %v2425, %v2419
  %v2432 = vpack.c.b16 %v2426, %v2420
  %v2433 = vpack.c.b16 %v2427, %v2421
  %v2434 = vpack.c.b16 %v2428, %v2422
  %v2435 = vpack.c.b16 %v2429, %v2423
  %v2436 = vpack.c.b16 %v2430, %v2424
  %v2539 = vunpack.c.l.b16 %v2305
  %v2540 = vunpack.c.h.b16 %v2305
  %v2541 = vunpack.c.l.b16 %v2306
  %v2542 = vunpack.c.h.b16 %v2306
  %v2543 = vunpack.c.l.b16 %v2307
  %v2544 = vunpack.c.h.b16 %v2307
  %v2545 = vunpack.c.l.b16 %v2308
  %v2546 = vunpack.c.h.b16 %v2308
  %v2547 = vunpack.c.l.b16 %v2309
  %v2548 = vunpack.c.h.b16 %v2309
  %v2549 = vunpack.c.l.b16 %v2310
  %v2550 = vunpack.c.h.b16 %v2310
  %v2551 = vunpack.c.l.b16 %v2311
  %v2552 = vunpack.c.h.b16 %v2311
  %v2553 = vunpack.c.l.b16 %v2312
  %v2554 = vunpack.c.h.b16 %v2312
  %v2555 = vunpack.c.l.b16 %v2313
  %v2556 = vunpack.c.h.b16 %v2313
  %v2557 = vunpack.c.l.b16 %v2314
  %v2558 = vunpack.c.h.b16 %v2314
  %v2559 = vunpack.c.l.b16 %v2315
  %v2560 = vunpack.c.h.b16 %v2315
  %v2561 = vunpack.c.l.b16 %v2316
  %v2562 = vunpack.c.h.b16 %v2316
  %v2563 = vunpack.c.l.b16 %v2317
  %v2564 = vunpack.c.h.b16 %v2317
  %v2565 = vunpack.c.l.b16 %v2318
  %v2566 = vunpack.c.h.b16 %v2318
  %v2567 = vunpack.c.l.b16 %v2319
  %v2568 = vunpack.c.h.b16 %v2319
  %v2569 = vunpack.c.l.b16 %v2320
  %v2570 = vunpack.c.h.b16 %v2320
  %v2571 = vunpack.c.l.b16 %v2321
  %v2572 = vunpack.c.h.b16 %v2321
  %v2573 = vunpack.c.l.b16 %v2322
  %v2574 = vunpack.c.h.b16 %v2322
  %v2575 = vunpack.c.l.b16 %v2323
  %v2576 = vunpack.c.h.b16 %v2323
  %v2577 = vunpack.c.l.b16 %v2324
  %v2578 = vunpack.c.h.b16 %v2324
  %v2579 = vunpack.c.l.b16 %v2325
  %v2580 = vunpack.c.h.b16 %v2325
  %v2581 = vunpack.c.l.b16 %v2326
  %v2582 = vunpack.c.h.b16 %v2326
  %v2583 = vunpack.c.l.b16 %v2327
  %v2584 = vunpack.c.h.b16 %v2327
  %v2585 = vunpack.c.l.b16 %v2328
  %v2586 = vunpack.c.h.b16 %v2328
  %v2587 = vunpack.c.l.b16 %v2329
  %v2588 = vunpack.c.h.b16 %v2329
  %v2589 = vunpack.c.l.b16 %v2330
  %v2590 = vunpack.c.h.b16 %v2330
  %v2591 = vunpack.c.l.b16 %v2331
  %v2592 = vunpack.c.h.b16 %v2331
  %v2593 = vunpack.c.l.b16 %v2332
  %v2594 = vunpack.c.h.b16 %v2332
  %v2595 = vunpack.c.l.b16 %v2333
  %v2596 = vunpack.c.h.b16 %v2333
  %v2597 = vunpack.c.l.b16 %v2334
  %v2598 = vunpack.c.h.b16 %v2334
  %v2599 = vunpack.c.l.b16 %v2335
  %v2600 = vunpack.c.h.b16 %v2335
  %v2601 = vunpack.c.l.b16 %v2336
  %v2602 = vunpack.c.h.b16 %v2336
  %v2603 = vunpack.c.l.b16 %v2337
  %v2604 = vunpack.c.h.b16 %v2337
  %v2605 = vunpack.c.l.b16 %v2338
  %v2606 = vunpack.c.h.b16 %v2338
  %v2607 = vunpack.c.l.b16 %v2339
  %v2608 = vunpack.c.h.b16 %v2339
  %v2609 = vunpack.c.l.b16 %v2340
  %v2610 = vunpack.c.h.b16 %v2340
  %v2611 = vunpack.c.l.b16 %v2341
  %v2612 = vunpack.c.h.b16 %v2341
  %v2613 = vunpack.c.l.b16 %v2342
  %v2614 = vunpack.c.h.b16 %v2342
  %v2615 = vunpack.c.l.b16 %v2343
  %v2616 = vunpack.c.h.b16 %v2343
  %v2617 = vunpack.c.l.b16 %v2344
  %v2618 = vunpack.c.h.b16 %v2344
  %v2619 = vunpack.c.l.b16 %v2345
  %v2620 = vunpack.c.h.b16 %v2345
  %v2621 = vunpack.c.l.b16 %v2346
  %v2622 = vunpack.c.h.b16 %v2346
  %v2623 = vunpack.c.l.b16 %v2347
  %v2624 = vunpack.c.h.b16 %v2347
  %v2625 = vunpack.c.l.b16 %v2348
  %v2626 = vunpack.c.h.b16 %v2348
  %v2627 = vunpack.c.l.b16 %v2349
  %v2628 = vunpack.c.h.b16 %v2349
  %v2629 = vunpack.c.l.b16 %v2350
  %v2630 = vunpack.c.h.b16 %v2350
  %v2631 = vunpack.c.l.b16 %v2351
  %v2632 = vunpack.c.h.b16 %v2351
  %v2633 = vunpack.c.l.b16 %v2352
  %v2634 = vunpack.c.h.b16 %v2352
  %v2635 = vunpack.c.l.b16 %v2353
  %v2636 = vunpack.c.h.b16 %v2353
  %v2637 = vunpack.c.l.b16 %v2354
  %v2638 = vunpack.c.h.b16 %v2354
  %v2639 = vunpack.c.l.b16 %v2355
  %v2640 = vunpack.c.h.b16 %v2355
  %v2641 = vunpack.c.l.b16 %v2356
  %v2642 = vunpack.c.h.b16 %v2356
  %v2643 = vunpack.c.l.b16 %v2357
  %v2644 = vunpack.c.h.b16 %v2357
  %v2645 = vunpack.c.l.b16 %v2358
  %v2646 = vunpack.c.h.b16 %v2358
  %v2647 = vunpack.c.l.b16 %v2359
  %v2648 = vunpack.c.h.b16 %v2359
  %v2649 = vunpack.c.l.b16 %v2360
  %v2650 = vunpack.c.h.b16 %v2360
  %v2651 = vunpack.c.l.b16 %v2361
  %v2652 = vunpack.c.h.b16 %v2361
  %v2653 = vunpack.c.l.b16 %v2362
  %v2654 = vunpack.c.h.b16 %v2362
  %v2655 = vunpack.c.l.b16 %v2363
  %v2656 = vunpack.c.h.b16 %v2363
  %v2657 = vunpack.c.l.b16 %v2364
  %v2658 = vunpack.c.h.b16 %v2364
  %v2659 = vunpack.c.l.b16 %v2365
  %v2660 = vunpack.c.h.b16 %v2365
  %v2661 = vunpack.c.l.b16 %v2366
  %v2662 = vunpack.c.h.b16 %v2366
  %v2663 = vunpack.c.l.b16 %v2367
  %v2664 = vunpack.c.h.b16 %v2367
  %v2665 = vunpack.c.l.b16 %v2368
  %v2666 = vunpack.c.h.b16 %v2368
  %v2667 = vunpack.c.l.b16 %v2369
  %v2668 = vunpack.c.h.b16 %v2369
  %v2669 = vunpack.c.l.b16 %v2370
  %v2670 = vunpack.c.h.b16 %v2370
  %v2671 = vunpack.c.l.b16 %v2371
  %v2672 = vunpack.c.h.b16 %v2371
  %v2673 = vunpack.c.l.b16 %v2372
  %v2674 = vunpack.c.h.b16 %v2372
  %v2675 = vunpack.c.l.b16 %v2373
  %v2676 = vunpack.c.h.b16 %v2373
  %v2677 = vunpack.c.l.b16 %v2374
  %v2678 = vunpack.c.h.b16 %v2374
  %v2679 = vunpack.c.l.b16 %v2375
  %v2680 = vunpack.c.h.b16 %v2375
  %v2681 = vunpack.c.l.b16 %v2376
  %v2682 = vunpack.c.h.b16 %v2376
  %v2683 = vunpack.c.l.b16 %v2377
  %v2684 = vunpack.c.h.b16 %v2377
  %v2685 = vunpack.c.l.b16 %v2378
  %v2686 = vunpack.c.h.b16 %v2378
  %v2687 = vunpack.c.l.b16 %v2379
  %v2688 = vunpack.c.h.b16 %v2379
  %v2689 = vunpack.c.l.b16 %v2380
  %v2690 = vunpack.c.h.b16 %v2380
  %v2691 = vunpack.c.l.b16 %v2381
  %v2692 = vunpack.c.h.b16 %v2381
  %v2693 = vunpack.c.l.b16 %v2382
  %v2694 = vunpack.c.h.b16 %v2382
  %v2695 = vunpack.c.l.b16 %v2383
  %v2696 = vunpack.c.h.b16 %v2383
  %v2697 = vunpack.c.l.b16 %v2384
  %v2698 = vunpack.c.h.b16 %v2384
  %v2699 = vunpack.c.l.b16 %v2385
  %v2700 = vunpack.c.h.b16 %v2385
  %v2701 = vunpack.c.l.b16 %v2386
  %v2702 = vunpack.c.h.b16 %v2386
  %v2703 = vunpack.c.l.b16 %v2387
  %v2704 = vunpack.c.h.b16 %v2387
  %v2705 = vunpack.c.l.b16 %v2388
  %v2706 = vunpack.c.h.b16 %v2388
  %v2707 = vunpack.c.l.b16 %v2389
  %v2708 = vunpack.c.h.b16 %v2389
  %v2709 = vunpack.c.l.b16 %v2390
  %v2710 = vunpack.c.h.b16 %v2390
  %v2711 = vunpack.c.l.b16 %v2391
  %v2712 = vunpack.c.h.b16 %v2391
  %v2713 = vunpack.c.l.b16 %v2392
  %v2714 = vunpack.c.h.b16 %v2392
  %v2715 = vunpack.c.l.b16 %v2393
  %v2716 = vunpack.c.h.b16 %v2393
  %v2717 = vunpack.c.l.b16 %v2394
  %v2718 = vunpack.c.h.b16 %v2394
  %v2719 = vunpack.c.l.b16 %v2395
  %v2720 = vunpack.c.h.b16 %v2395
  %v2721 = vunpack.c.l.b16 %v2396
  %v2722 = vunpack.c.h.b16 %v2396
  %v2723 = vunpack.c.l.b16 %v2397
  %v2724 = vunpack.c.h.b16 %v2397
  %v2725 = vunpack.c.l.b16 %v2398
  %v2726 = vunpack.c.h.b16 %v2398
  %v2727 = vunpack.c.l.b16 %v2399
  %v2728 = vunpack.c.h.b16 %v2399
  %v2729 = vunpack.c.l.b16 %v2400
  %v2730 = vunpack.c.h.b16 %v2400
  %v2731 = vpack.c.b16 %v2541, %v2539
  %v2732 = vpack.c.b16 %v2542, %v2540
  %v2733 = vpack.c.b16 %v2545, %v2543
  %v2734 = vpack.c.b16 %v2546, %v2544
  %v2735 = vpack.c.b16 %v2549, %v2547
  %v2736 = vpack.c.b16 %v2550, %v2548
  %v2737 = vpack.c.b16 %v2553, %v2551
  %v2738 = vpack.c.b16 %v2554, %v2552
  %v2739 = vpack.c.b16 %v2557, %v2555
  %v2740 = vpack.c.b16 %v2558, %v2556
  %v2741 = vpack.c.b16 %v2561, %v2559
  %v2742 = vpack.c.b16 %v2562, %v2560
  %v2743 = vpack.c.b16 %v2565, %v2563
  %v2744 = vpack.c.b16 %v2566, %v2564
  %v2745 = vpack.c.b16 %v2569, %v2567
  %v2746 = vpack.c.b16 %v2570, %v2568
  %v2747 = vpack.c.b16 %v2573, %v2571
  %v2748 = vpack.c.b16 %v2574, %v2572
  %v2749 = vpack.c.b16 %v2577, %v2575
  %v2750 = vpack.c.b16 %v2578, %v2576
  %v2751 = vpack.c.b16 %v2581, %v2579
  %v2752 = vpack.c.b16 %v2582, %v2580
  %v2753 = vpack.c.b16 %v2585, %v2583
  %v2754 = vpack.c.b16 %v2586, %v2584
  %v2755 = vpack.c.b16 %v2589, %v2587
  %v2756 = vpack.c.b16 %v2590, %v2588
  %v2757 = vpack.c.b16 %v2593, %v2591
  %v2758 = vpack.c.b16 %v2594, %v2592
  %v2759 = vpack.c.b16 %v2597, %v2595
  %v2760 = vpack.c.b16 %v2598, %v2596
  %v2761 = vpack.c.b16 %v2601, %v2599
  %v2762 = vpack.c.b16 %v2602, %v2600
  %v2763 = vpack.c.b16 %v2605, %v2603
  %v2764 = vpack.c.b16 %v2606, %v2604
  %v2765 = vpack.c.b16 %v2609, %v2607
  %v2766 = vpack.c.b16 %v2610, %v2608
  %v2767 = vpack.c.b16 %v2613, %v2611
  %v2768 = vpack.c.b16 %v2614, %v2612
  %v2769 = vpack.c.b16 %v2617, %v2615
  %v2770 = vpack.c.b16 %v2618, %v2616
  %v2771 = vpack.c.b16 %v2621, %v2619
  %v2772 = vpack.c.b16 %v2622, %v2620
  %v2773 = vpack.c.b16 %v2625, %v2623
  %v2774 = vpack.c.b16 %v2626, %v2624
  %v2775 = vpack.c.b16 %v2629, %v2627
  %v2776 = vpack.c.b16 %v2630, %v2628
  %v2777 = vpack.c.b16 %v2633, %v2631
  %v2778 = vpack.c.b16 %v2634, %v2632
  %v2779 = vpack.c.b16 %v2637, %v2635
  %v2780 = vpack.c.b16 %v2638, %v2636
  %v2781 = vpack.c.b16 %v2641, %v2639
  %v2782 = vpack.c.b16 %v2642, %v2640
  %v2783 = vpack.c.b16 %v2645, %v2643
  %v2784 = vpack.c.b16 %v2646, %v2644
  %v2785 = vpack.c.b16 %v2649, %v2647
  %v2786 = vpack.c.b16 %v2650, %v2648
  %v2787 = vpack.c.b16 %v2653, %v2651
  %v2788 = vpack.c.b16 %v2654, %v2652
  %v2789 = vpack.c.b16 %v2657, %v2655
  %v2790 = vpack.c.b16 %v2658, %v2656
  %v2791 = vpack.c.b16 %v2661, %v2659
  %v2792 = vpack.c.b16 %v2662, %v2660
  %v2793 = vpack.c.b16 %v2665, %v2663
  %v2794 = vpack.c.b16 %v2666, %v2664
  %v2795 = vpack.c.b16 %v2669, %v2667
  %v2796 = vpack.c.b16 %v2670, %v2668
  %v2797 = vpack.c.b16 %v2673, %v2671
  %v2798 = vpack.c.b16 %v2674, %v2672
  %v2799 = vpack.c.b16 %v2677, %v2675
  %v2800 = vpack.c.b16 %v2678, %v2676
  %v2801 = vpack.c.b16 %v2681, %v2679
  %v2802 = vpack.c.b16 %v2682, %v2680
  %v2803 = vpack.c.b16 %v2685, %v2683
  %v2804 = vpack.c.b16 %v2686, %v2684
  %v2805 = vpack.c.b16 %v2689, %v2687
  %v2806 = vpack.c.b16 %v2690, %v2688
  %v2807 = vpack.c.b16 %v2693, %v2691
  %v2808 = vpack.c.b16 %v2694, %v2692
  %v2809 = vpack.c.b16 %v2697, %v2695
  %v2810 = vpack.c.b16 %v2698, %v2696
  %v2811 = vpack.c.b16 %v2701, %v2699
  %v2812 = vpack.c.b16 %v2702, %v2700
  %v2813 = vpack.c.b16 %v2705, %v2703
  %v2814 = vpack.c.b16 %v2706, %v2704
  %v2815 = vpack.c.b16 %v2709, %v2707
  %v2816 = vpack.c.b16 %v2710, %v2708
  %v2817 = vpack.c.b16 %v2713, %v2711
  %v2818 = vpack.c.b16 %v2714, %v2712
  %v2819 = vpack.c.b16 %v2717, %v2715
  %v2820 = vpack.c.b16 %v2718, %v2716
  %v2821 = vpack.c.b16 %v2721, %v2719
  %v2822 = vpack.c.b16 %v2722, %v2720
  %v2823 = vpack.c.b16 %v2725, %v2723
  %v2824 = vpack.c.b16 %v2726, %v2724
  %v2825 = vpack.c.b16 %v2729, %v2727
  %v2826 = vpack.c.b16 %v2730, %v2728
  %2923 = vmatprep.subr.bf16.mxu0 %v2732
  %2924 = vmatpush1.bf16.msra.mxu0 %v2731
  %2925 = vmatprep.subr.bf16.mxu0 %v2734
  %2926 = vmatpush1.bf16.msra.mxu0 %v2733
  %2927 = vmatprep.subr.bf16.mxu0 %v2736
  %2928 = vmatpush1.bf16.msra.mxu0 %v2735
  %2929 = vmatprep.subr.bf16.mxu0 %v2738
  %2930 = vmatpush1.bf16.msra.mxu0 %v2737
  %2931 = vmatprep.subr.bf16.mxu0 %v2740
  %2932 = vmatpush1.bf16.msra.mxu0 %v2739
  %2933 = vmatprep.subr.bf16.mxu0 %v2742
  %2934 = vmatpush1.bf16.msra.mxu0 %v2741
  %2935 = vmatprep.subr.bf16.mxu0 %v2744
  %2936 = vmatpush1.bf16.msra.mxu0 %v2743
  %2937 = vmatprep.subr.bf16.mxu0 %v2746
  %2938 = vmatpush1.bf16.msra.mxu0 %v2745
  %2939 = vmatprep.subr.bf16.mxu0 %v2748
  %2940 = vmatpush1.bf16.msra.mxu0 %v2747
  %2941 = vmatprep.subr.bf16.mxu0 %v2750
  %2942 = vmatpush1.bf16.msra.mxu0 %v2749
  %2943 = vmatprep.subr.bf16.mxu0 %v2752
  %2944 = vmatpush1.bf16.msra.mxu0 %v2751
  %2945 = vmatprep.subr.bf16.mxu0 %v2754
  %2946 = vmatpush1.bf16.msra.mxu0 %v2753
  %2947 = vmatprep.subr.bf16.mxu0 %v2756
  %2948 = vmatpush1.bf16.msra.mxu0 %v2755
  %2949 = vmatprep.subr.bf16.mxu0 %v2758
  %2950 = vmatpush1.bf16.msra.mxu0 %v2757
  %2951 = vmatprep.subr.bf16.mxu0 %v2760
  %2952 = vmatpush1.bf16.msra.mxu0 %v2759
  %2953 = vmatprep.subr.bf16.mxu0 %v2762
  %2954 = vmatpush1.bf16.msra.mxu0 %v2761
  %2955 = vmatprep.mubr.bf16.mxu0 %v2432
  %2956 = vmatmul.mubr.bf16.gmra.mrb[0].mxu0 %v2431
  %v2957 = vpop.f32.mrb[0].mxu0
  %v2958 = vadd.f32 %v2406, %v2957
  %v2959 = vpop.f32.mrb[0].mxu0
  %v2960 = vadd.f32 %v2410, %v2959
  %v2961 = vpop.f32.mrb[0].mxu0
  %v2962 = vadd.f32 %v2406, %v2961
  %v2963 = vpop.f32.mrb[0].mxu0
  %v2964 = vadd.f32 %v2410, %v2963
  %2965 = vdwg.mxu0
  %2966 = vmatprep.subr.bf16.mxu0 %v2764
  %2967 = vmatpush1.bf16.msra.mxu0 %v2763
  %2968 = vmatprep.subr.bf16.mxu0 %v2766
  %2969 = vmatpush1.bf16.msra.mxu0 %v2765
  %2970 = vmatprep.subr.bf16.mxu0 %v2768
  %2971 = vmatpush1.bf16.msra.mxu0 %v2767
  %2972 = vmatprep.subr.bf16.mxu0 %v2770
  %2973 = vmatpush1.bf16.msra.mxu0 %v2769
  %2974 = vmatprep.subr.bf16.mxu0 %v2772
  %2975 = vmatpush1.bf16.msra.mxu0 %v2771
  %2976 = vmatprep.subr.bf16.mxu0 %v2774
  %2977 = vmatpush1.bf16.msra.mxu0 %v2773
  %2978 = vmatprep.subr.bf16.mxu0 %v2776
  %2979 = vmatpush1.bf16.msra.mxu0 %v2775
  %2980 = vmatprep.subr.bf16.mxu0 %v2778
  %2981 = vmatpush1.bf16.msra.mxu0 %v2777
  %2982 = vmatprep.subr.bf16.mxu0 %v2780
  %2983 = vmatpush1.bf16.msra.mxu0 %v2779
  %2984 = vmatprep.subr.bf16.mxu0 %v2782
  %2985 = vmatpush1.bf16.msra.mxu0 %v2781
  %2986 = vmatprep.subr.bf16.mxu0 %v2784
  %2987 = vmatpush1.bf16.msra.mxu0 %v2783
  %2988 = vmatprep.subr.bf16.mxu0 %v2786
  %2989 = vmatpush1.bf16.msra.mxu0 %v2785
  %2990 = vmatprep.subr.bf16.mxu0 %v2788
  %2991 = vmatpush1.bf16.msra.mxu0 %v2787
  %2992 = vmatprep.subr.bf16.mxu0 %v2790
  %2993 = vmatpush1.bf16.msra.mxu0 %v2789
  %2994 = vmatprep.subr.bf16.mxu0 %v2792
  %2995 = vmatpush1.bf16.msra.mxu0 %v2791
  %2996 = vmatprep.subr.bf16.mxu0 %v2794
  %2997 = vmatpush1.bf16.msra.mxu0 %v2793
  %2998 = vmatprep.mubr.bf16.mxu0 %v2434
  %2999 = vmatmul.mubr.bf16.gmra.mrb[0].mxu0 %v2433
  %v3000 = vpop.f32.mrb[0].mxu0
  %v3001 = vadd.f32 %v2958, %v3000
  %v3002 = vpop.f32.mrb[0].mxu0
  %v3003 = vadd.f32 %v2960, %v3002
  %v3004 = vpop.f32.mrb[0].mxu0
  %v3005 = vadd.f32 %v2962, %v3004
  %v3006 = vpop.f32.mrb[0].mxu0
  %v3007 = vadd.f32 %v2964, %v3006
  %3008 = vdwg.mxu0
  %3009 = vmatprep.subr.bf16.mxu0 %v2796
  %3010 = vmatpush1.bf16.msra.mxu0 %v2795
  %3011 = vmatprep.subr.bf16.mxu0 %v2798
  %3012 = vmatpush1.bf16.msra.mxu0 %v2797
  %3013 = vmatprep.subr.bf16.mxu0 %v2800
  %3014 = vmatpush1.bf16.msra.mxu0 %v2799
  %3015 = vmatprep.subr.bf16.mxu0 %v2802
  %3016 = vmatpush1.bf16.msra.mxu0 %v2801
  %3017 = vmatprep.subr.bf16.mxu0 %v2804
  %3018 = vmatpush1.bf16.msra.mxu0 %v2803
  %3019 = vmatprep.subr.bf16.mxu0 %v2806
  %3020 = vmatpush1.bf16.msra.mxu0 %v2805
  %3021 = vmatprep.subr.bf16.mxu0 %v2808
  %3022 = vmatpush1.bf16.msra.mxu0 %v2807
  %3023 = vmatprep.subr.bf16.mxu0 %v2810
  %3024 = vmatpush1.bf16.msra.mxu0 %v2809
  %3025 = vmatprep.subr.bf16.mxu0 %v2812
  %3026 = vmatpush1.bf16.msra.mxu0 %v2811
  %3027 = vmatprep.subr.bf16.mxu0 %v2814
  %3028 = vmatpush1.bf16.msra.mxu0 %v2813
  %3029 = vmatprep.subr.bf16.mxu0 %v2816
  %3030 = vmatpush1.bf16.msra.mxu0 %v2815
  %3031 = vmatprep.subr.bf16.mxu0 %v2818
  %3032 = vmatpush1.bf16.msra.mxu0 %v2817
  %3033 = vmatprep.subr.bf16.mxu0 %v2820
  %3034 = vmatpush1.bf16.msra.mxu0 %v2819
  %3035 = vmatprep.subr.bf16.mxu0 %v2822
  %3036 = vmatpush1.bf16.msra.mxu0 %v2821
  %3037 = vmatprep.subr.bf16.mxu0 %v2824
  %3038 = vmatpush1.bf16.msra.mxu0 %v2823
  %3039 = vmatprep.subr.bf16.mxu0 %v2826
  %3040 = vmatpush1.bf16.msra.mxu0 %v2825
  %3041 = vmatprep.mubr.bf16.mxu0 %v2436
  %3042 = vmatmul.mubr.bf16.gmra.mrb[0].mxu0 %v2435
  %v3043 = vpop.f32.mrb[0].mxu0
  %v3044 = vadd.f32 %v3001, %v3043
  %v3045 = vpop.f32.mrb[0].mxu0
  %v3046 = vadd.f32 %v3003, %v3045
  %v3047 = vpop.f32.mrb[0].mxu0
  %v3048 = vadd.f32 %v3005, %v3047
  %v3049 = vpop.f32.mrb[0].mxu0
  %v3050 = vadd.f32 %v3007, %v3049
  %3051 = vdwg.mxu0
  %v3052 = vmax.f32 %v3044, 0.0
  %v3053 = vmax.f32 %v3046, 0.0
  %v3054 = vmax.f32 %v3048, 0.0
  %v3055 = vmax.f32 %v3050, 0.0
  %v3056 = vpack.c.bf16 %v3054, %v3052
  %v3057 = vpack.c.bf16 %v3055, %v3053
  %v3058 = vld [vmem:[%s6] sm:$0xf]
  %v3059 = vld [vmem:[%s6 + $0x4] sm:$0xf]
  %v3060 = vld [vmem:[%s6 + $0x8] sm:$0xf]
  %v3061 = vld [vmem:[%s6 + $0xc] sm:$0xf]
  %v3062 = vld [vmem:[%s6 + $0x10] sm:$0xf]
  %v3063 = vld [vmem:[%s6 + $0x14] sm:$0xf]
  %v3064 = vld [vmem:[%s6 + $0x18] sm:$0xf]
  %v3065 = vld [vmem:[%s6 + $0x1c] sm:$0xf]
  %v3066 = vld [vmem:[%s6 + $0x20] sm:$0xf]
  %v3067 = vld [vmem:[%s6 + $0x24] sm:$0xf]
  %v3068 = vld [vmem:[%s6 + $0x28] sm:$0xf]
  %v3069 = vld [vmem:[%s6 + $0x2c] sm:$0xf]
  %v3070 = vld [vmem:[%s6 + $0x30] sm:$0xf]
  %v3071 = vld [vmem:[%s6 + $0x34] sm:$0xf]
  %v3072 = vld [vmem:[%s6 + $0x38] sm:$0xf]
  %v3073 = vld [vmem:[%s6 + $0x3c] sm:$0xf]
  %v3074 = vld [vmem:[%s6 + $0x40] sm:$0xf]
  %v3075 = vld [vmem:[%s6 + $0x44] sm:$0xf]
  %v3076 = vld [vmem:[%s6 + $0x48] sm:$0xf]
  %v3077 = vld [vmem:[%s6 + $0x4c] sm:$0xf]
  %v3078 = vld [vmem:[%s6 + $0x50] sm:$0xf]
  %v3079 = vld [vmem:[%s6 + $0x54] sm:$0xf]
  %v3080 = vld [vmem:[%s6 + $0x58] sm:$0xf]
  %v3081 = vld [vmem:[%s6 + $0x5c] sm:$0xf]
  %v3082 = vld [vmem:[%s6 + $0x60] sm:$0xf]
  %v3083 = vld [vmem:[%s6 + $0x64] sm:$0xf]
  %v3084 = vld [vmem:[%s6 + $0x68] sm:$0xf]
  %v3085 = vld [vmem:[%s6 + $0x6c] sm:$0xf]
  %v3086 = vld [vmem:[%s6 + $0x70] sm:$0xf]
  %v3087 = vld [vmem:[%s6 + $0x74] sm:$0xf]
  %v3088 = vld [vmem:[%s6 + $0x78] sm:$0xf]
  %v3089 = vld [vmem:[%s6 + $0x7c] sm:$0xf]
  %v3090 = vld [vmem:[%s7] sm:$0x1]
  %v3092 = vlaneseq
  %v3093 = vshrl.u32 %v3092, 7
  %v3094 = vsub.s32 0, %v3093
  %v3095 = vrot.slane %v3090, %v3094
  %v3129 = vunpack.c.l.b16 %v3058
  %v3130 = vunpack.c.l.b16 %v3059
  %v3131 = vunpack.c.l.b16 %v3060
  %v3132 = vunpack.c.l.b16 %v3061
  %v3133 = vunpack.c.l.b16 %v3062
  %v3134 = vunpack.c.l.b16 %v3063
  %v3135 = vunpack.c.l.b16 %v3064
  %v3136 = vunpack.c.l.b16 %v3065
  %v3137 = vunpack.c.l.b16 %v3066
  %v3138 = vunpack.c.l.b16 %v3067
  %v3139 = vunpack.c.l.b16 %v3068
  %v3140 = vunpack.c.l.b16 %v3069
  %v3141 = vunpack.c.l.b16 %v3070
  %v3142 = vunpack.c.l.b16 %v3071
  %v3143 = vunpack.c.l.b16 %v3072
  %v3144 = vunpack.c.l.b16 %v3073
  %v3145 = vunpack.c.l.b16 %v3074
  %v3146 = vunpack.c.l.b16 %v3075
  %v3147 = vunpack.c.l.b16 %v3076
  %v3148 = vunpack.c.l.b16 %v3077
  %v3149 = vunpack.c.l.b16 %v3078
  %v3150 = vunpack.c.l.b16 %v3079
  %v3151 = vunpack.c.l.b16 %v3080
  %v3152 = vunpack.c.l.b16 %v3081
  %v3153 = vunpack.c.l.b16 %v3082
  %v3154 = vunpack.c.l.b16 %v3083
  %v3155 = vunpack.c.l.b16 %v3084
  %v3156 = vunpack.c.l.b16 %v3085
  %v3157 = vunpack.c.l.b16 %v3086
  %v3158 = vunpack.c.l.b16 %v3087
  %v3159 = vunpack.c.l.b16 %v3088
  %v3160 = vunpack.c.l.b16 %v3089
  %v3161 = vpack.c.b16 %v3130, %v3129
  %v3162 = vpack.c.b16 %v3132, %v3131
  %v3163 = vpack.c.b16 %v3134, %v3133
  %v3164 = vpack.c.b16 %v3136, %v3135
  %v3165 = vpack.c.b16 %v3138, %v3137
  %v3166 = vpack.c.b16 %v3140, %v3139
  %v3167 = vpack.c.b16 %v3142, %v3141
  %v3168 = vpack.c.b16 %v3144, %v3143
  %v3169 = vpack.c.b16 %v3146, %v3145
  %v3170 = vpack.c.b16 %v3148, %v3147
  %v3171 = vpack.c.b16 %v3150, %v3149
  %v3172 = vpack.c.b16 %v3152, %v3151
  %v3173 = vpack.c.b16 %v3154, %v3153
  %v3174 = vpack.c.b16 %v3156, %v3155
  %v3175 = vpack.c.b16 %v3158, %v3157
  %v3176 = vpack.c.b16 %v3160, %v3159
  %3193 = vmatprep.subr.bf16.mxu0 0
  %3194 = vmatpush1.bf16.msra.mxu0 %v3161
  %3195 = vmatprep.subr.bf16.mxu0 0
  %3196 = vmatpush1.bf16.msra.mxu0 %v3162
  %3197 = vmatprep.subr.bf16.mxu0 0
  %3198 = vmatpush1.bf16.msra.mxu0 %v3163
  %3199 = vmatprep.subr.bf16.mxu0 0
  %3200 = vmatpush1.bf16.msra.mxu0 %v3164
  %3201 = vmatprep.subr.bf16.mxu0 0
  %3202 = vmatpush1.bf16.msra.mxu0 %v3165
  %3203 = vmatprep.subr.bf16.mxu0 0
  %3204 = vmatpush1.bf16.msra.mxu0 %v3166
  %3205 = vmatprep.subr.bf16.mxu0 0
  %3206 = vmatpush1.bf16.msra.mxu0 %v3167
  %3207 = vmatprep.subr.bf16.mxu0 0
  %3208 = vmatpush1.bf16.msra.mxu0 %v3168
  %3209 = vmatprep.subr.bf16.mxu0 0
  %3210 = vmatpush1.bf16.msra.mxu0 %v3169
  %3211 = vmatprep.subr.bf16.mxu0 0
  %3212 = vmatpush1.bf16.msra.mxu0 %v3170
  %3213 = vmatprep.subr.bf16.mxu0 0
  %3214 = vmatpush1.bf16.msra.mxu0 %v3171
  %3215 = vmatprep.subr.bf16.mxu0 0
  %3216 = vmatpush1.bf16.msra.mxu0 %v3172
  %3217 = vmatprep.subr.bf16.mxu0 0
  %3218 = vmatpush1.bf16.msra.mxu0 %v3173
  %3219 = vmatprep.subr.bf16.mxu0 0
  %3220 = vmatpush1.bf16.msra.mxu0 %v3174
  %3221 = vmatprep.subr.bf16.mxu0 0
  %3222 = vmatpush1.bf16.msra.mxu0 %v3175
  %3223 = vmatprep.subr.bf16.mxu0 0
  %3224 = vmatpush1.bf16.msra.mxu0 %v3176
  %3225 = vmatprep.mubr.bf16.mxu0 %v3057
  %3226 = vmatmul.mubr.bf16.gmra.mrb[0].mxu0 %v3056
  %v3227 = vpop.f32.mrb[0].mxu0
  %v3228 = vadd.f32 %v3095, %v3227
  %v3229 = vpop.f32.mrb[0].mxu0
  %v3230 = vpop.f32.mrb[0].mxu0
  %v3231 = vadd.f32 %v3095, %v3230
  %v3232 = vpop.f32.mrb[0].mxu0
  %3233 = vdwg.mxu0
  %v3234 = vmax.f32 %v3228, 0.0
  %v3235 = vmax.f32 %v3231, 0.0
  %3236 = vst [vmem:[%s9] sm:$0xff] %v3234
  %3237 = vst [vmem:[%s9 + $0x8] sm:$0xff] %v3235
  // Predicated region
  $region34: #{multimodal_forward.5} parent=0 // pred_check
    _
  $region35: #{multimodal_forward.5} parent=0 // pred_check_branch
    %3239 = sbr.rel (0) target = $region37
  $region36: #{multimodal_forward.5} parent=0 // pred_region
    _
  $region37: #{multimodal_forward.5} parent=0 // pred_fallthru
    _
  // Predicated region
  $region38: #{multimodal_forward.5} parent=0 // pred_check
    _
  $region39: #{multimodal_forward.5} parent=0 // pred_check_branch
    %3241 = sbr.rel (0) target = $region41
  $region40: #{multimodal_forward.5} parent=0 // pred_region
    _
  $region41: #{multimodal_forward.5} parent=0 // pred_fallthru
    _
  // Predicated region
  $region42: #{multimodal_forward.5} parent=0 // pred_check
    _
  $region43: #{multimodal_forward.5} parent=0 // pred_check_branch
    %3243 = sbr.rel (0) target = $region45
  $region44: #{multimodal_forward.5} parent=0 // pred_region
    _
  $region45: #{multimodal_forward.5} parent=0 // pred_fallthru
    _
  // Predicated region
  $region46: #{multimodal_forward.5} parent=0 // pred_check
    _
  $region47: #{multimodal_forward.5} parent=0 // pred_check_branch
    %3245 = sbr.rel (0) target = $region49
  $region48: #{multimodal_forward.5} parent=0 // pred_region
    _
  $region49: #{multimodal_forward.5} parent=0 // pred_fallthru
    _

</llo_original>
